<compile_context>
chip_gen: v7x
topology: tpu7x:2x2x1
jax: 0.10.0
libtpu: 0.0.40
codegen_flags: <defaults>
</compile_context>

<pallas_src>
import functools

import jax
import jax.numpy as jnp
import numpy as np
from jax import lax
from jax.experimental import pallas as pl
from jax.experimental.pallas import tpu as pltpu


# -----------------------------------------------------------------------------
# Fused kernel: both encoder branches + GAP + concat + FC head
# -----------------------------------------------------------------------------
def _dsdbnet_kernel(spect_ref, png_ref,
                    w1s_ref, b1s_ref, w2s_ref, b2s_ref,
                    w1p_ref, b1p_ref, w2p_ref, b2p_ref,
                    fcw_ref, fcb_ref,
                    out_ref,
                    pad_ref, patches_ref,
                    *, H, W):
    """Layout: activations are (C, H*W) with all pixels on the lane axis.

    spect_ref/png_ref : (B, Cin, H*W)            f32  (free reshape of NCHW)
    w1*_ref           : (Cmid, 9*Cin)            bf16 k = (dy*3+dx)*Cin + ci
    b1*_ref           : (Cmid, 1)                f32
    w2*_ref           : (Cout, 9*Cmid)           bf16
    b2*_ref           : (Cout, 1)                f32
    fcw_ref           : (NC, 2*Cout)             f32  (PyTorch Linear layout)
    fcb_ref           : (NC, 1)                  f32
    out_ref           : (NC, B)                  f32  logits, transposed
    pad_ref           : (B, Cmax, HW + 2*(W+1))  bf16 lane-padded slab (scratch)
    patches_ref       : (B, 9*Cmax, HW)          bf16 im2col staging (scratch)
    """
    HW = H * W
    PAD = W + 1
    B = spect_ref.shape[0]

    # Zero the halo ONCE: the interior is fully rewritten before every conv and
    # the two (W+1)-lane halo strips are never written again, so they stay zero
    # for both convs of both branches.
    pad_ref[...] = jnp.zeros_like(pad_ref)

    # x-boundary masks (pure function of lane index p % W), built once.
    xpos = lax.broadcasted_iota(jnp.int32, (1, HW), 1) % W
    left_ok = xpos >= 1          # dx = -1 reads column x-1
    right_ok = xpos <= W - 2     # dx = +1 reads column x+1

    offsets = tuple((dy, dx) for dy in (-1, 0, 1) for dx in (-1, 0, 1))

    def conv3x3_relu(b, cin, w_ref, bias_ref):
        # pad_ref[b, :cin, PAD:PAD+HW] holds the bf16 conv input.
        # Stage the (9*cin, HW) im2col slab: 9 static lane slices of the padded
        # slab (y halo handled by the zero pad; only dx=+-1 needs an x mask).
        for k, (dy, dx) in enumerate(offsets):
            start = PAD + dy * W + dx
            win = pad_ref[b, :cin, start:start + HW]           # (cin, HW) bf16
            if dx == -1:
                win = jnp.where(left_ok, win, jnp.zeros_like(win))
            elif dx == 1:
                win = jnp.where(right_ok, win, jnp.zeros_like(win))
            patches_ref[b, k * cin:(k + 1) * cin, :] = win
        # Single wide-K MXU matmul: (Co, 9*cin) x (9*cin, HW) -> (Co, HW) f32.
        acc = jnp.dot(w_ref[...], patches_ref[b, :9 * cin, :],
                      preferred_element_type=jnp.float32)
        return jnp.maximum(acc + bias_ref[...], 0.0)

    branches = ((spect_ref, w1s_ref, b1s_ref, w2s_ref, b2s_ref),
                (png_ref, w1p_ref, b1p_ref, w2p_ref, b2p_ref))
    pooled_t = []                                   # per branch: (Cout, B) f32
    for x_ref, w1, b1, w2, b2 in branches:
        cin = x_ref.shape[1]
        cmid = w1.shape[0]
        cols = []
        for b in range(B):
            # conv1: load NCHW-flat rows, cast to bf16 in VMEM, write interior.
            pad_ref[b, :cin, PAD:PAD + HW] = x_ref[b].astype(jnp.bfloat16)
            a1 = conv3x3_relu(b, cin, w1, b1)                  # (Cmid, HW) f32
            # conv2
            pad_ref[b, :cmid, PAD:PAD + HW] = a1.astype(jnp.bfloat16)
            a2 = conv3x3_relu(b, cmid, w2, b2)                 # (Cout, HW) f32
            # Global average pool (AdaptiveAvgPool2d((1,1))) over the lane axis.
            cols.append(jnp.sum(a2, axis=1, keepdims=True) * (1.0 / HW))
        pooled_t.append(jnp.concatenate(cols, axis=1))         # (Cout, B)

    # 'concat' fusion (transposed): rows [0:Cout)=spect, [Cout:2Cout)=png.
    fused_t = jnp.concatenate(pooled_t, axis=0)                # (2*Cout, B)
    # Linear head: logits^T = fc_w (NC, 2*Cout) @ fused^T + fc_b.
    out_ref[...] = (jnp.dot(fcw_ref[...], fused_t,
                            preferred_element_type=jnp.float32)
                    + fcb_ref[...])


# -----------------------------------------------------------------------------
# DSDBNet forward (feature_fusion='concat', global_pool=True)
# -----------------------------------------------------------------------------
def dsdbnet_forward(spect_nchw, png_nchw, params):
    B, Cin, H, W = spect_nchw.shape
    HW = H * W
    Cmid = params["s_b1"].shape[0]
    Cout = params["s_b2"].shape[0]
    NC = params["fc_b"].shape[0]
    Cmax = max(Cin, Cmid)
    PADW = HW + 2 * (W + 1)

    # Free contiguous reshapes (no transpose / stack / cast HBM round trips).
    spect2 = spect_nchw.reshape(B, Cin, HW)
    png2 = png_nchw.reshape(B, Cin, HW)

    def conv_mat(w_hwio):
        # (3, 3, Ci, Co) -> (Co, 9*Ci), flattened as k = (dy*3+dx)*Ci + ci.
        co = w_hwio.shape[-1]
        return (jnp.transpose(w_hwio, (3, 0, 1, 2))
                .reshape(co, -1).astype(jnp.bfloat16))

    args = (
        spect2, png2,
        conv_mat(params["s_w1"]), params["s_b1"].reshape(Cmid, 1),
        conv_mat(params["s_w2"]), params["s_b2"].reshape(Cout, 1),
        conv_mat(params["p_w1"]), params["p_b1"].reshape(Cmid, 1),
        conv_mat(params["p_w2"]), params["p_b2"].reshape(Cout, 1),
        params["fc_w"], params["fc_b"].reshape(NC, 1),
    )

    conv_flops_per_branch = 2 * B * HW * 9 * (Cin * Cmid + Cmid * Cout)
    flops = 2 * conv_flops_per_branch + 2 * B * (2 * Cout) * NC
    bytes_accessed = (2 * B * Cin * HW * 4                       # images (f32)
                      + 2 * 9 * (Cin * Cmid + Cmid * Cout) * 2   # conv w (bf16)
                      + 2 * (Cmid + Cout) * 4                    # biases
                      + (NC * 2 * Cout + NC) * 4                 # fc params
                      + NC * B * 4)                              # logits

    kernel = functools.partial(_dsdbnet_kernel, H=H, W=W)
    out_t = pl.pallas_call(
        kernel,
        out_shape=jax.ShapeDtypeStruct((NC, B), jnp.float32),
        in_specs=[pl.BlockSpec(memory_space=pltpu.MemorySpace.VMEM)] * len(args),
        out_specs=pl.BlockSpec(memory_space=pltpu.MemorySpace.VMEM),
        scratch_shapes=[
            pltpu.VMEM((B, Cmax, PADW), jnp.bfloat16),      # lane-padded slab
            pltpu.VMEM((B, 9 * Cmax, HW), jnp.bfloat16),    # im2col staging
        ],
        compiler_params=pltpu.CompilerParams(
            vmem_limit_bytes=32 * 1024 * 1024),
        cost_estimate=pl.CostEstimate(flops=int(flops), transcendentals=0,
                                      bytes_accessed=int(bytes_accessed)),
    )(*args)
    return out_t.T                                               # (B, NC)


# -----------------------------------------------------------------------------
# Deterministic parameter init + pure-JAX reference check
# -----------------------------------------------------------------------------
def init_params(key, cin, cmid, cout, num_classes):
    ks = jax.random.split(key, 5)

    def conv_init(k, ci, co):
        fan_in = 3 * 3 * ci
        return jax.random.normal(k, (3, 3, ci, co), jnp.float32) * np.sqrt(2.0 / fan_in)

    return {
        "s_w1": conv_init(ks[0], cin, cmid), "s_b1": jnp.zeros((cmid,), jnp.float32),
        "s_w2": conv_init(ks[1], cmid, cout), "s_b2": jnp.zeros((cout,), jnp.float32),
        "p_w1": conv_init(ks[2], cin, cmid), "p_b1": jnp.zeros((cmid,), jnp.float32),
        "p_w2": conv_init(ks[3], cmid, cout), "p_b2": jnp.zeros((cout,), jnp.float32),
        # nn.Linear(2*cout, num_classes) in PyTorch (out, in) layout;
        # kaiming_normal_(mode='fan_out') -> std = sqrt(2 / out_features).
        "fc_w": jax.random.normal(ks[4], (num_classes, 2 * cout), jnp.float32)
                * np.sqrt(2.0 / num_classes),
        "fc_b": jnp.zeros((num_classes,), jnp.float32),
    }


def _reference_forward(spect_nchw, png_nchw, params):
    # Mirrors the kernel's precision policy: bf16 conv operands, f32 accumulate.
    def conv(x, w, b):
        y = lax.conv_general_dilated(
            x.astype(jnp.bfloat16), w.astype(jnp.bfloat16), (1, 1), "SAME",
            dimension_numbers=("NHWC", "HWIO", "NHWC"),
            preferred_element_type=jnp.float32)
        return jnp.maximum(y + b, 0.0)

    s = jnp.transpose(spect_nchw, (0, 2, 3, 1))
    p = jnp.transpose(png_nchw, (0, 2, 3, 1))
    s = conv(conv(s, params["s_w1"], params["s_b1"]), params["s_w2"], params["s_b2"])
    p = conv(conv(p, params["p_w1"], params["p_b1"]), params["p_w2"], params["p_b2"])
    s_pool = jnp.mean(s, axis=(1, 2))
    p_pool = jnp.mean(p, axis=(1, 2))
    fused = jnp.concatenate([s_pool, p_pool], axis=1)
    return fused @ params["fc_w"].T + params["fc_b"]


if __name__ == "__main__":
    B, CIN, SIDE = 2, 3, 16
    CMID, COUT, NUM_CLASSES = 16, 32, 5

    key = jax.random.PRNGKey(0)
    k_spect, k_png, k_params = jax.random.split(key, 3)
    spect = jax.random.normal(k_spect, (B, CIN, SIDE, SIDE), jnp.float32)  # NCHW
    png = jax.random.normal(k_png, (B, CIN, SIDE, SIDE), jnp.float32)
    params = init_params(k_params, CIN, CMID, COUT, NUM_CLASSES)

    fwd = jax.jit(dsdbnet_forward)
    out = jax.block_until_ready(fwd(spect, png, params))

    ref = jax.block_until_ready(_reference_forward(spect, png, params))
    assert out.shape == (B, NUM_CLASSES)
    max_err = float(np.max(np.abs(np.asarray(out) - np.asarray(ref))))
    assert np.allclose(np.asarray(out), np.asarray(ref), rtol=2e-3, atol=2e-3), max_err

    print("KERNEL_OK")
</pallas_src>

<mosaic_0001>
module attributes {stable_mosaic.version = 11 : i64} {
  func.func @_dsdbnet_kernel(%arg0: memref<2x3x256xf32, #tpu.memory_space<vmem>>, %arg1: memref<2x3x256xf32, #tpu.memory_space<vmem>>, %arg2: memref<16x27xbf16, #tpu.memory_space<vmem>>, %arg3: memref<16x1xf32, #tpu.memory_space<vmem>>, %arg4: memref<32x144xbf16, #tpu.memory_space<vmem>>, %arg5: memref<32x1xf32, #tpu.memory_space<vmem>>, %arg6: memref<16x27xbf16, #tpu.memory_space<vmem>>, %arg7: memref<16x1xf32, #tpu.memory_space<vmem>>, %arg8: memref<32x144xbf16, #tpu.memory_space<vmem>>, %arg9: memref<32x1xf32, #tpu.memory_space<vmem>>, %arg10: memref<5x64xf32, #tpu.memory_space<vmem>>, %arg11: memref<5x1xf32, #tpu.memory_space<vmem>>, %arg12: memref<5x2xf32, #tpu.memory_space<vmem>>, %arg13: memref<2x16x290xbf16, #tpu.memory_space<vmem>>, %arg14: memref<2x144x256xbf16, #tpu.memory_space<vmem>>) attributes {dimension_semantics = [], scalar_prefetch = 0 : i64, scratch_operands = 2 : i64, tpu.core_type = #tpu.core_type<tc>} {
    %cst = arith.constant 0.000000e+00 : bf16
    %0 = vector.broadcast %cst : bf16 to vector<2x16x290xbf16>
    %c0 = arith.constant 0 : index
    %c0_0 = arith.constant 0 : index
    %c0_1 = arith.constant 0 : index
    %1 = vector.load %arg13[%c0, %c0_0, %c0_1] : memref<2x16x290xbf16, #tpu.memory_space<vmem>>, vector<2x16x290xbf16>
    tpu.vector_store %arg13[%c0, %c0_0, %c0_1], %0 {strides = array<i32>} : memref<2x16x290xbf16, #tpu.memory_space<vmem>>, vector<2x16x290xbf16>,
    %2 = tpu.iota {dimensions = array<i32: 1>} : vector<1x256xi32>
    %c16_i32 = arith.constant 16 : i32
    %c0_i32 = arith.constant 0 : i32
    %3 = arith.cmpi eq, %c16_i32, %c0_i32 : i32
    %c1_i32 = arith.constant 1 : i32
    %4 = arith.select %3, %c1_i32, %c16_i32 : i32
    %5 = vector.broadcast %4 : i32 to vector<1x256xi32>
    %6 = arith.remsi %2, %5 : vector<1x256xi32>
    %c0_i32_2 = arith.constant 0 : i32
    %7 = vector.broadcast %c0_i32_2 : i32 to vector<1x256xi32>
    %8 = arith.cmpi ne, %6, %7 : vector<1x256xi32>
    %c0_i32_3 = arith.constant 0 : i32
    %9 = vector.broadcast %c0_i32_3 : i32 to vector<1x256xi32>
    %10 = arith.cmpi slt, %6, %9 : vector<1x256xi32>
    %c0_i32_4 = arith.constant 0 : i32
    %11 = arith.cmpi slt, %4, %c0_i32_4 : i32
    %12 = vector.broadcast %11 : i1 to vector<1x256xi1>
    %13 = vector.broadcast %12 : vector<1x256xi1> to vector<1x256xi1>
    %14 = arith.xori %10, %13 : vector<1x256xi1>
    %15 = arith.andi %14, %8 : vector<1x256xi1>
    %16 = vector.broadcast %4 : i32 to vector<1x256xi32>
    %17 = arith.addi %6, %16 : vector<1x256xi32>
    %18 = arith.select %15, %17, %6 : vector<1x256xi1>, vector<1x256xi32>
    %c1_i32_5 = arith.constant 1 : i32
    %19 = vector.broadcast %c1_i32_5 : i32 to vector<1x256xi32>
    %20 = arith.cmpi sge, %18, %19 : vector<1x256xi32>
    %c14_i32 = arith.constant 14 : i32
    %21 = vector.broadcast %c14_i32 : i32 to vector<1x256xi32>
    %22 = arith.cmpi sle, %18, %21 : vector<1x256xi32>
    %c0_6 = arith.constant 0 : index
    %c0_7 = arith.constant 0 : index
    %c0_8 = arith.constant 0 : index
    %23 = vector.load %arg0[%c0_6, %c0_7, %c0_8] : memref<2x3x256xf32, #tpu.memory_space<vmem>>, vector<1x3x256xf32>
    %24 = vector.shape_cast %23 : vector<1x3x256xf32> to vector<3x256xf32>
    %25 = arith.truncf %24 : vector<3x256xf32> to vector<3x256xbf16>
    %c0_9 = arith.constant 0 : index
    %c0_10 = arith.constant 0 : index
    %c17 = arith.constant 17 : index
    %26 = vector.load %arg13[%c0_9, %c0_10, %c17] : memref<2x16x290xbf16, #tpu.memory_space<vmem>>, vector<1x3x256xbf16>
    %27 = vector.shape_cast %26 : vector<1x3x256xbf16> to vector<3x256xbf16>
    %28 = vector.shape_cast %25 : vector<3x256xbf16> to vector<1x3x256xbf16>
    tpu.vector_store %arg13[%c0_9, %c0_10, %c17], %28 {strides = array<i32>} : memref<2x16x290xbf16, #tpu.memory_space<vmem>>, vector<1x3x256xbf16>,
    %c0_11 = arith.constant 0 : index
    %c0_12 = arith.constant 0 : index
    %c0_13 = arith.constant 0 : index
    %29 = vector.load %arg13[%c0_11, %c0_12, %c0_13] : memref<2x16x290xbf16, #tpu.memory_space<vmem>>, vector<1x3x256xbf16>
    %30 = vector.shape_cast %29 : vector<1x3x256xbf16> to vector<3x256xbf16>
    %cst_14 = arith.constant 0.000000e+00 : bf16
    %31 = vector.broadcast %cst_14 : bf16 to vector<3x256xbf16>
    %32 = vector.shape_cast %20 : vector<1x256xi1> to vector<1x256xi1>
    %33 = vector.broadcast %32 : vector<1x256xi1> to vector<3x256xi1>
    %34 = arith.select %33, %30, %31 : vector<3x256xi1>, vector<3x256xbf16>
    %c0_15 = arith.constant 0 : index
    %c0_16 = arith.constant 0 : index
    %c0_17 = arith.constant 0 : index
    %35 = vector.load %arg14[%c0_15, %c0_16, %c0_17] : memref<2x144x256xbf16, #tpu.memory_space<vmem>>, vector<1x3x256xbf16>
    %36 = vector.shape_cast %35 : vector<1x3x256xbf16> to vector<3x256xbf16>
    %37 = vector.shape_cast %34 : vector<3x256xbf16> to vector<1x3x256xbf16>
    tpu.vector_store %arg14[%c0_15, %c0_16, %c0_17], %37 {strides = array<i32>} : memref<2x144x256xbf16, #tpu.memory_space<vmem>>, vector<1x3x256xbf16>,
    %c0_18 = arith.constant 0 : index
    %c0_19 = arith.constant 0 : index
    %c1 = arith.constant 1 : index
    %38 = vector.load %arg13[%c0_18, %c0_19, %c1] : memref<2x16x290xbf16, #tpu.memory_space<vmem>>, vector<1x3x256xbf16>
    %39 = vector.shape_cast %38 : vector<1x3x256xbf16> to vector<3x256xbf16>
    %c0_20 = arith.constant 0 : index
    %c3 = arith.constant 3 : index
    %c0_21 = arith.constant 0 : index
    %40 = vector.load %arg14[%c0_20, %c3, %c0_21] : memref<2x144x256xbf16, #tpu.memory_space<vmem>>, vector<1x3x256xbf16>
    %41 = vector.shape_cast %40 : vector<1x3x256xbf16> to vector<3x256xbf16>
    %42 = vector.shape_cast %39 : vector<3x256xbf16> to vector<1x3x256xbf16>
    tpu.vector_store %arg14[%c0_20, %c3, %c0_21], %42 {strides = array<i32>} : memref<2x144x256xbf16, #tpu.memory_space<vmem>>, vector<1x3x256xbf16>,
    %c0_22 = arith.constant 0 : index
    %c0_23 = arith.constant 0 : index
    %c2 = arith.constant 2 : index
    %43 = vector.load %arg13[%c0_22, %c0_23, %c2] : memref<2x16x290xbf16, #tpu.memory_space<vmem>>, vector<1x3x256xbf16>
    %44 = vector.shape_cast %43 : vector<1x3x256xbf16> to vector<3x256xbf16>
    %cst_24 = arith.constant 0.000000e+00 : bf16
    %45 = vector.broadcast %cst_24 : bf16 to vector<3x256xbf16>
    %46 = vector.shape_cast %22 : vector<1x256xi1> to vector<1x256xi1>
    %47 = vector.broadcast %46 : vector<1x256xi1> to vector<3x256xi1>
    %48 = arith.select %47, %44, %45 : vector<3x256xi1>, vector<3x256xbf16>
    %c0_25 = arith.constant 0 : index
    %c6 = arith.constant 6 : index
    %c0_26 = arith.constant 0 : index
    %49 = vector.load %arg14[%c0_25, %c6, %c0_26] : memref<2x144x256xbf16, #tpu.memory_space<vmem>>, vector<1x3x256xbf16>
    %50 = vector.shape_cast %49 : vector<1x3x256xbf16> to vector<3x256xbf16>
    %51 = vector.shape_cast %48 : vector<3x256xbf16> to vector<1x3x256xbf16>
    tpu.vector_store %arg14[%c0_25, %c6, %c0_26], %51 {strides = array<i32>} : memref<2x144x256xbf16, #tpu.memory_space<vmem>>, vector<1x3x256xbf16>,
    %c0_27 = arith.constant 0 : index
    %c0_28 = arith.constant 0 : index
    %c16 = arith.constant 16 : index
    %52 = vector.load %arg13[%c0_27, %c0_28, %c16] : memref<2x16x290xbf16, #tpu.memory_space<vmem>>, vector<1x3x256xbf16>
    %53 = vector.shape_cast %52 : vector<1x3x256xbf16> to vector<3x256xbf16>
    %cst_29 = arith.constant 0.000000e+00 : bf16
    %54 = vector.broadcast %cst_29 : bf16 to vector<3x256xbf16>
    %55 = vector.shape_cast %20 : vector<1x256xi1> to vector<1x256xi1>
    %56 = vector.broadcast %55 : vector<1x256xi1> to vector<3x256xi1>
    %57 = arith.select %56, %53, %54 : vector<3x256xi1>, vector<3x256xbf16>
    %c0_30 = arith.constant 0 : index
    %c9 = arith.constant 9 : index
    %c0_31 = arith.constant 0 : index
    %58 = vector.load %arg14[%c0_30, %c9, %c0_31] : memref<2x144x256xbf16, #tpu.memory_space<vmem>>, vector<1x3x256xbf16>
    %59 = vector.shape_cast %58 : vector<1x3x256xbf16> to vector<3x256xbf16>
    %60 = vector.shape_cast %57 : vector<3x256xbf16> to vector<1x3x256xbf16>
    tpu.vector_store %arg14[%c0_30, %c9, %c0_31], %60 {strides = array<i32>} : memref<2x144x256xbf16, #tpu.memory_space<vmem>>, vector<1x3x256xbf16>,
    %c0_32 = arith.constant 0 : index
    %c0_33 = arith.constant 0 : index
    %c17_34 = arith.constant 17 : index
    %61 = vector.load %arg13[%c0_32, %c0_33, %c17_34] : memref<2x16x290xbf16, #tpu.memory_space<vmem>>, vector<1x3x256xbf16>
    %62 = vector.shape_cast %61 : vector<1x3x256xbf16> to vector<3x256xbf16>
    %c0_35 = arith.constant 0 : index
    %c12 = arith.constant 12 : index
    %c0_36 = arith.constant 0 : index
    %63 = vector.load %arg14[%c0_35, %c12, %c0_36] : memref<2x144x256xbf16, #tpu.memory_space<vmem>>, vector<1x3x256xbf16>
    %64 = vector.shape_cast %63 : vector<1x3x256xbf16> to vector<3x256xbf16>
    %65 = vector.shape_cast %62 : vector<3x256xbf16> to vector<1x3x256xbf16>
    tpu.vector_store %arg14[%c0_35, %c12, %c0_36], %65 {strides = array<i32>} : memref<2x144x256xbf16, #tpu.memory_space<vmem>>, vector<1x3x256xbf16>,
    %c0_37 = arith.constant 0 : index
    %c0_38 = arith.constant 0 : index
    %c18 = arith.constant 18 : index
    %66 = vector.load %arg13[%c0_37, %c0_38, %c18] : memref<2x16x290xbf16, #tpu.memory_space<vmem>>, vector<1x3x256xbf16>
    %67 = vector.shape_cast %66 : vector<1x3x256xbf16> to vector<3x256xbf16>
    %cst_39 = arith.constant 0.000000e+00 : bf16
    %68 = vector.broadcast %cst_39 : bf16 to vector<3x256xbf16>
    %69 = vector.shape_cast %22 : vector<1x256xi1> to vector<1x256xi1>
    %70 = vector.broadcast %69 : vector<1x256xi1> to vector<3x256xi1>
    %71 = arith.select %70, %67, %68 : vector<3x256xi1>, vector<3x256xbf16>
    %c0_40 = arith.constant 0 : index
    %c15 = arith.constant 15 : index
    %c0_41 = arith.constant 0 : index
    %72 = vector.load %arg14[%c0_40, %c15, %c0_41] : memref<2x144x256xbf16, #tpu.memory_space<vmem>>, vector<1x3x256xbf16>
    %73 = vector.shape_cast %72 : vector<1x3x256xbf16> to vector<3x256xbf16>
    %74 = vector.shape_cast %71 : vector<3x256xbf16> to vector<1x3x256xbf16>
    tpu.vector_store %arg14[%c0_40, %c15, %c0_41], %74 {strides = array<i32>} : memref<2x144x256xbf16, #tpu.memory_space<vmem>>, vector<1x3x256xbf16>,
    %c0_42 = arith.constant 0 : index
    %c0_43 = arith.constant 0 : index
    %c32 = arith.constant 32 : index
    %75 = vector.load %arg13[%c0_42, %c0_43, %c32] : memref<2x16x290xbf16, #tpu.memory_space<vmem>>, vector<1x3x256xbf16>
    %76 = vector.shape_cast %75 : vector<1x3x256xbf16> to vector<3x256xbf16>
    %cst_44 = arith.constant 0.000000e+00 : bf16
    %77 = vector.broadcast %cst_44 : bf16 to vector<3x256xbf16>
    %78 = vector.shape_cast %20 : vector<1x256xi1> to vector<1x256xi1>
    %79 = vector.broadcast %78 : vector<1x256xi1> to vector<3x256xi1>
    %80 = arith.select %79, %76, %77 : vector<3x256xi1>, vector<3x256xbf16>
    %c0_45 = arith.constant 0 : index
    %c18_46 = arith.constant 18 : index
    %c0_47 = arith.constant 0 : index
    %81 = vector.load %arg14[%c0_45, %c18_46, %c0_47] : memref<2x144x256xbf16, #tpu.memory_space<vmem>>, vector<1x3x256xbf16>
    %82 = vector.shape_cast %81 : vector<1x3x256xbf16> to vector<3x256xbf16>
    %83 = vector.shape_cast %80 : vector<3x256xbf16> to vector<1x3x256xbf16>
    tpu.vector_store %arg14[%c0_45, %c18_46, %c0_47], %83 {strides = array<i32>} : memref<2x144x256xbf16, #tpu.memory_space<vmem>>, vector<1x3x256xbf16>,
    %c0_48 = arith.constant 0 : index
    %c0_49 = arith.constant 0 : index
    %c33 = arith.constant 33 : index
    %84 = vector.load %arg13[%c0_48, %c0_49, %c33] : memref<2x16x290xbf16, #tpu.memory_space<vmem>>, vector<1x3x256xbf16>
    %85 = vector.shape_cast %84 : vector<1x3x256xbf16> to vector<3x256xbf16>
    %c0_50 = arith.constant 0 : index
    %c21 = arith.constant 21 : index
    %c0_51 = arith.constant 0 : index
    %86 = vector.load %arg14[%c0_50, %c21, %c0_51] : memref<2x144x256xbf16, #tpu.memory_space<vmem>>, vector<1x3x256xbf16>
    %87 = vector.shape_cast %86 : vector<1x3x256xbf16> to vector<3x256xbf16>
    %88 = vector.shape_cast %85 : vector<3x256xbf16> to vector<1x3x256xbf16>
    tpu.vector_store %arg14[%c0_50, %c21, %c0_51], %88 {strides = array<i32>} : memref<2x144x256xbf16, #tpu.memory_space<vmem>>, vector<1x3x256xbf16>,
    %c0_52 = arith.constant 0 : index
    %c0_53 = arith.constant 0 : index
    %c34 = arith.constant 34 : index
    %89 = vector.load %arg13[%c0_52, %c0_53, %c34] : memref<2x16x290xbf16, #tpu.memory_space<vmem>>, vector<1x3x256xbf16>
    %90 = vector.shape_cast %89 : vector<1x3x256xbf16> to vector<3x256xbf16>
    %cst_54 = arith.constant 0.000000e+00 : bf16
    %91 = vector.broadcast %cst_54 : bf16 to vector<3x256xbf16>
    %92 = vector.shape_cast %22 : vector<1x256xi1> to vector<1x256xi1>
    %93 = vector.broadcast %92 : vector<1x256xi1> to vector<3x256xi1>
    %94 = arith.select %93, %90, %91 : vector<3x256xi1>, vector<3x256xbf16>
    %c0_55 = arith.constant 0 : index
    %c24 = arith.constant 24 : index
    %c0_56 = arith.constant 0 : index
    %95 = vector.load %arg14[%c0_55, %c24, %c0_56] : memref<2x144x256xbf16, #tpu.memory_space<vmem>>, vector<1x3x256xbf16>
    %96 = vector.shape_cast %95 : vector<1x3x256xbf16> to vector<3x256xbf16>
    %97 = vector.shape_cast %94 : vector<3x256xbf16> to vector<1x3x256xbf16>
    tpu.vector_store %arg14[%c0_55, %c24, %c0_56], %97 {strides = array<i32>} : memref<2x144x256xbf16, #tpu.memory_space<vmem>>, vector<1x3x256xbf16>,
    %c0_57 = arith.constant 0 : index
    %c0_58 = arith.constant 0 : index
    %98 = vector.load %arg2[%c0_57, %c0_58] : memref<16x27xbf16, #tpu.memory_space<vmem>>, vector<16x27xbf16>
    %c0_59 = arith.constant 0 : index
    %c0_60 = arith.constant 0 : index
    %c0_61 = arith.constant 0 : index
    %99 = vector.load %arg14[%c0_59, %c0_60, %c0_61] : memref<2x144x256xbf16, #tpu.memory_space<vmem>>, vector<1x27x256xbf16>
    %100 = vector.shape_cast %99 : vector<1x27x256xbf16> to vector<27x256xbf16>
    %cst_62 = arith.constant dense<0.000000e+00> : vector<16x256xf32>
    %101 = tpu.matmul %98, %100, %cst_62 {dimension_numbers = #tpu.dot_dimension_numbers<[1], [0], [0], [1], [0, 0, 1, 1], [], []>} : vector<16x27xbf16>, vector<27x256xbf16>, vector<16x256xf32> -> vector<16x256xf32>
    %c0_63 = arith.constant 0 : index
    %c0_64 = arith.constant 0 : index
    %102 = vector.load %arg3[%c0_63, %c0_64] : memref<16x1xf32, #tpu.memory_space<vmem>>, vector<16x1xf32>
    %103 = vector.broadcast %102 : vector<16x1xf32> to vector<16x256xf32>
    %104 = arith.addf %101, %103 : vector<16x256xf32>
    %cst_65 = arith.constant 0.000000e+00 : f32
    %105 = vector.broadcast %cst_65 : f32 to vector<16x256xf32>
    %106 = arith.maximumf %104, %105 : vector<16x256xf32>
    %107 = arith.truncf %106 : vector<16x256xf32> to vector<16x256xbf16>
    %c0_66 = arith.constant 0 : index
    %c0_67 = arith.constant 0 : index
    %c17_68 = arith.constant 17 : index
    %108 = vector.load %arg13[%c0_66, %c0_67, %c17_68] : memref<2x16x290xbf16, #tpu.memory_space<vmem>>, vector<1x16x256xbf16>
    %109 = vector.shape_cast %108 : vector<1x16x256xbf16> to vector<16x256xbf16>
    %110 = vector.shape_cast %107 : vector<16x256xbf16> to vector<1x16x256xbf16>
    tpu.vector_store %arg13[%c0_66, %c0_67, %c17_68], %110 {strides = array<i32>} : memref<2x16x290xbf16, #tpu.memory_space<vmem>>, vector<1x16x256xbf16>,
    %c0_69 = arith.constant 0 : index
    %c0_70 = arith.constant 0 : index
    %c0_71 = arith.constant 0 : index
    %111 = vector.load %arg13[%c0_69, %c0_70, %c0_71] : memref<2x16x290xbf16, #tpu.memory_space<vmem>>, vector<1x16x256xbf16>
    %112 = vector.shape_cast %111 : vector<1x16x256xbf16> to vector<16x256xbf16>
    %cst_72 = arith.constant 0.000000e+00 : bf16
    %113 = vector.broadcast %cst_72 : bf16 to vector<16x256xbf16>
    %114 = vector.shape_cast %20 : vector<1x256xi1> to vector<1x256xi1>
    %115 = vector.broadcast %114 : vector<1x256xi1> to vector<16x256xi1>
    %116 = arith.select %115, %112, %113 : vector<16x256xi1>, vector<16x256xbf16>
    %c0_73 = arith.constant 0 : index
    %c0_74 = arith.constant 0 : index
    %c0_75 = arith.constant 0 : index
    %117 = vector.load %arg14[%c0_73, %c0_74, %c0_75] : memref<2x144x256xbf16, #tpu.memory_space<vmem>>, vector<1x16x256xbf16>
    %118 = vector.shape_cast %117 : vector<1x16x256xbf16> to vector<16x256xbf16>
    %119 = vector.shape_cast %116 : vector<16x256xbf16> to vector<1x16x256xbf16>
    tpu.vector_store %arg14[%c0_73, %c0_74, %c0_75], %119 {strides = array<i32>} : memref<2x144x256xbf16, #tpu.memory_space<vmem>>, vector<1x16x256xbf16>,
    %c0_76 = arith.constant 0 : index
    %c0_77 = arith.constant 0 : index
    %c1_78 = arith.constant 1 : index
    %120 = vector.load %arg13[%c0_76, %c0_77, %c1_78] : memref<2x16x290xbf16, #tpu.memory_space<vmem>>, vector<1x16x256xbf16>
    %121 = vector.shape_cast %120 : vector<1x16x256xbf16> to vector<16x256xbf16>
    %c0_79 = arith.constant 0 : index
    %c16_80 = arith.constant 16 : index
    %c0_81 = arith.constant 0 : index
    %122 = vector.load %arg14[%c0_79, %c16_80, %c0_81] : memref<2x144x256xbf16, #tpu.memory_space<vmem>>, vector<1x16x256xbf16>
    %123 = vector.shape_cast %122 : vector<1x16x256xbf16> to vector<16x256xbf16>
    %124 = vector.shape_cast %121 : vector<16x256xbf16> to vector<1x16x256xbf16>
    tpu.vector_store %arg14[%c0_79, %c16_80, %c0_81], %124 {strides = array<i32>} : memref<2x144x256xbf16, #tpu.memory_space<vmem>>, vector<1x16x256xbf16>,
    %c0_82 = arith.constant 0 : index
    %c0_83 = arith.constant 0 : index
    %c2_84 = arith.constant 2 : index
    %125 = vector.load %arg13[%c0_82, %c0_83, %c2_84] : memref<2x16x290xbf16, #tpu.memory_space<vmem>>, vector<1x16x256xbf16>
    %126 = vector.shape_cast %125 : vector<1x16x256xbf16> to vector<16x256xbf16>
    %cst_85 = arith.constant 0.000000e+00 : bf16
    %127 = vector.broadcast %cst_85 : bf16 to vector<16x256xbf16>
    %128 = vector.shape_cast %22 : vector<1x256xi1> to vector<1x256xi1>
    %129 = vector.broadcast %128 : vector<1x256xi1> to vector<16x256xi1>
    %130 = arith.select %129, %126, %127 : vector<16x256xi1>, vector<16x256xbf16>
    %c0_86 = arith.constant 0 : index
    %c32_87 = arith.constant 32 : index
    %c0_88 = arith.constant 0 : index
    %131 = vector.load %arg14[%c0_86, %c32_87, %c0_88] : memref<2x144x256xbf16, #tpu.memory_space<vmem>>, vector<1x16x256xbf16>
    %132 = vector.shape_cast %131 : vector<1x16x256xbf16> to vector<16x256xbf16>
    %133 = vector.shape_cast %130 : vector<16x256xbf16> to vector<1x16x256xbf16>
    tpu.vector_store %arg14[%c0_86, %c32_87, %c0_88], %133 {strides = array<i32>} : memref<2x144x256xbf16, #tpu.memory_space<vmem>>, vector<1x16x256xbf16>,
    %c0_89 = arith.constant 0 : index
    %c0_90 = arith.constant 0 : index
    %c16_91 = arith.constant 16 : index
    %134 = vector.load %arg13[%c0_89, %c0_90, %c16_91] : memref<2x16x290xbf16, #tpu.memory_space<vmem>>, vector<1x16x256xbf16>
    %135 = vector.shape_cast %134 : vector<1x16x256xbf16> to vector<16x256xbf16>
    %cst_92 = arith.constant 0.000000e+00 : bf16
    %136 = vector.broadcast %cst_92 : bf16 to vector<16x256xbf16>
    %137 = vector.shape_cast %20 : vector<1x256xi1> to vector<1x256xi1>
    %138 = vector.broadcast %137 : vector<1x256xi1> to vector<16x256xi1>
    %139 = arith.select %138, %135, %136 : vector<16x256xi1>, vector<16x256xbf16>
    %c0_93 = arith.constant 0 : index
    %c48 = arith.constant 48 : index
    %c0_94 = arith.constant 0 : index
    %140 = vector.load %arg14[%c0_93, %c48, %c0_94] : memref<2x144x256xbf16, #tpu.memory_space<vmem>>, vector<1x16x256xbf16>
    %141 = vector.shape_cast %140 : vector<1x16x256xbf16> to vector<16x256xbf16>
    %142 = vector.shape_cast %139 : vector<16x256xbf16> to vector<1x16x256xbf16>
    tpu.vector_store %arg14[%c0_93, %c48, %c0_94], %142 {strides = array<i32>} : memref<2x144x256xbf16, #tpu.memory_space<vmem>>, vector<1x16x256xbf16>,
    %c0_95 = arith.constant 0 : index
    %c0_96 = arith.constant 0 : index
    %c17_97 = arith.constant 17 : index
    %143 = vector.load %arg13[%c0_95, %c0_96, %c17_97] : memref<2x16x290xbf16, #tpu.memory_space<vmem>>, vector<1x16x256xbf16>
    %144 = vector.shape_cast %143 : vector<1x16x256xbf16> to vector<16x256xbf16>
    %c0_98 = arith.constant 0 : index
    %c64 = arith.constant 64 : index
    %c0_99 = arith.constant 0 : index
    %145 = vector.load %arg14[%c0_98, %c64, %c0_99] : memref<2x144x256xbf16, #tpu.memory_space<vmem>>, vector<1x16x256xbf16>
    %146 = vector.shape_cast %145 : vector<1x16x256xbf16> to vector<16x256xbf16>
    %147 = vector.shape_cast %144 : vector<16x256xbf16> to vector<1x16x256xbf16>
    tpu.vector_store %arg14[%c0_98, %c64, %c0_99], %147 {strides = array<i32>} : memref<2x144x256xbf16, #tpu.memory_space<vmem>>, vector<1x16x256xbf16>,
    %c0_100 = arith.constant 0 : index
    %c0_101 = arith.constant 0 : index
    %c18_102 = arith.constant 18 : index
    %148 = vector.load %arg13[%c0_100, %c0_101, %c18_102] : memref<2x16x290xbf16, #tpu.memory_space<vmem>>, vector<1x16x256xbf16>
    %149 = vector.shape_cast %148 : vector<1x16x256xbf16> to vector<16x256xbf16>
    %cst_103 = arith.constant 0.000000e+00 : bf16
    %150 = vector.broadcast %cst_103 : bf16 to vector<16x256xbf16>
    %151 = vector.shape_cast %22 : vector<1x256xi1> to vector<1x256xi1>
    %152 = vector.broadcast %151 : vector<1x256xi1> to vector<16x256xi1>
    %153 = arith.select %152, %149, %150 : vector<16x256xi1>, vector<16x256xbf16>
    %c0_104 = arith.constant 0 : index
    %c80 = arith.constant 80 : index
    %c0_105 = arith.constant 0 : index
    %154 = vector.load %arg14[%c0_104, %c80, %c0_105] : memref<2x144x256xbf16, #tpu.memory_space<vmem>>, vector<1x16x256xbf16>
    %155 = vector.shape_cast %154 : vector<1x16x256xbf16> to vector<16x256xbf16>
    %156 = vector.shape_cast %153 : vector<16x256xbf16> to vector<1x16x256xbf16>
    tpu.vector_store %arg14[%c0_104, %c80, %c0_105], %156 {strides = array<i32>} : memref<2x144x256xbf16, #tpu.memory_space<vmem>>, vector<1x16x256xbf16>,
    %c0_106 = arith.constant 0 : index
    %c0_107 = arith.constant 0 : index
    %c32_108 = arith.constant 32 : index
    %157 = vector.load %arg13[%c0_106, %c0_107, %c32_108] : memref<2x16x290xbf16, #tpu.memory_space<vmem>>, vector<1x16x256xbf16>
    %158 = vector.shape_cast %157 : vector<1x16x256xbf16> to vector<16x256xbf16>
    %cst_109 = arith.constant 0.000000e+00 : bf16
    %159 = vector.broadcast %cst_109 : bf16 to vector<16x256xbf16>
    %160 = vector.shape_cast %20 : vector<1x256xi1> to vector<1x256xi1>
    %161 = vector.broadcast %160 : vector<1x256xi1> to vector<16x256xi1>
    %162 = arith.select %161, %158, %159 : vector<16x256xi1>, vector<16x256xbf16>
    %c0_110 = arith.constant 0 : index
    %c96 = arith.constant 96 : index
    %c0_111 = arith.constant 0 : index
    %163 = vector.load %arg14[%c0_110, %c96, %c0_111] : memref<2x144x256xbf16, #tpu.memory_space<vmem>>, vector<1x16x256xbf16>
    %164 = vector.shape_cast %163 : vector<1x16x256xbf16> to vector<16x256xbf16>
    %165 = vector.shape_cast %162 : vector<16x256xbf16> to vector<1x16x256xbf16>
    tpu.vector_store %arg14[%c0_110, %c96, %c0_111], %165 {strides = array<i32>} : memref<2x144x256xbf16, #tpu.memory_space<vmem>>, vector<1x16x256xbf16>,
    %c0_112 = arith.constant 0 : index
    %c0_113 = arith.constant 0 : index
    %c33_114 = arith.constant 33 : index
    %166 = vector.load %arg13[%c0_112, %c0_113, %c33_114] : memref<2x16x290xbf16, #tpu.memory_space<vmem>>, vector<1x16x256xbf16>
    %167 = vector.shape_cast %166 : vector<1x16x256xbf16> to vector<16x256xbf16>
    %c0_115 = arith.constant 0 : index
    %c112 = arith.constant 112 : index
    %c0_116 = arith.constant 0 : index
    %168 = vector.load %arg14[%c0_115, %c112, %c0_116] : memref<2x144x256xbf16, #tpu.memory_space<vmem>>, vector<1x16x256xbf16>
    %169 = vector.shape_cast %168 : vector<1x16x256xbf16> to vector<16x256xbf16>
    %170 = vector.shape_cast %167 : vector<16x256xbf16> to vector<1x16x256xbf16>
    tpu.vector_store %arg14[%c0_115, %c112, %c0_116], %170 {strides = array<i32>} : memref<2x144x256xbf16, #tpu.memory_space<vmem>>, vector<1x16x256xbf16>,
    %c0_117 = arith.constant 0 : index
    %c0_118 = arith.constant 0 : index
    %c34_119 = arith.constant 34 : index
    %171 = vector.load %arg13[%c0_117, %c0_118, %c34_119] : memref<2x16x290xbf16, #tpu.memory_space<vmem>>, vector<1x16x256xbf16>
    %172 = vector.shape_cast %171 : vector<1x16x256xbf16> to vector<16x256xbf16>
    %cst_120 = arith.constant 0.000000e+00 : bf16
    %173 = vector.broadcast %cst_120 : bf16 to vector<16x256xbf16>
    %174 = vector.shape_cast %22 : vector<1x256xi1> to vector<1x256xi1>
    %175 = vector.broadcast %174 : vector<1x256xi1> to vector<16x256xi1>
    %176 = arith.select %175, %172, %173 : vector<16x256xi1>, vector<16x256xbf16>
    %c0_121 = arith.constant 0 : index
    %c128 = arith.constant 128 : index
    %c0_122 = arith.constant 0 : index
    %177 = vector.load %arg14[%c0_121, %c128, %c0_122] : memref<2x144x256xbf16, #tpu.memory_space<vmem>>, vector<1x16x256xbf16>
    %178 = vector.shape_cast %177 : vector<1x16x256xbf16> to vector<16x256xbf16>
    %179 = vector.shape_cast %176 : vector<16x256xbf16> to vector<1x16x256xbf16>
    tpu.vector_store %arg14[%c0_121, %c128, %c0_122], %179 {strides = array<i32>} : memref<2x144x256xbf16, #tpu.memory_space<vmem>>, vector<1x16x256xbf16>,
    %c0_123 = arith.constant 0 : index
    %c0_124 = arith.constant 0 : index
    %180 = vector.load %arg4[%c0_123, %c0_124] : memref<32x144xbf16, #tpu.memory_space<vmem>>, vector<32x144xbf16>
    %c0_125 = arith.constant 0 : index
    %c0_126 = arith.constant 0 : index
    %c0_127 = arith.constant 0 : index
    %181 = vector.load %arg14[%c0_125, %c0_126, %c0_127] : memref<2x144x256xbf16, #tpu.memory_space<vmem>>, vector<1x144x256xbf16>
    %182 = vector.shape_cast %181 : vector<1x144x256xbf16> to vector<144x256xbf16>
    %cst_128 = arith.constant dense<0.000000e+00> : vector<32x256xf32>
    %183 = tpu.matmul %180, %182, %cst_128 {dimension_numbers = #tpu.dot_dimension_numbers<[1], [0], [0], [1], [0, 0, 1, 1], [], []>} : vector<32x144xbf16>, vector<144x256xbf16>, vector<32x256xf32> -> vector<32x256xf32>
    %c0_129 = arith.constant 0 : index
    %c0_130 = arith.constant 0 : index
    %184 = vector.load %arg5[%c0_129, %c0_130] : memref<32x1xf32, #tpu.memory_space<vmem>>, vector<32x1xf32>
    %185 = vector.broadcast %184 : vector<32x1xf32> to vector<32x256xf32>
    %186 = arith.addf %183, %185 : vector<32x256xf32>
    %cst_131 = arith.constant 0.000000e+00 : f32
    %187 = vector.broadcast %cst_131 : f32 to vector<32x256xf32>
    %188 = arith.maximumf %186, %187 : vector<32x256xf32>
    %cst_132 = arith.constant dense<0.000000e+00> : vector<32xf32>
    %189 = vector.multi_reduction <add>, %188, %cst_132 [1] : vector<32x256xf32> to vector<32xf32>
    %190 = vector.shape_cast %189 : vector<32xf32> to vector<32x1xf32>
    %cst_133 = arith.constant 3.906250e-03 : f32
    %191 = vector.broadcast %cst_133 : f32 to vector<32x1xf32>
    %192 = arith.mulf %190, %191 : vector<32x1xf32>
    %c1_134 = arith.constant 1 : index
    %c0_135 = arith.constant 0 : index
    %c0_136 = arith.constant 0 : index
    %193 = vector.load %arg0[%c1_134, %c0_135, %c0_136] : memref<2x3x256xf32, #tpu.memory_space<vmem>>, vector<1x3x256xf32>
    %194 = vector.shape_cast %193 : vector<1x3x256xf32> to vector<3x256xf32>
    %195 = arith.truncf %194 : vector<3x256xf32> to vector<3x256xbf16>
    %c1_137 = arith.constant 1 : index
    %c0_138 = arith.constant 0 : index
    %c17_139 = arith.constant 17 : index
    %196 = vector.load %arg13[%c1_137, %c0_138, %c17_139] : memref<2x16x290xbf16, #tpu.memory_space<vmem>>, vector<1x3x256xbf16>
    %197 = vector.shape_cast %196 : vector<1x3x256xbf16> to vector<3x256xbf16>
    %198 = vector.shape_cast %195 : vector<3x256xbf16> to vector<1x3x256xbf16>
    tpu.vector_store %arg13[%c1_137, %c0_138, %c17_139], %198 {strides = array<i32>} : memref<2x16x290xbf16, #tpu.memory_space<vmem>>, vector<1x3x256xbf16>,
    %c1_140 = arith.constant 1 : index
    %c0_141 = arith.constant 0 : index
    %c0_142 = arith.constant 0 : index
    %199 = vector.load %arg13[%c1_140, %c0_141, %c0_142] : memref<2x16x290xbf16, #tpu.memory_space<vmem>>, vector<1x3x256xbf16>
    %200 = vector.shape_cast %199 : vector<1x3x256xbf16> to vector<3x256xbf16>
    %cst_143 = arith.constant 0.000000e+00 : bf16
    %201 = vector.broadcast %cst_143 : bf16 to vector<3x256xbf16>
    %202 = vector.shape_cast %20 : vector<1x256xi1> to vector<1x256xi1>
    %203 = vector.broadcast %202 : vector<1x256xi1> to vector<3x256xi1>
    %204 = arith.select %203, %200, %201 : vector<3x256xi1>, vector<3x256xbf16>
    %c1_144 = arith.constant 1 : index
    %c0_145 = arith.constant 0 : index
    %c0_146 = arith.constant 0 : index
    %205 = vector.load %arg14[%c1_144, %c0_145, %c0_146] : memref<2x144x256xbf16, #tpu.memory_space<vmem>>, vector<1x3x256xbf16>
    %206 = vector.shape_cast %205 : vector<1x3x256xbf16> to vector<3x256xbf16>
    %207 = vector.shape_cast %204 : vector<3x256xbf16> to vector<1x3x256xbf16>
    tpu.vector_store %arg14[%c1_144, %c0_145, %c0_146], %207 {strides = array<i32>} : memref<2x144x256xbf16, #tpu.memory_space<vmem>>, vector<1x3x256xbf16>,
    %c1_147 = arith.constant 1 : index
    %c0_148 = arith.constant 0 : index
    %c1_149 = arith.constant 1 : index
    %208 = vector.load %arg13[%c1_147, %c0_148, %c1_149] : memref<2x16x290xbf16, #tpu.memory_space<vmem>>, vector<1x3x256xbf16>
    %209 = vector.shape_cast %208 : vector<1x3x256xbf16> to vector<3x256xbf16>
    %c1_150 = arith.constant 1 : index
    %c3_151 = arith.constant 3 : index
    %c0_152 = arith.constant 0 : index
    %210 = vector.load %arg14[%c1_150, %c3_151, %c0_152] : memref<2x144x256xbf16, #tpu.memory_space<vmem>>, vector<1x3x256xbf16>
    %211 = vector.shape_cast %210 : vector<1x3x256xbf16> to vector<3x256xbf16>
    %212 = vector.shape_cast %209 : vector<3x256xbf16> to vector<1x3x256xbf16>
    tpu.vector_store %arg14[%c1_150, %c3_151, %c0_152], %212 {strides = array<i32>} : memref<2x144x256xbf16, #tpu.memory_space<vmem>>, vector<1x3x256xbf16>,
    %c1_153 = arith.constant 1 : index
    %c0_154 = arith.constant 0 : index
    %c2_155 = arith.constant 2 : index
    %213 = vector.load %arg13[%c1_153, %c0_154, %c2_155] : memref<2x16x290xbf16, #tpu.memory_space<vmem>>, vector<1x3x256xbf16>
    %214 = vector.shape_cast %213 : vector<1x3x256xbf16> to vector<3x256xbf16>
    %cst_156 = arith.constant 0.000000e+00 : bf16
    %215 = vector.broadcast %cst_156 : bf16 to vector<3x256xbf16>
    %216 = vector.shape_cast %22 : vector<1x256xi1> to vector<1x256xi1>
    %217 = vector.broadcast %216 : vector<1x256xi1> to vector<3x256xi1>
    %218 = arith.select %217, %214, %215 : vector<3x256xi1>, vector<3x256xbf16>
    %c1_157 = arith.constant 1 : index
    %c6_158 = arith.constant 6 : index
    %c0_159 = arith.constant 0 : index
    %219 = vector.load %arg14[%c1_157, %c6_158, %c0_159] : memref<2x144x256xbf16, #tpu.memory_space<vmem>>, vector<1x3x256xbf16>
    %220 = vector.shape_cast %219 : vector<1x3x256xbf16> to vector<3x256xbf16>
    %221 = vector.shape_cast %218 : vector<3x256xbf16> to vector<1x3x256xbf16>
    tpu.vector_store %arg14[%c1_157, %c6_158, %c0_159], %221 {strides = array<i32>} : memref<2x144x256xbf16, #tpu.memory_space<vmem>>, vector<1x3x256xbf16>,
    %c1_160 = arith.constant 1 : index
    %c0_161 = arith.constant 0 : index
    %c16_162 = arith.constant 16 : index
    %222 = vector.load %arg13[%c1_160, %c0_161, %c16_162] : memref<2x16x290xbf16, #tpu.memory_space<vmem>>, vector<1x3x256xbf16>
    %223 = vector.shape_cast %222 : vector<1x3x256xbf16> to vector<3x256xbf16>
    %cst_163 = arith.constant 0.000000e+00 : bf16
    %224 = vector.broadcast %cst_163 : bf16 to vector<3x256xbf16>
    %225 = vector.shape_cast %20 : vector<1x256xi1> to vector<1x256xi1>
    %226 = vector.broadcast %225 : vector<1x256xi1> to vector<3x256xi1>
    %227 = arith.select %226, %223, %224 : vector<3x256xi1>, vector<3x256xbf16>
    %c1_164 = arith.constant 1 : index
    %c9_165 = arith.constant 9 : index
    %c0_166 = arith.constant 0 : index
    %228 = vector.load %arg14[%c1_164, %c9_165, %c0_166] : memref<2x144x256xbf16, #tpu.memory_space<vmem>>, vector<1x3x256xbf16>
    %229 = vector.shape_cast %228 : vector<1x3x256xbf16> to vector<3x256xbf16>
    %230 = vector.shape_cast %227 : vector<3x256xbf16> to vector<1x3x256xbf16>
    tpu.vector_store %arg14[%c1_164, %c9_165, %c0_166], %230 {strides = array<i32>} : memref<2x144x256xbf16, #tpu.memory_space<vmem>>, vector<1x3x256xbf16>,
    %c1_167 = arith.constant 1 : index
    %c0_168 = arith.constant 0 : index
    %c17_169 = arith.constant 17 : index
    %231 = vector.load %arg13[%c1_167, %c0_168, %c17_169] : memref<2x16x290xbf16, #tpu.memory_space<vmem>>, vector<1x3x256xbf16>
    %232 = vector.shape_cast %231 : vector<1x3x256xbf16> to vector<3x256xbf16>
    %c1_170 = arith.constant 1 : index
    %c12_171 = arith.constant 12 : index
    %c0_172 = arith.constant 0 : index
    %233 = vector.load %arg14[%c1_170, %c12_171, %c0_172] : memref<2x144x256xbf16, #tpu.memory_space<vmem>>, vector<1x3x256xbf16>
    %234 = vector.shape_cast %233 : vector<1x3x256xbf16> to vector<3x256xbf16>
    %235 = vector.shape_cast %232 : vector<3x256xbf16> to vector<1x3x256xbf16>
    tpu.vector_store %arg14[%c1_170, %c12_171, %c0_172], %235 {strides = array<i32>} : memref<2x144x256xbf16, #tpu.memory_space<vmem>>, vector<1x3x256xbf16>,
    %c1_173 = arith.constant 1 : index
    %c0_174 = arith.constant 0 : index
    %c18_175 = arith.constant 18 : index
    %236 = vector.load %arg13[%c1_173, %c0_174, %c18_175] : memref<2x16x290xbf16, #tpu.memory_space<vmem>>, vector<1x3x256xbf16>
    %237 = vector.shape_cast %236 : vector<1x3x256xbf16> to vector<3x256xbf16>
    %cst_176 = arith.constant 0.000000e+00 : bf16
    %238 = vector.broadcast %cst_176 : bf16 to vector<3x256xbf16>
    %239 = vector.shape_cast %22 : vector<1x256xi1> to vector<1x256xi1>
    %240 = vector.broadcast %239 : vector<1x256xi1> to vector<3x256xi1>
    %241 = arith.select %240, %237, %238 : vector<3x256xi1>, vector<3x256xbf16>
    %c1_177 = arith.constant 1 : index
    %c15_178 = arith.constant 15 : index
    %c0_179 = arith.constant 0 : index
    %242 = vector.load %arg14[%c1_177, %c15_178, %c0_179] : memref<2x144x256xbf16, #tpu.memory_space<vmem>>, vector<1x3x256xbf16>
    %243 = vector.shape_cast %242 : vector<1x3x256xbf16> to vector<3x256xbf16>
    %244 = vector.shape_cast %241 : vector<3x256xbf16> to vector<1x3x256xbf16>
    tpu.vector_store %arg14[%c1_177, %c15_178, %c0_179], %244 {strides = array<i32>} : memref<2x144x256xbf16, #tpu.memory_space<vmem>>, vector<1x3x256xbf16>,
    %c1_180 = arith.constant 1 : index
    %c0_181 = arith.constant 0 : index
    %c32_182 = arith.constant 32 : index
    %245 = vector.load %arg13[%c1_180, %c0_181, %c32_182] : memref<2x16x290xbf16, #tpu.memory_space<vmem>>, vector<1x3x256xbf16>
    %246 = vector.shape_cast %245 : vector<1x3x256xbf16> to vector<3x256xbf16>
    %cst_183 = arith.constant 0.000000e+00 : bf16
    %247 = vector.broadcast %cst_183 : bf16 to vector<3x256xbf16>
    %248 = vector.shape_cast %20 : vector<1x256xi1> to vector<1x256xi1>
    %249 = vector.broadcast %248 : vector<1x256xi1> to vector<3x256xi1>
    %250 = arith.select %249, %246, %247 : vector<3x256xi1>, vector<3x256xbf16>
    %c1_184 = arith.constant 1 : index
    %c18_185 = arith.constant 18 : index
    %c0_186 = arith.constant 0 : index
    %251 = vector.load %arg14[%c1_184, %c18_185, %c0_186] : memref<2x144x256xbf16, #tpu.memory_space<vmem>>, vector<1x3x256xbf16>
    %252 = vector.shape_cast %251 : vector<1x3x256xbf16> to vector<3x256xbf16>
    %253 = vector.shape_cast %250 : vector<3x256xbf16> to vector<1x3x256xbf16>
    tpu.vector_store %arg14[%c1_184, %c18_185, %c0_186], %253 {strides = array<i32>} : memref<2x144x256xbf16, #tpu.memory_space<vmem>>, vector<1x3x256xbf16>,
    %c1_187 = arith.constant 1 : index
    %c0_188 = arith.constant 0 : index
    %c33_189 = arith.constant 33 : index
    %254 = vector.load %arg13[%c1_187, %c0_188, %c33_189] : memref<2x16x290xbf16, #tpu.memory_space<vmem>>, vector<1x3x256xbf16>
    %255 = vector.shape_cast %254 : vector<1x3x256xbf16> to vector<3x256xbf16>
    %c1_190 = arith.constant 1 : index
    %c21_191 = arith.constant 21 : index
    %c0_192 = arith.constant 0 : index
    %256 = vector.load %arg14[%c1_190, %c21_191, %c0_192] : memref<2x144x256xbf16, #tpu.memory_space<vmem>>, vector<1x3x256xbf16>
    %257 = vector.shape_cast %256 : vector<1x3x256xbf16> to vector<3x256xbf16>
    %258 = vector.shape_cast %255 : vector<3x256xbf16> to vector<1x3x256xbf16>
    tpu.vector_store %arg14[%c1_190, %c21_191, %c0_192], %258 {strides = array<i32>} : memref<2x144x256xbf16, #tpu.memory_space<vmem>>, vector<1x3x256xbf16>,
    %c1_193 = arith.constant 1 : index
    %c0_194 = arith.constant 0 : index
    %c34_195 = arith.constant 34 : index
    %259 = vector.load %arg13[%c1_193, %c0_194, %c34_195] : memref<2x16x290xbf16, #tpu.memory_space<vmem>>, vector<1x3x256xbf16>
    %260 = vector.shape_cast %259 : vector<1x3x256xbf16> to vector<3x256xbf16>
    %cst_196 = arith.constant 0.000000e+00 : bf16
    %261 = vector.broadcast %cst_196 : bf16 to vector<3x256xbf16>
    %262 = vector.shape_cast %22 : vector<1x256xi1> to vector<1x256xi1>
    %263 = vector.broadcast %262 : vector<1x256xi1> to vector<3x256xi1>
    %264 = arith.select %263, %260, %261 : vector<3x256xi1>, vector<3x256xbf16>
    %c1_197 = arith.constant 1 : index
    %c24_198 = arith.constant 24 : index
    %c0_199 = arith.constant 0 : index
    %265 = vector.load %arg14[%c1_197, %c24_198, %c0_199] : memref<2x144x256xbf16, #tpu.memory_space<vmem>>, vector<1x3x256xbf16>
    %266 = vector.shape_cast %265 : vector<1x3x256xbf16> to vector<3x256xbf16>
    %267 = vector.shape_cast %264 : vector<3x256xbf16> to vector<1x3x256xbf16>
    tpu.vector_store %arg14[%c1_197, %c24_198, %c0_199], %267 {strides = array<i32>} : memref<2x144x256xbf16, #tpu.memory_space<vmem>>, vector<1x3x256xbf16>,
    %c0_200 = arith.constant 0 : index
    %c0_201 = arith.constant 0 : index
    %268 = vector.load %arg2[%c0_200, %c0_201] : memref<16x27xbf16, #tpu.memory_space<vmem>>, vector<16x27xbf16>
    %c1_202 = arith.constant 1 : index
    %c0_203 = arith.constant 0 : index
    %c0_204 = arith.constant 0 : index
    %269 = vector.load %arg14[%c1_202, %c0_203, %c0_204] : memref<2x144x256xbf16, #tpu.memory_space<vmem>>, vector<1x27x256xbf16>
    %270 = vector.shape_cast %269 : vector<1x27x256xbf16> to vector<27x256xbf16>
    %cst_205 = arith.constant dense<0.000000e+00> : vector<16x256xf32>
    %271 = tpu.matmul %268, %270, %cst_205 {dimension_numbers = #tpu.dot_dimension_numbers<[1], [0], [0], [1], [0, 0, 1, 1], [], []>} : vector<16x27xbf16>, vector<27x256xbf16>, vector<16x256xf32> -> vector<16x256xf32>
    %c0_206 = arith.constant 0 : index
    %c0_207 = arith.constant 0 : index
    %272 = vector.load %arg3[%c0_206, %c0_207] : memref<16x1xf32, #tpu.memory_space<vmem>>, vector<16x1xf32>
    %273 = vector.broadcast %272 : vector<16x1xf32> to vector<16x256xf32>
    %274 = arith.addf %271, %273 : vector<16x256xf32>
    %cst_208 = arith.constant 0.000000e+00 : f32
    %275 = vector.broadcast %cst_208 : f32 to vector<16x256xf32>
    %276 = arith.maximumf %274, %275 : vector<16x256xf32>
    %277 = arith.truncf %276 : vector<16x256xf32> to vector<16x256xbf16>
    %c1_209 = arith.constant 1 : index
    %c0_210 = arith.constant 0 : index
    %c17_211 = arith.constant 17 : index
    %278 = vector.load %arg13[%c1_209, %c0_210, %c17_211] : memref<2x16x290xbf16, #tpu.memory_space<vmem>>, vector<1x16x256xbf16>
    %279 = vector.shape_cast %278 : vector<1x16x256xbf16> to vector<16x256xbf16>
    %280 = vector.shape_cast %277 : vector<16x256xbf16> to vector<1x16x256xbf16>
    tpu.vector_store %arg13[%c1_209, %c0_210, %c17_211], %280 {strides = array<i32>} : memref<2x16x290xbf16, #tpu.memory_space<vmem>>, vector<1x16x256xbf16>,
    %c1_212 = arith.constant 1 : index
    %c0_213 = arith.constant 0 : index
    %c0_214 = arith.constant 0 : index
    %281 = vector.load %arg13[%c1_212, %c0_213, %c0_214] : memref<2x16x290xbf16, #tpu.memory_space<vmem>>, vector<1x16x256xbf16>
    %282 = vector.shape_cast %281 : vector<1x16x256xbf16> to vector<16x256xbf16>
    %cst_215 = arith.constant 0.000000e+00 : bf16
    %283 = vector.broadcast %cst_215 : bf16 to vector<16x256xbf16>
    %284 = vector.shape_cast %20 : vector<1x256xi1> to vector<1x256xi1>
    %285 = vector.broadcast %284 : vector<1x256xi1> to vector<16x256xi1>
    %286 = arith.select %285, %282, %283 : vector<16x256xi1>, vector<16x256xbf16>
    %c1_216 = arith.constant 1 : index
    %c0_217 = arith.constant 0 : index
    %c0_218 = arith.constant 0 : index
    %287 = vector.load %arg14[%c1_216, %c0_217, %c0_218] : memref<2x144x256xbf16, #tpu.memory_space<vmem>>, vector<1x16x256xbf16>
    %288 = vector.shape_cast %287 : vector<1x16x256xbf16> to vector<16x256xbf16>
    %289 = vector.shape_cast %286 : vector<16x256xbf16> to vector<1x16x256xbf16>
    tpu.vector_store %arg14[%c1_216, %c0_217, %c0_218], %289 {strides = array<i32>} : memref<2x144x256xbf16, #tpu.memory_space<vmem>>, vector<1x16x256xbf16>,
    %c1_219 = arith.constant 1 : index
    %c0_220 = arith.constant 0 : index
    %c1_221 = arith.constant 1 : index
    %290 = vector.load %arg13[%c1_219, %c0_220, %c1_221] : memref<2x16x290xbf16, #tpu.memory_space<vmem>>, vector<1x16x256xbf16>
    %291 = vector.shape_cast %290 : vector<1x16x256xbf16> to vector<16x256xbf16>
    %c1_222 = arith.constant 1 : index
    %c16_223 = arith.constant 16 : index
    %c0_224 = arith.constant 0 : index
    %292 = vector.load %arg14[%c1_222, %c16_223, %c0_224] : memref<2x144x256xbf16, #tpu.memory_space<vmem>>, vector<1x16x256xbf16>
    %293 = vector.shape_cast %292 : vector<1x16x256xbf16> to vector<16x256xbf16>
    %294 = vector.shape_cast %291 : vector<16x256xbf16> to vector<1x16x256xbf16>
    tpu.vector_store %arg14[%c1_222, %c16_223, %c0_224], %294 {strides = array<i32>} : memref<2x144x256xbf16, #tpu.memory_space<vmem>>, vector<1x16x256xbf16>,
    %c1_225 = arith.constant 1 : index
    %c0_226 = arith.constant 0 : index
    %c2_227 = arith.constant 2 : index
    %295 = vector.load %arg13[%c1_225, %c0_226, %c2_227] : memref<2x16x290xbf16, #tpu.memory_space<vmem>>, vector<1x16x256xbf16>
    %296 = vector.shape_cast %295 : vector<1x16x256xbf16> to vector<16x256xbf16>
    %cst_228 = arith.constant 0.000000e+00 : bf16
    %297 = vector.broadcast %cst_228 : bf16 to vector<16x256xbf16>
    %298 = vector.shape_cast %22 : vector<1x256xi1> to vector<1x256xi1>
    %299 = vector.broadcast %298 : vector<1x256xi1> to vector<16x256xi1>
    %300 = arith.select %299, %296, %297 : vector<16x256xi1>, vector<16x256xbf16>
    %c1_229 = arith.constant 1 : index
    %c32_230 = arith.constant 32 : index
    %c0_231 = arith.constant 0 : index
    %301 = vector.load %arg14[%c1_229, %c32_230, %c0_231] : memref<2x144x256xbf16, #tpu.memory_space<vmem>>, vector<1x16x256xbf16>
    %302 = vector.shape_cast %301 : vector<1x16x256xbf16> to vector<16x256xbf16>
    %303 = vector.shape_cast %300 : vector<16x256xbf16> to vector<1x16x256xbf16>
    tpu.vector_store %arg14[%c1_229, %c32_230, %c0_231], %303 {strides = array<i32>} : memref<2x144x256xbf16, #tpu.memory_space<vmem>>, vector<1x16x256xbf16>,
    %c1_232 = arith.constant 1 : index
    %c0_233 = arith.constant 0 : index
    %c16_234 = arith.constant 16 : index
    %304 = vector.load %arg13[%c1_232, %c0_233, %c16_234] : memref<2x16x290xbf16, #tpu.memory_space<vmem>>, vector<1x16x256xbf16>
    %305 = vector.shape_cast %304 : vector<1x16x256xbf16> to vector<16x256xbf16>
    %cst_235 = arith.constant 0.000000e+00 : bf16
    %306 = vector.broadcast %cst_235 : bf16 to vector<16x256xbf16>
    %307 = vector.shape_cast %20 : vector<1x256xi1> to vector<1x256xi1>
    %308 = vector.broadcast %307 : vector<1x256xi1> to vector<16x256xi1>
    %309 = arith.select %308, %305, %306 : vector<16x256xi1>, vector<16x256xbf16>
    %c1_236 = arith.constant 1 : index
    %c48_237 = arith.constant 48 : index
    %c0_238 = arith.constant 0 : index
    %310 = vector.load %arg14[%c1_236, %c48_237, %c0_238] : memref<2x144x256xbf16, #tpu.memory_space<vmem>>, vector<1x16x256xbf16>
    %311 = vector.shape_cast %310 : vector<1x16x256xbf16> to vector<16x256xbf16>
    %312 = vector.shape_cast %309 : vector<16x256xbf16> to vector<1x16x256xbf16>
    tpu.vector_store %arg14[%c1_236, %c48_237, %c0_238], %312 {strides = array<i32>} : memref<2x144x256xbf16, #tpu.memory_space<vmem>>, vector<1x16x256xbf16>,
    %c1_239 = arith.constant 1 : index
    %c0_240 = arith.constant 0 : index
    %c17_241 = arith.constant 17 : index
    %313 = vector.load %arg13[%c1_239, %c0_240, %c17_241] : memref<2x16x290xbf16, #tpu.memory_space<vmem>>, vector<1x16x256xbf16>
    %314 = vector.shape_cast %313 : vector<1x16x256xbf16> to vector<16x256xbf16>
    %c1_242 = arith.constant 1 : index
    %c64_243 = arith.constant 64 : index
    %c0_244 = arith.constant 0 : index
    %315 = vector.load %arg14[%c1_242, %c64_243, %c0_244] : memref<2x144x256xbf16, #tpu.memory_space<vmem>>, vector<1x16x256xbf16>
    %316 = vector.shape_cast %315 : vector<1x16x256xbf16> to vector<16x256xbf16>
    %317 = vector.shape_cast %314 : vector<16x256xbf16> to vector<1x16x256xbf16>
    tpu.vector_store %arg14[%c1_242, %c64_243, %c0_244], %317 {strides = array<i32>} : memref<2x144x256xbf16, #tpu.memory_space<vmem>>, vector<1x16x256xbf16>,
    %c1_245 = arith.constant 1 : index
    %c0_246 = arith.constant 0 : index
    %c18_247 = arith.constant 18 : index
    %318 = vector.load %arg13[%c1_245, %c0_246, %c18_247] : memref<2x16x290xbf16, #tpu.memory_space<vmem>>, vector<1x16x256xbf16>
    %319 = vector.shape_cast %318 : vector<1x16x256xbf16> to vector<16x256xbf16>
    %cst_248 = arith.constant 0.000000e+00 : bf16
    %320 = vector.broadcast %cst_248 : bf16 to vector<16x256xbf16>
    %321 = vector.shape_cast %22 : vector<1x256xi1> to vector<1x256xi1>
    %322 = vector.broadcast %321 : vector<1x256xi1> to vector<16x256xi1>
    %323 = arith.select %322, %319, %320 : vector<16x256xi1>, vector<16x256xbf16>
    %c1_249 = arith.constant 1 : index
    %c80_250 = arith.constant 80 : index
    %c0_251 = arith.constant 0 : index
    %324 = vector.load %arg14[%c1_249, %c80_250, %c0_251] : memref<2x144x256xbf16, #tpu.memory_space<vmem>>, vector<1x16x256xbf16>
    %325 = vector.shape_cast %324 : vector<1x16x256xbf16> to vector<16x256xbf16>
    %326 = vector.shape_cast %323 : vector<16x256xbf16> to vector<1x16x256xbf16>
    tpu.vector_store %arg14[%c1_249, %c80_250, %c0_251], %326 {strides = array<i32>} : memref<2x144x256xbf16, #tpu.memory_space<vmem>>, vector<1x16x256xbf16>,
    %c1_252 = arith.constant 1 : index
    %c0_253 = arith.constant 0 : index
    %c32_254 = arith.constant 32 : index
    %327 = vector.load %arg13[%c1_252, %c0_253, %c32_254] : memref<2x16x290xbf16, #tpu.memory_space<vmem>>, vector<1x16x256xbf16>
    %328 = vector.shape_cast %327 : vector<1x16x256xbf16> to vector<16x256xbf16>
    %cst_255 = arith.constant 0.000000e+00 : bf16
    %329 = vector.broadcast %cst_255 : bf16 to vector<16x256xbf16>
    %330 = vector.shape_cast %20 : vector<1x256xi1> to vector<1x256xi1>
    %331 = vector.broadcast %330 : vector<1x256xi1> to vector<16x256xi1>
    %332 = arith.select %331, %328, %329 : vector<16x256xi1>, vector<16x256xbf16>
    %c1_256 = arith.constant 1 : index
    %c96_257 = arith.constant 96 : index
    %c0_258 = arith.constant 0 : index
    %333 = vector.load %arg14[%c1_256, %c96_257, %c0_258] : memref<2x144x256xbf16, #tpu.memory_space<vmem>>, vector<1x16x256xbf16>
    %334 = vector.shape_cast %333 : vector<1x16x256xbf16> to vector<16x256xbf16>
    %335 = vector.shape_cast %332 : vector<16x256xbf16> to vector<1x16x256xbf16>
    tpu.vector_store %arg14[%c1_256, %c96_257, %c0_258], %335 {strides = array<i32>} : memref<2x144x256xbf16, #tpu.memory_space<vmem>>, vector<1x16x256xbf16>,
    %c1_259 = arith.constant 1 : index
    %c0_260 = arith.constant 0 : index
    %c33_261 = arith.constant 33 : index
    %336 = vector.load %arg13[%c1_259, %c0_260, %c33_261] : memref<2x16x290xbf16, #tpu.memory_space<vmem>>, vector<1x16x256xbf16>
    %337 = vector.shape_cast %336 : vector<1x16x256xbf16> to vector<16x256xbf16>
    %c1_262 = arith.constant 1 : index
    %c112_263 = arith.constant 112 : index
    %c0_264 = arith.constant 0 : index
    %338 = vector.load %arg14[%c1_262, %c112_263, %c0_264] : memref<2x144x256xbf16, #tpu.memory_space<vmem>>, vector<1x16x256xbf16>
    %339 = vector.shape_cast %338 : vector<1x16x256xbf16> to vector<16x256xbf16>
    %340 = vector.shape_cast %337 : vector<16x256xbf16> to vector<1x16x256xbf16>
    tpu.vector_store %arg14[%c1_262, %c112_263, %c0_264], %340 {strides = array<i32>} : memref<2x144x256xbf16, #tpu.memory_space<vmem>>, vector<1x16x256xbf16>,
    %c1_265 = arith.constant 1 : index
    %c0_266 = arith.constant 0 : index
    %c34_267 = arith.constant 34 : index
    %341 = vector.load %arg13[%c1_265, %c0_266, %c34_267] : memref<2x16x290xbf16, #tpu.memory_space<vmem>>, vector<1x16x256xbf16>
    %342 = vector.shape_cast %341 : vector<1x16x256xbf16> to vector<16x256xbf16>
    %cst_268 = arith.constant 0.000000e+00 : bf16
    %343 = vector.broadcast %cst_268 : bf16 to vector<16x256xbf16>
    %344 = vector.shape_cast %22 : vector<1x256xi1> to vector<1x256xi1>
    %345 = vector.broadcast %344 : vector<1x256xi1> to vector<16x256xi1>
    %346 = arith.select %345, %342, %343 : vector<16x256xi1>, vector<16x256xbf16>
    %c1_269 = arith.constant 1 : index
    %c128_270 = arith.constant 128 : index
    %c0_271 = arith.constant 0 : index
    %347 = vector.load %arg14[%c1_269, %c128_270, %c0_271] : memref<2x144x256xbf16, #tpu.memory_space<vmem>>, vector<1x16x256xbf16>
    %348 = vector.shape_cast %347 : vector<1x16x256xbf16> to vector<16x256xbf16>
    %349 = vector.shape_cast %346 : vector<16x256xbf16> to vector<1x16x256xbf16>
    tpu.vector_store %arg14[%c1_269, %c128_270, %c0_271], %349 {strides = array<i32>} : memref<2x144x256xbf16, #tpu.memory_space<vmem>>, vector<1x16x256xbf16>,
    %c0_272 = arith.constant 0 : index
    %c0_273 = arith.constant 0 : index
    %350 = vector.load %arg4[%c0_272, %c0_273] : memref<32x144xbf16, #tpu.memory_space<vmem>>, vector<32x144xbf16>
    %c1_274 = arith.constant 1 : index
    %c0_275 = arith.constant 0 : index
    %c0_276 = arith.constant 0 : index
    %351 = vector.load %arg14[%c1_274, %c0_275, %c0_276] : memref<2x144x256xbf16, #tpu.memory_space<vmem>>, vector<1x144x256xbf16>
    %352 = vector.shape_cast %351 : vector<1x144x256xbf16> to vector<144x256xbf16>
    %cst_277 = arith.constant dense<0.000000e+00> : vector<32x256xf32>
    %353 = tpu.matmul %350, %352, %cst_277 {dimension_numbers = #tpu.dot_dimension_numbers<[1], [0], [0], [1], [0, 0, 1, 1], [], []>} : vector<32x144xbf16>, vector<144x256xbf16>, vector<32x256xf32> -> vector<32x256xf32>
    %c0_278 = arith.constant 0 : index
    %c0_279 = arith.constant 0 : index
    %354 = vector.load %arg5[%c0_278, %c0_279] : memref<32x1xf32, #tpu.memory_space<vmem>>, vector<32x1xf32>
    %355 = vector.broadcast %354 : vector<32x1xf32> to vector<32x256xf32>
    %356 = arith.addf %353, %355 : vector<32x256xf32>
    %cst_280 = arith.constant 0.000000e+00 : f32
    %357 = vector.broadcast %cst_280 : f32 to vector<32x256xf32>
    %358 = arith.maximumf %356, %357 : vector<32x256xf32>
    %cst_281 = arith.constant dense<0.000000e+00> : vector<32xf32>
    %359 = vector.multi_reduction <add>, %358, %cst_281 [1] : vector<32x256xf32> to vector<32xf32>
    %360 = vector.shape_cast %359 : vector<32xf32> to vector<32x1xf32>
    %cst_282 = arith.constant 3.906250e-03 : f32
    %361 = vector.broadcast %cst_282 : f32 to vector<32x1xf32>
    %362 = arith.mulf %360, %361 : vector<32x1xf32>
    %363 = tpu.concatenate %192, %362 in 1 : vector<32x1xf32>, vector<32x1xf32> -> vector<32x2xf32>
    %c0_283 = arith.constant 0 : index
    %c0_284 = arith.constant 0 : index
    %c0_285 = arith.constant 0 : index
    %364 = vector.load %arg1[%c0_283, %c0_284, %c0_285] : memref<2x3x256xf32, #tpu.memory_space<vmem>>, vector<1x3x256xf32>
    %365 = vector.shape_cast %364 : vector<1x3x256xf32> to vector<3x256xf32>
    %366 = arith.truncf %365 : vector<3x256xf32> to vector<3x256xbf16>
    %c0_286 = arith.constant 0 : index
    %c0_287 = arith.constant 0 : index
    %c17_288 = arith.constant 17 : index
    %367 = vector.load %arg13[%c0_286, %c0_287, %c17_288] : memref<2x16x290xbf16, #tpu.memory_space<vmem>>, vector<1x3x256xbf16>
    %368 = vector.shape_cast %367 : vector<1x3x256xbf16> to vector<3x256xbf16>
    %369 = vector.shape_cast %366 : vector<3x256xbf16> to vector<1x3x256xbf16>
    tpu.vector_store %arg13[%c0_286, %c0_287, %c17_288], %369 {strides = array<i32>} : memref<2x16x290xbf16, #tpu.memory_space<vmem>>, vector<1x3x256xbf16>,
    %c0_289 = arith.constant 0 : index
    %c0_290 = arith.constant 0 : index
    %c0_291 = arith.constant 0 : index
    %370 = vector.load %arg13[%c0_289, %c0_290, %c0_291] : memref<2x16x290xbf16, #tpu.memory_space<vmem>>, vector<1x3x256xbf16>
    %371 = vector.shape_cast %370 : vector<1x3x256xbf16> to vector<3x256xbf16>
    %cst_292 = arith.constant 0.000000e+00 : bf16
    %372 = vector.broadcast %cst_292 : bf16 to vector<3x256xbf16>
    %373 = vector.shape_cast %20 : vector<1x256xi1> to vector<1x256xi1>
    %374 = vector.broadcast %373 : vector<1x256xi1> to vector<3x256xi1>
    %375 = arith.select %374, %371, %372 : vector<3x256xi1>, vector<3x256xbf16>
    %c0_293 = arith.constant 0 : index
    %c0_294 = arith.constant 0 : index
    %c0_295 = arith.constant 0 : index
    %376 = vector.load %arg14[%c0_293, %c0_294, %c0_295] : memref<2x144x256xbf16, #tpu.memory_space<vmem>>, vector<1x3x256xbf16>
    %377 = vector.shape_cast %376 : vector<1x3x256xbf16> to vector<3x256xbf16>
    %378 = vector.shape_cast %375 : vector<3x256xbf16> to vector<1x3x256xbf16>
    tpu.vector_store %arg14[%c0_293, %c0_294, %c0_295], %378 {strides = array<i32>} : memref<2x144x256xbf16, #tpu.memory_space<vmem>>, vector<1x3x256xbf16>,
    %c0_296 = arith.constant 0 : index
    %c0_297 = arith.constant 0 : index
    %c1_298 = arith.constant 1 : index
    %379 = vector.load %arg13[%c0_296, %c0_297, %c1_298] : memref<2x16x290xbf16, #tpu.memory_space<vmem>>, vector<1x3x256xbf16>
    %380 = vector.shape_cast %379 : vector<1x3x256xbf16> to vector<3x256xbf16>
    %c0_299 = arith.constant 0 : index
    %c3_300 = arith.constant 3 : index
    %c0_301 = arith.constant 0 : index
    %381 = vector.load %arg14[%c0_299, %c3_300, %c0_301] : memref<2x144x256xbf16, #tpu.memory_space<vmem>>, vector<1x3x256xbf16>
    %382 = vector.shape_cast %381 : vector<1x3x256xbf16> to vector<3x256xbf16>
    %383 = vector.shape_cast %380 : vector<3x256xbf16> to vector<1x3x256xbf16>
    tpu.vector_store %arg14[%c0_299, %c3_300, %c0_301], %383 {strides = array<i32>} : memref<2x144x256xbf16, #tpu.memory_space<vmem>>, vector<1x3x256xbf16>,
    %c0_302 = arith.constant 0 : index
    %c0_303 = arith.constant 0 : index
    %c2_304 = arith.constant 2 : index
    %384 = vector.load %arg13[%c0_302, %c0_303, %c2_304] : memref<2x16x290xbf16, #tpu.memory_space<vmem>>, vector<1x3x256xbf16>
    %385 = vector.shape_cast %384 : vector<1x3x256xbf16> to vector<3x256xbf16>
    %cst_305 = arith.constant 0.000000e+00 : bf16
    %386 = vector.broadcast %cst_305 : bf16 to vector<3x256xbf16>
    %387 = vector.shape_cast %22 : vector<1x256xi1> to vector<1x256xi1>
    %388 = vector.broadcast %387 : vector<1x256xi1> to vector<3x256xi1>
    %389 = arith.select %388, %385, %386 : vector<3x256xi1>, vector<3x256xbf16>
    %c0_306 = arith.constant 0 : index
    %c6_307 = arith.constant 6 : index
    %c0_308 = arith.constant 0 : index
    %390 = vector.load %arg14[%c0_306, %c6_307, %c0_308] : memref<2x144x256xbf16, #tpu.memory_space<vmem>>, vector<1x3x256xbf16>
    %391 = vector.shape_cast %390 : vector<1x3x256xbf16> to vector<3x256xbf16>
    %392 = vector.shape_cast %389 : vector<3x256xbf16> to vector<1x3x256xbf16>
    tpu.vector_store %arg14[%c0_306, %c6_307, %c0_308], %392 {strides = array<i32>} : memref<2x144x256xbf16, #tpu.memory_space<vmem>>, vector<1x3x256xbf16>,
    %c0_309 = arith.constant 0 : index
    %c0_310 = arith.constant 0 : index
    %c16_311 = arith.constant 16 : index
    %393 = vector.load %arg13[%c0_309, %c0_310, %c16_311] : memref<2x16x290xbf16, #tpu.memory_space<vmem>>, vector<1x3x256xbf16>
    %394 = vector.shape_cast %393 : vector<1x3x256xbf16> to vector<3x256xbf16>
    %cst_312 = arith.constant 0.000000e+00 : bf16
    %395 = vector.broadcast %cst_312 : bf16 to vector<3x256xbf16>
    %396 = vector.shape_cast %20 : vector<1x256xi1> to vector<1x256xi1>
    %397 = vector.broadcast %396 : vector<1x256xi1> to vector<3x256xi1>
    %398 = arith.select %397, %394, %395 : vector<3x256xi1>, vector<3x256xbf16>
    %c0_313 = arith.constant 0 : index
    %c9_314 = arith.constant 9 : index
    %c0_315 = arith.constant 0 : index
    %399 = vector.load %arg14[%c0_313, %c9_314, %c0_315] : memref<2x144x256xbf16, #tpu.memory_space<vmem>>, vector<1x3x256xbf16>
    %400 = vector.shape_cast %399 : vector<1x3x256xbf16> to vector<3x256xbf16>
    %401 = vector.shape_cast %398 : vector<3x256xbf16> to vector<1x3x256xbf16>
    tpu.vector_store %arg14[%c0_313, %c9_314, %c0_315], %401 {strides = array<i32>} : memref<2x144x256xbf16, #tpu.memory_space<vmem>>, vector<1x3x256xbf16>,
    %c0_316 = arith.constant 0 : index
    %c0_317 = arith.constant 0 : index
    %c17_318 = arith.constant 17 : index
    %402 = vector.load %arg13[%c0_316, %c0_317, %c17_318] : memref<2x16x290xbf16, #tpu.memory_space<vmem>>, vector<1x3x256xbf16>
    %403 = vector.shape_cast %402 : vector<1x3x256xbf16> to vector<3x256xbf16>
    %c0_319 = arith.constant 0 : index
    %c12_320 = arith.constant 12 : index
    %c0_321 = arith.constant 0 : index
    %404 = vector.load %arg14[%c0_319, %c12_320, %c0_321] : memref<2x144x256xbf16, #tpu.memory_space<vmem>>, vector<1x3x256xbf16>
    %405 = vector.shape_cast %404 : vector<1x3x256xbf16> to vector<3x256xbf16>
    %406 = vector.shape_cast %403 : vector<3x256xbf16> to vector<1x3x256xbf16>
    tpu.vector_store %arg14[%c0_319, %c12_320, %c0_321], %406 {strides = array<i32>} : memref<2x144x256xbf16, #tpu.memory_space<vmem>>, vector<1x3x256xbf16>,
    %c0_322 = arith.constant 0 : index
    %c0_323 = arith.constant 0 : index
    %c18_324 = arith.constant 18 : index
    %407 = vector.load %arg13[%c0_322, %c0_323, %c18_324] : memref<2x16x290xbf16, #tpu.memory_space<vmem>>, vector<1x3x256xbf16>
    %408 = vector.shape_cast %407 : vector<1x3x256xbf16> to vector<3x256xbf16>
    %cst_325 = arith.constant 0.000000e+00 : bf16
    %409 = vector.broadcast %cst_325 : bf16 to vector<3x256xbf16>
    %410 = vector.shape_cast %22 : vector<1x256xi1> to vector<1x256xi1>
    %411 = vector.broadcast %410 : vector<1x256xi1> to vector<3x256xi1>
    %412 = arith.select %411, %408, %409 : vector<3x256xi1>, vector<3x256xbf16>
    %c0_326 = arith.constant 0 : index
    %c15_327 = arith.constant 15 : index
    %c0_328 = arith.constant 0 : index
    %413 = vector.load %arg14[%c0_326, %c15_327, %c0_328] : memref<2x144x256xbf16, #tpu.memory_space<vmem>>, vector<1x3x256xbf16>
    %414 = vector.shape_cast %413 : vector<1x3x256xbf16> to vector<3x256xbf16>
    %415 = vector.shape_cast %412 : vector<3x256xbf16> to vector<1x3x256xbf16>
    tpu.vector_store %arg14[%c0_326, %c15_327, %c0_328], %415 {strides = array<i32>} : memref<2x144x256xbf16, #tpu.memory_space<vmem>>, vector<1x3x256xbf16>,
    %c0_329 = arith.constant 0 : index
    %c0_330 = arith.constant 0 : index
    %c32_331 = arith.constant 32 : index
    %416 = vector.load %arg13[%c0_329, %c0_330, %c32_331] : memref<2x16x290xbf16, #tpu.memory_space<vmem>>, vector<1x3x256xbf16>
    %417 = vector.shape_cast %416 : vector<1x3x256xbf16> to vector<3x256xbf16>
    %cst_332 = arith.constant 0.000000e+00 : bf16
    %418 = vector.broadcast %cst_332 : bf16 to vector<3x256xbf16>
    %419 = vector.shape_cast %20 : vector<1x256xi1> to vector<1x256xi1>
    %420 = vector.broadcast %419 : vector<1x256xi1> to vector<3x256xi1>
    %421 = arith.select %420, %417, %418 : vector<3x256xi1>, vector<3x256xbf16>
    %c0_333 = arith.constant 0 : index
    %c18_334 = arith.constant 18 : index
    %c0_335 = arith.constant 0 : index
    %422 = vector.load %arg14[%c0_333, %c18_334, %c0_335] : memref<2x144x256xbf16, #tpu.memory_space<vmem>>, vector<1x3x256xbf16>
    %423 = vector.shape_cast %422 : vector<1x3x256xbf16> to vector<3x256xbf16>
    %424 = vector.shape_cast %421 : vector<3x256xbf16> to vector<1x3x256xbf16>
    tpu.vector_store %arg14[%c0_333, %c18_334, %c0_335], %424 {strides = array<i32>} : memref<2x144x256xbf16, #tpu.memory_space<vmem>>, vector<1x3x256xbf16>,
    %c0_336 = arith.constant 0 : index
    %c0_337 = arith.constant 0 : index
    %c33_338 = arith.constant 33 : index
    %425 = vector.load %arg13[%c0_336, %c0_337, %c33_338] : memref<2x16x290xbf16, #tpu.memory_space<vmem>>, vector<1x3x256xbf16>
    %426 = vector.shape_cast %425 : vector<1x3x256xbf16> to vector<3x256xbf16>
    %c0_339 = arith.constant 0 : index
    %c21_340 = arith.constant 21 : index
    %c0_341 = arith.constant 0 : index
    %427 = vector.load %arg14[%c0_339, %c21_340, %c0_341] : memref<2x144x256xbf16, #tpu.memory_space<vmem>>, vector<1x3x256xbf16>
    %428 = vector.shape_cast %427 : vector<1x3x256xbf16> to vector<3x256xbf16>
    %429 = vector.shape_cast %426 : vector<3x256xbf16> to vector<1x3x256xbf16>
    tpu.vector_store %arg14[%c0_339, %c21_340, %c0_341], %429 {strides = array<i32>} : memref<2x144x256xbf16, #tpu.memory_space<vmem>>, vector<1x3x256xbf16>,
    %c0_342 = arith.constant 0 : index
    %c0_343 = arith.constant 0 : index
    %c34_344 = arith.constant 34 : index
    %430 = vector.load %arg13[%c0_342, %c0_343, %c34_344] : memref<2x16x290xbf16, #tpu.memory_space<vmem>>, vector<1x3x256xbf16>
    %431 = vector.shape_cast %430 : vector<1x3x256xbf16> to vector<3x256xbf16>
    %cst_345 = arith.constant 0.000000e+00 : bf16
    %432 = vector.broadcast %cst_345 : bf16 to vector<3x256xbf16>
    %433 = vector.shape_cast %22 : vector<1x256xi1> to vector<1x256xi1>
    %434 = vector.broadcast %433 : vector<1x256xi1> to vector<3x256xi1>
    %435 = arith.select %434, %431, %432 : vector<3x256xi1>, vector<3x256xbf16>
    %c0_346 = arith.constant 0 : index
    %c24_347 = arith.constant 24 : index
    %c0_348 = arith.constant 0 : index
    %436 = vector.load %arg14[%c0_346, %c24_347, %c0_348] : memref<2x144x256xbf16, #tpu.memory_space<vmem>>, vector<1x3x256xbf16>
    %437 = vector.shape_cast %436 : vector<1x3x256xbf16> to vector<3x256xbf16>
    %438 = vector.shape_cast %435 : vector<3x256xbf16> to vector<1x3x256xbf16>
    tpu.vector_store %arg14[%c0_346, %c24_347, %c0_348], %438 {strides = array<i32>} : memref<2x144x256xbf16, #tpu.memory_space<vmem>>, vector<1x3x256xbf16>,
    %c0_349 = arith.constant 0 : index
    %c0_350 = arith.constant 0 : index
    %439 = vector.load %arg6[%c0_349, %c0_350] : memref<16x27xbf16, #tpu.memory_space<vmem>>, vector<16x27xbf16>
    %c0_351 = arith.constant 0 : index
    %c0_352 = arith.constant 0 : index
    %c0_353 = arith.constant 0 : index
    %440 = vector.load %arg14[%c0_351, %c0_352, %c0_353] : memref<2x144x256xbf16, #tpu.memory_space<vmem>>, vector<1x27x256xbf16>
    %441 = vector.shape_cast %440 : vector<1x27x256xbf16> to vector<27x256xbf16>
    %cst_354 = arith.constant dense<0.000000e+00> : vector<16x256xf32>
    %442 = tpu.matmul %439, %441, %cst_354 {dimension_numbers = #tpu.dot_dimension_numbers<[1], [0], [0], [1], [0, 0, 1, 1], [], []>} : vector<16x27xbf16>, vector<27x256xbf16>, vector<16x256xf32> -> vector<16x256xf32>
    %c0_355 = arith.constant 0 : index
    %c0_356 = arith.constant 0 : index
    %443 = vector.load %arg7[%c0_355, %c0_356] : memref<16x1xf32, #tpu.memory_space<vmem>>, vector<16x1xf32>
    %444 = vector.broadcast %443 : vector<16x1xf32> to vector<16x256xf32>
    %445 = arith.addf %442, %444 : vector<16x256xf32>
    %cst_357 = arith.constant 0.000000e+00 : f32
    %446 = vector.broadcast %cst_357 : f32 to vector<16x256xf32>
    %447 = arith.maximumf %445, %446 : vector<16x256xf32>
    %448 = arith.truncf %447 : vector<16x256xf32> to vector<16x256xbf16>
    %c0_358 = arith.constant 0 : index
    %c0_359 = arith.constant 0 : index
    %c17_360 = arith.constant 17 : index
    %449 = vector.load %arg13[%c0_358, %c0_359, %c17_360] : memref<2x16x290xbf16, #tpu.memory_space<vmem>>, vector<1x16x256xbf16>
    %450 = vector.shape_cast %449 : vector<1x16x256xbf16> to vector<16x256xbf16>
    %451 = vector.shape_cast %448 : vector<16x256xbf16> to vector<1x16x256xbf16>
    tpu.vector_store %arg13[%c0_358, %c0_359, %c17_360], %451 {strides = array<i32>} : memref<2x16x290xbf16, #tpu.memory_space<vmem>>, vector<1x16x256xbf16>,
    %c0_361 = arith.constant 0 : index
    %c0_362 = arith.constant 0 : index
    %c0_363 = arith.constant 0 : index
    %452 = vector.load %arg13[%c0_361, %c0_362, %c0_363] : memref<2x16x290xbf16, #tpu.memory_space<vmem>>, vector<1x16x256xbf16>
    %453 = vector.shape_cast %452 : vector<1x16x256xbf16> to vector<16x256xbf16>
    %cst_364 = arith.constant 0.000000e+00 : bf16
    %454 = vector.broadcast %cst_364 : bf16 to vector<16x256xbf16>
    %455 = vector.shape_cast %20 : vector<1x256xi1> to vector<1x256xi1>
    %456 = vector.broadcast %455 : vector<1x256xi1> to vector<16x256xi1>
    %457 = arith.select %456, %453, %454 : vector<16x256xi1>, vector<16x256xbf16>
    %c0_365 = arith.constant 0 : index
    %c0_366 = arith.constant 0 : index
    %c0_367 = arith.constant 0 : index
    %458 = vector.load %arg14[%c0_365, %c0_366, %c0_367] : memref<2x144x256xbf16, #tpu.memory_space<vmem>>, vector<1x16x256xbf16>
    %459 = vector.shape_cast %458 : vector<1x16x256xbf16> to vector<16x256xbf16>
    %460 = vector.shape_cast %457 : vector<16x256xbf16> to vector<1x16x256xbf16>
    tpu.vector_store %arg14[%c0_365, %c0_366, %c0_367], %460 {strides = array<i32>} : memref<2x144x256xbf16, #tpu.memory_space<vmem>>, vector<1x16x256xbf16>,
    %c0_368 = arith.constant 0 : index
    %c0_369 = arith.constant 0 : index
    %c1_370 = arith.constant 1 : index
    %461 = vector.load %arg13[%c0_368, %c0_369, %c1_370] : memref<2x16x290xbf16, #tpu.memory_space<vmem>>, vector<1x16x256xbf16>
    %462 = vector.shape_cast %461 : vector<1x16x256xbf16> to vector<16x256xbf16>
    %c0_371 = arith.constant 0 : index
    %c16_372 = arith.constant 16 : index
    %c0_373 = arith.constant 0 : index
    %463 = vector.load %arg14[%c0_371, %c16_372, %c0_373] : memref<2x144x256xbf16, #tpu.memory_space<vmem>>, vector<1x16x256xbf16>
    %464 = vector.shape_cast %463 : vector<1x16x256xbf16> to vector<16x256xbf16>
    %465 = vector.shape_cast %462 : vector<16x256xbf16> to vector<1x16x256xbf16>
    tpu.vector_store %arg14[%c0_371, %c16_372, %c0_373], %465 {strides = array<i32>} : memref<2x144x256xbf16, #tpu.memory_space<vmem>>, vector<1x16x256xbf16>,
    %c0_374 = arith.constant 0 : index
    %c0_375 = arith.constant 0 : index
    %c2_376 = arith.constant 2 : index
    %466 = vector.load %arg13[%c0_374, %c0_375, %c2_376] : memref<2x16x290xbf16, #tpu.memory_space<vmem>>, vector<1x16x256xbf16>
    %467 = vector.shape_cast %466 : vector<1x16x256xbf16> to vector<16x256xbf16>
    %cst_377 = arith.constant 0.000000e+00 : bf16
    %468 = vector.broadcast %cst_377 : bf16 to vector<16x256xbf16>
    %469 = vector.shape_cast %22 : vector<1x256xi1> to vector<1x256xi1>
    %470 = vector.broadcast %469 : vector<1x256xi1> to vector<16x256xi1>
    %471 = arith.select %470, %467, %468 : vector<16x256xi1>, vector<16x256xbf16>
    %c0_378 = arith.constant 0 : index
    %c32_379 = arith.constant 32 : index
    %c0_380 = arith.constant 0 : index
    %472 = vector.load %arg14[%c0_378, %c32_379, %c0_380] : memref<2x144x256xbf16, #tpu.memory_space<vmem>>, vector<1x16x256xbf16>
    %473 = vector.shape_cast %472 : vector<1x16x256xbf16> to vector<16x256xbf16>
    %474 = vector.shape_cast %471 : vector<16x256xbf16> to vector<1x16x256xbf16>
    tpu.vector_store %arg14[%c0_378, %c32_379, %c0_380], %474 {strides = array<i32>} : memref<2x144x256xbf16, #tpu.memory_space<vmem>>, vector<1x16x256xbf16>,
    %c0_381 = arith.constant 0 : index
    %c0_382 = arith.constant 0 : index
    %c16_383 = arith.constant 16 : index
    %475 = vector.load %arg13[%c0_381, %c0_382, %c16_383] : memref<2x16x290xbf16, #tpu.memory_space<vmem>>, vector<1x16x256xbf16>
    %476 = vector.shape_cast %475 : vector<1x16x256xbf16> to vector<16x256xbf16>
    %cst_384 = arith.constant 0.000000e+00 : bf16
    %477 = vector.broadcast %cst_384 : bf16 to vector<16x256xbf16>
    %478 = vector.shape_cast %20 : vector<1x256xi1> to vector<1x256xi1>
    %479 = vector.broadcast %478 : vector<1x256xi1> to vector<16x256xi1>
    %480 = arith.select %479, %476, %477 : vector<16x256xi1>, vector<16x256xbf16>
    %c0_385 = arith.constant 0 : index
    %c48_386 = arith.constant 48 : index
    %c0_387 = arith.constant 0 : index
    %481 = vector.load %arg14[%c0_385, %c48_386, %c0_387] : memref<2x144x256xbf16, #tpu.memory_space<vmem>>, vector<1x16x256xbf16>
    %482 = vector.shape_cast %481 : vector<1x16x256xbf16> to vector<16x256xbf16>
    %483 = vector.shape_cast %480 : vector<16x256xbf16> to vector<1x16x256xbf16>
    tpu.vector_store %arg14[%c0_385, %c48_386, %c0_387], %483 {strides = array<i32>} : memref<2x144x256xbf16, #tpu.memory_space<vmem>>, vector<1x16x256xbf16>,
    %c0_388 = arith.constant 0 : index
    %c0_389 = arith.constant 0 : index
    %c17_390 = arith.constant 17 : index
    %484 = vector.load %arg13[%c0_388, %c0_389, %c17_390] : memref<2x16x290xbf16, #tpu.memory_space<vmem>>, vector<1x16x256xbf16>
    %485 = vector.shape_cast %484 : vector<1x16x256xbf16> to vector<16x256xbf16>
    %c0_391 = arith.constant 0 : index
    %c64_392 = arith.constant 64 : index
    %c0_393 = arith.constant 0 : index
    %486 = vector.load %arg14[%c0_391, %c64_392, %c0_393] : memref<2x144x256xbf16, #tpu.memory_space<vmem>>, vector<1x16x256xbf16>
    %487 = vector.shape_cast %486 : vector<1x16x256xbf16> to vector<16x256xbf16>
    %488 = vector.shape_cast %485 : vector<16x256xbf16> to vector<1x16x256xbf16>
    tpu.vector_store %arg14[%c0_391, %c64_392, %c0_393], %488 {strides = array<i32>} : memref<2x144x256xbf16, #tpu.memory_space<vmem>>, vector<1x16x256xbf16>,
    %c0_394 = arith.constant 0 : index
    %c0_395 = arith.constant 0 : index
    %c18_396 = arith.constant 18 : index
    %489 = vector.load %arg13[%c0_394, %c0_395, %c18_396] : memref<2x16x290xbf16, #tpu.memory_space<vmem>>, vector<1x16x256xbf16>
    %490 = vector.shape_cast %489 : vector<1x16x256xbf16> to vector<16x256xbf16>
    %cst_397 = arith.constant 0.000000e+00 : bf16
    %491 = vector.broadcast %cst_397 : bf16 to vector<16x256xbf16>
    %492 = vector.shape_cast %22 : vector<1x256xi1> to vector<1x256xi1>
    %493 = vector.broadcast %492 : vector<1x256xi1> to vector<16x256xi1>
    %494 = arith.select %493, %490, %491 : vector<16x256xi1>, vector<16x256xbf16>
    %c0_398 = arith.constant 0 : index
    %c80_399 = arith.constant 80 : index
    %c0_400 = arith.constant 0 : index
    %495 = vector.load %arg14[%c0_398, %c80_399, %c0_400] : memref<2x144x256xbf16, #tpu.memory_space<vmem>>, vector<1x16x256xbf16>
    %496 = vector.shape_cast %495 : vector<1x16x256xbf16> to vector<16x256xbf16>
    %497 = vector.shape_cast %494 : vector<16x256xbf16> to vector<1x16x256xbf16>
    tpu.vector_store %arg14[%c0_398, %c80_399, %c0_400], %497 {strides = array<i32>} : memref<2x144x256xbf16, #tpu.memory_space<vmem>>, vector<1x16x256xbf16>,
    %c0_401 = arith.constant 0 : index
    %c0_402 = arith.constant 0 : index
    %c32_403 = arith.constant 32 : index
    %498 = vector.load %arg13[%c0_401, %c0_402, %c32_403] : memref<2x16x290xbf16, #tpu.memory_space<vmem>>, vector<1x16x256xbf16>
    %499 = vector.shape_cast %498 : vector<1x16x256xbf16> to vector<16x256xbf16>
    %cst_404 = arith.constant 0.000000e+00 : bf16
    %500 = vector.broadcast %cst_404 : bf16 to vector<16x256xbf16>
    %501 = vector.shape_cast %20 : vector<1x256xi1> to vector<1x256xi1>
    %502 = vector.broadcast %501 : vector<1x256xi1> to vector<16x256xi1>
    %503 = arith.select %502, %499, %500 : vector<16x256xi1>, vector<16x256xbf16>
    %c0_405 = arith.constant 0 : index
    %c96_406 = arith.constant 96 : index
    %c0_407 = arith.constant 0 : index
    %504 = vector.load %arg14[%c0_405, %c96_406, %c0_407] : memref<2x144x256xbf16, #tpu.memory_space<vmem>>, vector<1x16x256xbf16>
    %505 = vector.shape_cast %504 : vector<1x16x256xbf16> to vector<16x256xbf16>
    %506 = vector.shape_cast %503 : vector<16x256xbf16> to vector<1x16x256xbf16>
    tpu.vector_store %arg14[%c0_405, %c96_406, %c0_407], %506 {strides = array<i32>} : memref<2x144x256xbf16, #tpu.memory_space<vmem>>, vector<1x16x256xbf16>,
    %c0_408 = arith.constant 0 : index
    %c0_409 = arith.constant 0 : index
    %c33_410 = arith.constant 33 : index
    %507 = vector.load %arg13[%c0_408, %c0_409, %c33_410] : memref<2x16x290xbf16, #tpu.memory_space<vmem>>, vector<1x16x256xbf16>
    %508 = vector.shape_cast %507 : vector<1x16x256xbf16> to vector<16x256xbf16>
    %c0_411 = arith.constant 0 : index
    %c112_412 = arith.constant 112 : index
    %c0_413 = arith.constant 0 : index
    %509 = vector.load %arg14[%c0_411, %c112_412, %c0_413] : memref<2x144x256xbf16, #tpu.memory_space<vmem>>, vector<1x16x256xbf16>
    %510 = vector.shape_cast %509 : vector<1x16x256xbf16> to vector<16x256xbf16>
    %511 = vector.shape_cast %508 : vector<16x256xbf16> to vector<1x16x256xbf16>
    tpu.vector_store %arg14[%c0_411, %c112_412, %c0_413], %511 {strides = array<i32>} : memref<2x144x256xbf16, #tpu.memory_space<vmem>>, vector<1x16x256xbf16>,
    %c0_414 = arith.constant 0 : index
    %c0_415 = arith.constant 0 : index
    %c34_416 = arith.constant 34 : index
    %512 = vector.load %arg13[%c0_414, %c0_415, %c34_416] : memref<2x16x290xbf16, #tpu.memory_space<vmem>>, vector<1x16x256xbf16>
    %513 = vector.shape_cast %512 : vector<1x16x256xbf16> to vector<16x256xbf16>
    %cst_417 = arith.constant 0.000000e+00 : bf16
    %514 = vector.broadcast %cst_417 : bf16 to vector<16x256xbf16>
    %515 = vector.shape_cast %22 : vector<1x256xi1> to vector<1x256xi1>
    %516 = vector.broadcast %515 : vector<1x256xi1> to vector<16x256xi1>
    %517 = arith.select %516, %513, %514 : vector<16x256xi1>, vector<16x256xbf16>
    %c0_418 = arith.constant 0 : index
    %c128_419 = arith.constant 128 : index
    %c0_420 = arith.constant 0 : index
    %518 = vector.load %arg14[%c0_418, %c128_419, %c0_420] : memref<2x144x256xbf16, #tpu.memory_space<vmem>>, vector<1x16x256xbf16>
    %519 = vector.shape_cast %518 : vector<1x16x256xbf16> to vector<16x256xbf16>
    %520 = vector.shape_cast %517 : vector<16x256xbf16> to vector<1x16x256xbf16>
    tpu.vector_store %arg14[%c0_418, %c128_419, %c0_420], %520 {strides = array<i32>} : memref<2x144x256xbf16, #tpu.memory_space<vmem>>, vector<1x16x256xbf16>,
    %c0_421 = arith.constant 0 : index
    %c0_422 = arith.constant 0 : index
    %521 = vector.load %arg8[%c0_421, %c0_422] : memref<32x144xbf16, #tpu.memory_space<vmem>>, vector<32x144xbf16>
    %c0_423 = arith.constant 0 : index
    %c0_424 = arith.constant 0 : index
    %c0_425 = arith.constant 0 : index
    %522 = vector.load %arg14[%c0_423, %c0_424, %c0_425] : memref<2x144x256xbf16, #tpu.memory_space<vmem>>, vector<1x144x256xbf16>
    %523 = vector.shape_cast %522 : vector<1x144x256xbf16> to vector<144x256xbf16>
    %cst_426 = arith.constant dense<0.000000e+00> : vector<32x256xf32>
    %524 = tpu.matmul %521, %523, %cst_426 {dimension_numbers = #tpu.dot_dimension_numbers<[1], [0], [0], [1], [0, 0, 1, 1], [], []>} : vector<32x144xbf16>, vector<144x256xbf16>, vector<32x256xf32> -> vector<32x256xf32>
    %c0_427 = arith.constant 0 : index
    %c0_428 = arith.constant 0 : index
    %525 = vector.load %arg9[%c0_427, %c0_428] : memref<32x1xf32, #tpu.memory_space<vmem>>, vector<32x1xf32>
    %526 = vector.broadcast %525 : vector<32x1xf32> to vector<32x256xf32>
    %527 = arith.addf %524, %526 : vector<32x256xf32>
    %cst_429 = arith.constant 0.000000e+00 : f32
    %528 = vector.broadcast %cst_429 : f32 to vector<32x256xf32>
    %529 = arith.maximumf %527, %528 : vector<32x256xf32>
    %cst_430 = arith.constant dense<0.000000e+00> : vector<32xf32>
    %530 = vector.multi_reduction <add>, %529, %cst_430 [1] : vector<32x256xf32> to vector<32xf32>
    %531 = vector.shape_cast %530 : vector<32xf32> to vector<32x1xf32>
    %cst_431 = arith.constant 3.906250e-03 : f32
    %532 = vector.broadcast %cst_431 : f32 to vector<32x1xf32>
    %533 = arith.mulf %531, %532 : vector<32x1xf32>
    %c1_432 = arith.constant 1 : index
    %c0_433 = arith.constant 0 : index
    %c0_434 = arith.constant 0 : index
    %534 = vector.load %arg1[%c1_432, %c0_433, %c0_434] : memref<2x3x256xf32, #tpu.memory_space<vmem>>, vector<1x3x256xf32>
    %535 = vector.shape_cast %534 : vector<1x3x256xf32> to vector<3x256xf32>
    %536 = arith.truncf %535 : vector<3x256xf32> to vector<3x256xbf16>
    %c1_435 = arith.constant 1 : index
    %c0_436 = arith.constant 0 : index
    %c17_437 = arith.constant 17 : index
    %537 = vector.load %arg13[%c1_435, %c0_436, %c17_437] : memref<2x16x290xbf16, #tpu.memory_space<vmem>>, vector<1x3x256xbf16>
    %538 = vector.shape_cast %537 : vector<1x3x256xbf16> to vector<3x256xbf16>
    %539 = vector.shape_cast %536 : vector<3x256xbf16> to vector<1x3x256xbf16>
    tpu.vector_store %arg13[%c1_435, %c0_436, %c17_437], %539 {strides = array<i32>} : memref<2x16x290xbf16, #tpu.memory_space<vmem>>, vector<1x3x256xbf16>,
    %c1_438 = arith.constant 1 : index
    %c0_439 = arith.constant 0 : index
    %c0_440 = arith.constant 0 : index
    %540 = vector.load %arg13[%c1_438, %c0_439, %c0_440] : memref<2x16x290xbf16, #tpu.memory_space<vmem>>, vector<1x3x256xbf16>
    %541 = vector.shape_cast %540 : vector<1x3x256xbf16> to vector<3x256xbf16>
    %cst_441 = arith.constant 0.000000e+00 : bf16
    %542 = vector.broadcast %cst_441 : bf16 to vector<3x256xbf16>
    %543 = vector.shape_cast %20 : vector<1x256xi1> to vector<1x256xi1>
    %544 = vector.broadcast %543 : vector<1x256xi1> to vector<3x256xi1>
    %545 = arith.select %544, %541, %542 : vector<3x256xi1>, vector<3x256xbf16>
    %c1_442 = arith.constant 1 : index
    %c0_443 = arith.constant 0 : index
    %c0_444 = arith.constant 0 : index
    %546 = vector.load %arg14[%c1_442, %c0_443, %c0_444] : memref<2x144x256xbf16, #tpu.memory_space<vmem>>, vector<1x3x256xbf16>
    %547 = vector.shape_cast %546 : vector<1x3x256xbf16> to vector<3x256xbf16>
    %548 = vector.shape_cast %545 : vector<3x256xbf16> to vector<1x3x256xbf16>
    tpu.vector_store %arg14[%c1_442, %c0_443, %c0_444], %548 {strides = array<i32>} : memref<2x144x256xbf16, #tpu.memory_space<vmem>>, vector<1x3x256xbf16>,
    %c1_445 = arith.constant 1 : index
    %c0_446 = arith.constant 0 : index
    %c1_447 = arith.constant 1 : index
    %549 = vector.load %arg13[%c1_445, %c0_446, %c1_447] : memref<2x16x290xbf16, #tpu.memory_space<vmem>>, vector<1x3x256xbf16>
    %550 = vector.shape_cast %549 : vector<1x3x256xbf16> to vector<3x256xbf16>
    %c1_448 = arith.constant 1 : index
    %c3_449 = arith.constant 3 : index
    %c0_450 = arith.constant 0 : index
    %551 = vector.load %arg14[%c1_448, %c3_449, %c0_450] : memref<2x144x256xbf16, #tpu.memory_space<vmem>>, vector<1x3x256xbf16>
    %552 = vector.shape_cast %551 : vector<1x3x256xbf16> to vector<3x256xbf16>
    %553 = vector.shape_cast %550 : vector<3x256xbf16> to vector<1x3x256xbf16>
    tpu.vector_store %arg14[%c1_448, %c3_449, %c0_450], %553 {strides = array<i32>} : memref<2x144x256xbf16, #tpu.memory_space<vmem>>, vector<1x3x256xbf16>,
    %c1_451 = arith.constant 1 : index
    %c0_452 = arith.constant 0 : index
    %c2_453 = arith.constant 2 : index
    %554 = vector.load %arg13[%c1_451, %c0_452, %c2_453] : memref<2x16x290xbf16, #tpu.memory_space<vmem>>, vector<1x3x256xbf16>
    %555 = vector.shape_cast %554 : vector<1x3x256xbf16> to vector<3x256xbf16>
    %cst_454 = arith.constant 0.000000e+00 : bf16
    %556 = vector.broadcast %cst_454 : bf16 to vector<3x256xbf16>
    %557 = vector.shape_cast %22 : vector<1x256xi1> to vector<1x256xi1>
    %558 = vector.broadcast %557 : vector<1x256xi1> to vector<3x256xi1>
    %559 = arith.select %558, %555, %556 : vector<3x256xi1>, vector<3x256xbf16>
    %c1_455 = arith.constant 1 : index
    %c6_456 = arith.constant 6 : index
    %c0_457 = arith.constant 0 : index
    %560 = vector.load %arg14[%c1_455, %c6_456, %c0_457] : memref<2x144x256xbf16, #tpu.memory_space<vmem>>, vector<1x3x256xbf16>
    %561 = vector.shape_cast %560 : vector<1x3x256xbf16> to vector<3x256xbf16>
    %562 = vector.shape_cast %559 : vector<3x256xbf16> to vector<1x3x256xbf16>
    tpu.vector_store %arg14[%c1_455, %c6_456, %c0_457], %562 {strides = array<i32>} : memref<2x144x256xbf16, #tpu.memory_space<vmem>>, vector<1x3x256xbf16>,
    %c1_458 = arith.constant 1 : index
    %c0_459 = arith.constant 0 : index
    %c16_460 = arith.constant 16 : index
    %563 = vector.load %arg13[%c1_458, %c0_459, %c16_460] : memref<2x16x290xbf16, #tpu.memory_space<vmem>>, vector<1x3x256xbf16>
    %564 = vector.shape_cast %563 : vector<1x3x256xbf16> to vector<3x256xbf16>
    %cst_461 = arith.constant 0.000000e+00 : bf16
    %565 = vector.broadcast %cst_461 : bf16 to vector<3x256xbf16>
    %566 = vector.shape_cast %20 : vector<1x256xi1> to vector<1x256xi1>
    %567 = vector.broadcast %566 : vector<1x256xi1> to vector<3x256xi1>
    %568 = arith.select %567, %564, %565 : vector<3x256xi1>, vector<3x256xbf16>
    %c1_462 = arith.constant 1 : index
    %c9_463 = arith.constant 9 : index
    %c0_464 = arith.constant 0 : index
    %569 = vector.load %arg14[%c1_462, %c9_463, %c0_464] : memref<2x144x256xbf16, #tpu.memory_space<vmem>>, vector<1x3x256xbf16>
    %570 = vector.shape_cast %569 : vector<1x3x256xbf16> to vector<3x256xbf16>
    %571 = vector.shape_cast %568 : vector<3x256xbf16> to vector<1x3x256xbf16>
    tpu.vector_store %arg14[%c1_462, %c9_463, %c0_464], %571 {strides = array<i32>} : memref<2x144x256xbf16, #tpu.memory_space<vmem>>, vector<1x3x256xbf16>,
    %c1_465 = arith.constant 1 : index
    %c0_466 = arith.constant 0 : index
    %c17_467 = arith.constant 17 : index
    %572 = vector.load %arg13[%c1_465, %c0_466, %c17_467] : memref<2x16x290xbf16, #tpu.memory_space<vmem>>, vector<1x3x256xbf16>
    %573 = vector.shape_cast %572 : vector<1x3x256xbf16> to vector<3x256xbf16>
    %c1_468 = arith.constant 1 : index
    %c12_469 = arith.constant 12 : index
    %c0_470 = arith.constant 0 : index
    %574 = vector.load %arg14[%c1_468, %c12_469, %c0_470] : memref<2x144x256xbf16, #tpu.memory_space<vmem>>, vector<1x3x256xbf16>
    %575 = vector.shape_cast %574 : vector<1x3x256xbf16> to vector<3x256xbf16>
    %576 = vector.shape_cast %573 : vector<3x256xbf16> to vector<1x3x256xbf16>
    tpu.vector_store %arg14[%c1_468, %c12_469, %c0_470], %576 {strides = array<i32>} : memref<2x144x256xbf16, #tpu.memory_space<vmem>>, vector<1x3x256xbf16>,
    %c1_471 = arith.constant 1 : index
    %c0_472 = arith.constant 0 : index
    %c18_473 = arith.constant 18 : index
    %577 = vector.load %arg13[%c1_471, %c0_472, %c18_473] : memref<2x16x290xbf16, #tpu.memory_space<vmem>>, vector<1x3x256xbf16>
    %578 = vector.shape_cast %577 : vector<1x3x256xbf16> to vector<3x256xbf16>
    %cst_474 = arith.constant 0.000000e+00 : bf16
    %579 = vector.broadcast %cst_474 : bf16 to vector<3x256xbf16>
    %580 = vector.shape_cast %22 : vector<1x256xi1> to vector<1x256xi1>
    %581 = vector.broadcast %580 : vector<1x256xi1> to vector<3x256xi1>
    %582 = arith.select %581, %578, %579 : vector<3x256xi1>, vector<3x256xbf16>
    %c1_475 = arith.constant 1 : index
    %c15_476 = arith.constant 15 : index
    %c0_477 = arith.constant 0 : index
    %583 = vector.load %arg14[%c1_475, %c15_476, %c0_477] : memref<2x144x256xbf16, #tpu.memory_space<vmem>>, vector<1x3x256xbf16>
    %584 = vector.shape_cast %583 : vector<1x3x256xbf16> to vector<3x256xbf16>
    %585 = vector.shape_cast %582 : vector<3x256xbf16> to vector<1x3x256xbf16>
    tpu.vector_store %arg14[%c1_475, %c15_476, %c0_477], %585 {strides = array<i32>} : memref<2x144x256xbf16, #tpu.memory_space<vmem>>, vector<1x3x256xbf16>,
    %c1_478 = arith.constant 1 : index
    %c0_479 = arith.constant 0 : index
    %c32_480 = arith.constant 32 : index
    %586 = vector.load %arg13[%c1_478, %c0_479, %c32_480] : memref<2x16x290xbf16, #tpu.memory_space<vmem>>, vector<1x3x256xbf16>
    %587 = vector.shape_cast %586 : vector<1x3x256xbf16> to vector<3x256xbf16>
    %cst_481 = arith.constant 0.000000e+00 : bf16
    %588 = vector.broadcast %cst_481 : bf16 to vector<3x256xbf16>
    %589 = vector.shape_cast %20 : vector<1x256xi1> to vector<1x256xi1>
    %590 = vector.broadcast %589 : vector<1x256xi1> to vector<3x256xi1>
    %591 = arith.select %590, %587, %588 : vector<3x256xi1>, vector<3x256xbf16>
    %c1_482 = arith.constant 1 : index
    %c18_483 = arith.constant 18 : index
    %c0_484 = arith.constant 0 : index
    %592 = vector.load %arg14[%c1_482, %c18_483, %c0_484] : memref<2x144x256xbf16, #tpu.memory_space<vmem>>, vector<1x3x256xbf16>
    %593 = vector.shape_cast %592 : vector<1x3x256xbf16> to vector<3x256xbf16>
    %594 = vector.shape_cast %591 : vector<3x256xbf16> to vector<1x3x256xbf16>
    tpu.vector_store %arg14[%c1_482, %c18_483, %c0_484], %594 {strides = array<i32>} : memref<2x144x256xbf16, #tpu.memory_space<vmem>>, vector<1x3x256xbf16>,
    %c1_485 = arith.constant 1 : index
    %c0_486 = arith.constant 0 : index
    %c33_487 = arith.constant 33 : index
    %595 = vector.load %arg13[%c1_485, %c0_486, %c33_487] : memref<2x16x290xbf16, #tpu.memory_space<vmem>>, vector<1x3x256xbf16>
    %596 = vector.shape_cast %595 : vector<1x3x256xbf16> to vector<3x256xbf16>
    %c1_488 = arith.constant 1 : index
    %c21_489 = arith.constant 21 : index
    %c0_490 = arith.constant 0 : index
    %597 = vector.load %arg14[%c1_488, %c21_489, %c0_490] : memref<2x144x256xbf16, #tpu.memory_space<vmem>>, vector<1x3x256xbf16>
    %598 = vector.shape_cast %597 : vector<1x3x256xbf16> to vector<3x256xbf16>
    %599 = vector.shape_cast %596 : vector<3x256xbf16> to vector<1x3x256xbf16>
    tpu.vector_store %arg14[%c1_488, %c21_489, %c0_490], %599 {strides = array<i32>} : memref<2x144x256xbf16, #tpu.memory_space<vmem>>, vector<1x3x256xbf16>,
    %c1_491 = arith.constant 1 : index
    %c0_492 = arith.constant 0 : index
    %c34_493 = arith.constant 34 : index
    %600 = vector.load %arg13[%c1_491, %c0_492, %c34_493] : memref<2x16x290xbf16, #tpu.memory_space<vmem>>, vector<1x3x256xbf16>
    %601 = vector.shape_cast %600 : vector<1x3x256xbf16> to vector<3x256xbf16>
    %cst_494 = arith.constant 0.000000e+00 : bf16
    %602 = vector.broadcast %cst_494 : bf16 to vector<3x256xbf16>
    %603 = vector.shape_cast %22 : vector<1x256xi1> to vector<1x256xi1>
    %604 = vector.broadcast %603 : vector<1x256xi1> to vector<3x256xi1>
    %605 = arith.select %604, %601, %602 : vector<3x256xi1>, vector<3x256xbf16>
    %c1_495 = arith.constant 1 : index
    %c24_496 = arith.constant 24 : index
    %c0_497 = arith.constant 0 : index
    %606 = vector.load %arg14[%c1_495, %c24_496, %c0_497] : memref<2x144x256xbf16, #tpu.memory_space<vmem>>, vector<1x3x256xbf16>
    %607 = vector.shape_cast %606 : vector<1x3x256xbf16> to vector<3x256xbf16>
    %608 = vector.shape_cast %605 : vector<3x256xbf16> to vector<1x3x256xbf16>
    tpu.vector_store %arg14[%c1_495, %c24_496, %c0_497], %608 {strides = array<i32>} : memref<2x144x256xbf16, #tpu.memory_space<vmem>>, vector<1x3x256xbf16>,
    %c0_498 = arith.constant 0 : index
    %c0_499 = arith.constant 0 : index
    %609 = vector.load %arg6[%c0_498, %c0_499] : memref<16x27xbf16, #tpu.memory_space<vmem>>, vector<16x27xbf16>
    %c1_500 = arith.constant 1 : index
    %c0_501 = arith.constant 0 : index
    %c0_502 = arith.constant 0 : index
    %610 = vector.load %arg14[%c1_500, %c0_501, %c0_502] : memref<2x144x256xbf16, #tpu.memory_space<vmem>>, vector<1x27x256xbf16>
    %611 = vector.shape_cast %610 : vector<1x27x256xbf16> to vector<27x256xbf16>
    %cst_503 = arith.constant dense<0.000000e+00> : vector<16x256xf32>
    %612 = tpu.matmul %609, %611, %cst_503 {dimension_numbers = #tpu.dot_dimension_numbers<[1], [0], [0], [1], [0, 0, 1, 1], [], []>} : vector<16x27xbf16>, vector<27x256xbf16>, vector<16x256xf32> -> vector<16x256xf32>
    %c0_504 = arith.constant 0 : index
    %c0_505 = arith.constant 0 : index
    %613 = vector.load %arg7[%c0_504, %c0_505] : memref<16x1xf32, #tpu.memory_space<vmem>>, vector<16x1xf32>
    %614 = vector.broadcast %613 : vector<16x1xf32> to vector<16x256xf32>
    %615 = arith.addf %612, %614 : vector<16x256xf32>
    %cst_506 = arith.constant 0.000000e+00 : f32
    %616 = vector.broadcast %cst_506 : f32 to vector<16x256xf32>
    %617 = arith.maximumf %615, %616 : vector<16x256xf32>
    %618 = arith.truncf %617 : vector<16x256xf32> to vector<16x256xbf16>
    %c1_507 = arith.constant 1 : index
    %c0_508 = arith.constant 0 : index
    %c17_509 = arith.constant 17 : index
    %619 = vector.load %arg13[%c1_507, %c0_508, %c17_509] : memref<2x16x290xbf16, #tpu.memory_space<vmem>>, vector<1x16x256xbf16>
    %620 = vector.shape_cast %619 : vector<1x16x256xbf16> to vector<16x256xbf16>
    %621 = vector.shape_cast %618 : vector<16x256xbf16> to vector<1x16x256xbf16>
    tpu.vector_store %arg13[%c1_507, %c0_508, %c17_509], %621 {strides = array<i32>} : memref<2x16x290xbf16, #tpu.memory_space<vmem>>, vector<1x16x256xbf16>,
    %c1_510 = arith.constant 1 : index
    %c0_511 = arith.constant 0 : index
    %c0_512 = arith.constant 0 : index
    %622 = vector.load %arg13[%c1_510, %c0_511, %c0_512] : memref<2x16x290xbf16, #tpu.memory_space<vmem>>, vector<1x16x256xbf16>
    %623 = vector.shape_cast %622 : vector<1x16x256xbf16> to vector<16x256xbf16>
    %cst_513 = arith.constant 0.000000e+00 : bf16
    %624 = vector.broadcast %cst_513 : bf16 to vector<16x256xbf16>
    %625 = vector.shape_cast %20 : vector<1x256xi1> to vector<1x256xi1>
    %626 = vector.broadcast %625 : vector<1x256xi1> to vector<16x256xi1>
    %627 = arith.select %626, %623, %624 : vector<16x256xi1>, vector<16x256xbf16>
    %c1_514 = arith.constant 1 : index
    %c0_515 = arith.constant 0 : index
    %c0_516 = arith.constant 0 : index
    %628 = vector.load %arg14[%c1_514, %c0_515, %c0_516] : memref<2x144x256xbf16, #tpu.memory_space<vmem>>, vector<1x16x256xbf16>
    %629 = vector.shape_cast %628 : vector<1x16x256xbf16> to vector<16x256xbf16>
    %630 = vector.shape_cast %627 : vector<16x256xbf16> to vector<1x16x256xbf16>
    tpu.vector_store %arg14[%c1_514, %c0_515, %c0_516], %630 {strides = array<i32>} : memref<2x144x256xbf16, #tpu.memory_space<vmem>>, vector<1x16x256xbf16>,
    %c1_517 = arith.constant 1 : index
    %c0_518 = arith.constant 0 : index
    %c1_519 = arith.constant 1 : index
    %631 = vector.load %arg13[%c1_517, %c0_518, %c1_519] : memref<2x16x290xbf16, #tpu.memory_space<vmem>>, vector<1x16x256xbf16>
    %632 = vector.shape_cast %631 : vector<1x16x256xbf16> to vector<16x256xbf16>
    %c1_520 = arith.constant 1 : index
    %c16_521 = arith.constant 16 : index
    %c0_522 = arith.constant 0 : index
    %633 = vector.load %arg14[%c1_520, %c16_521, %c0_522] : memref<2x144x256xbf16, #tpu.memory_space<vmem>>, vector<1x16x256xbf16>
    %634 = vector.shape_cast %633 : vector<1x16x256xbf16> to vector<16x256xbf16>
    %635 = vector.shape_cast %632 : vector<16x256xbf16> to vector<1x16x256xbf16>
    tpu.vector_store %arg14[%c1_520, %c16_521, %c0_522], %635 {strides = array<i32>} : memref<2x144x256xbf16, #tpu.memory_space<vmem>>, vector<1x16x256xbf16>,
    %c1_523 = arith.constant 1 : index
    %c0_524 = arith.constant 0 : index
    %c2_525 = arith.constant 2 : index
    %636 = vector.load %arg13[%c1_523, %c0_524, %c2_525] : memref<2x16x290xbf16, #tpu.memory_space<vmem>>, vector<1x16x256xbf16>
    %637 = vector.shape_cast %636 : vector<1x16x256xbf16> to vector<16x256xbf16>
    %cst_526 = arith.constant 0.000000e+00 : bf16
    %638 = vector.broadcast %cst_526 : bf16 to vector<16x256xbf16>
    %639 = vector.shape_cast %22 : vector<1x256xi1> to vector<1x256xi1>
    %640 = vector.broadcast %639 : vector<1x256xi1> to vector<16x256xi1>
    %641 = arith.select %640, %637, %638 : vector<16x256xi1>, vector<16x256xbf16>
    %c1_527 = arith.constant 1 : index
    %c32_528 = arith.constant 32 : index
    %c0_529 = arith.constant 0 : index
    %642 = vector.load %arg14[%c1_527, %c32_528, %c0_529] : memref<2x144x256xbf16, #tpu.memory_space<vmem>>, vector<1x16x256xbf16>
    %643 = vector.shape_cast %642 : vector<1x16x256xbf16> to vector<16x256xbf16>
    %644 = vector.shape_cast %641 : vector<16x256xbf16> to vector<1x16x256xbf16>
    tpu.vector_store %arg14[%c1_527, %c32_528, %c0_529], %644 {strides = array<i32>} : memref<2x144x256xbf16, #tpu.memory_space<vmem>>, vector<1x16x256xbf16>,
    %c1_530 = arith.constant 1 : index
    %c0_531 = arith.constant 0 : index
    %c16_532 = arith.constant 16 : index
    %645 = vector.load %arg13[%c1_530, %c0_531, %c16_532] : memref<2x16x290xbf16, #tpu.memory_space<vmem>>, vector<1x16x256xbf16>
    %646 = vector.shape_cast %645 : vector<1x16x256xbf16> to vector<16x256xbf16>
    %cst_533 = arith.constant 0.000000e+00 : bf16
    %647 = vector.broadcast %cst_533 : bf16 to vector<16x256xbf16>
    %648 = vector.shape_cast %20 : vector<1x256xi1> to vector<1x256xi1>
    %649 = vector.broadcast %648 : vector<1x256xi1> to vector<16x256xi1>
    %650 = arith.select %649, %646, %647 : vector<16x256xi1>, vector<16x256xbf16>
    %c1_534 = arith.constant 1 : index
    %c48_535 = arith.constant 48 : index
    %c0_536 = arith.constant 0 : index
    %651 = vector.load %arg14[%c1_534, %c48_535, %c0_536] : memref<2x144x256xbf16, #tpu.memory_space<vmem>>, vector<1x16x256xbf16>
    %652 = vector.shape_cast %651 : vector<1x16x256xbf16> to vector<16x256xbf16>
    %653 = vector.shape_cast %650 : vector<16x256xbf16> to vector<1x16x256xbf16>
    tpu.vector_store %arg14[%c1_534, %c48_535, %c0_536], %653 {strides = array<i32>} : memref<2x144x256xbf16, #tpu.memory_space<vmem>>, vector<1x16x256xbf16>,
    %c1_537 = arith.constant 1 : index
    %c0_538 = arith.constant 0 : index
    %c17_539 = arith.constant 17 : index
    %654 = vector.load %arg13[%c1_537, %c0_538, %c17_539] : memref<2x16x290xbf16, #tpu.memory_space<vmem>>, vector<1x16x256xbf16>
    %655 = vector.shape_cast %654 : vector<1x16x256xbf16> to vector<16x256xbf16>
    %c1_540 = arith.constant 1 : index
    %c64_541 = arith.constant 64 : index
    %c0_542 = arith.constant 0 : index
    %656 = vector.load %arg14[%c1_540, %c64_541, %c0_542] : memref<2x144x256xbf16, #tpu.memory_space<vmem>>, vector<1x16x256xbf16>
    %657 = vector.shape_cast %656 : vector<1x16x256xbf16> to vector<16x256xbf16>
    %658 = vector.shape_cast %655 : vector<16x256xbf16> to vector<1x16x256xbf16>
    tpu.vector_store %arg14[%c1_540, %c64_541, %c0_542], %658 {strides = array<i32>} : memref<2x144x256xbf16, #tpu.memory_space<vmem>>, vector<1x16x256xbf16>,
    %c1_543 = arith.constant 1 : index
    %c0_544 = arith.constant 0 : index
    %c18_545 = arith.constant 18 : index
    %659 = vector.load %arg13[%c1_543, %c0_544, %c18_545] : memref<2x16x290xbf16, #tpu.memory_space<vmem>>, vector<1x16x256xbf16>
    %660 = vector.shape_cast %659 : vector<1x16x256xbf16> to vector<16x256xbf16>
    %cst_546 = arith.constant 0.000000e+00 : bf16
    %661 = vector.broadcast %cst_546 : bf16 to vector<16x256xbf16>
    %662 = vector.shape_cast %22 : vector<1x256xi1> to vector<1x256xi1>
    %663 = vector.broadcast %662 : vector<1x256xi1> to vector<16x256xi1>
    %664 = arith.select %663, %660, %661 : vector<16x256xi1>, vector<16x256xbf16>
    %c1_547 = arith.constant 1 : index
    %c80_548 = arith.constant 80 : index
    %c0_549 = arith.constant 0 : index
    %665 = vector.load %arg14[%c1_547, %c80_548, %c0_549] : memref<2x144x256xbf16, #tpu.memory_space<vmem>>, vector<1x16x256xbf16>
    %666 = vector.shape_cast %665 : vector<1x16x256xbf16> to vector<16x256xbf16>
    %667 = vector.shape_cast %664 : vector<16x256xbf16> to vector<1x16x256xbf16>
    tpu.vector_store %arg14[%c1_547, %c80_548, %c0_549], %667 {strides = array<i32>} : memref<2x144x256xbf16, #tpu.memory_space<vmem>>, vector<1x16x256xbf16>,
    %c1_550 = arith.constant 1 : index
    %c0_551 = arith.constant 0 : index
    %c32_552 = arith.constant 32 : index
    %668 = vector.load %arg13[%c1_550, %c0_551, %c32_552] : memref<2x16x290xbf16, #tpu.memory_space<vmem>>, vector<1x16x256xbf16>
    %669 = vector.shape_cast %668 : vector<1x16x256xbf16> to vector<16x256xbf16>
    %cst_553 = arith.constant 0.000000e+00 : bf16
    %670 = vector.broadcast %cst_553 : bf16 to vector<16x256xbf16>
    %671 = vector.shape_cast %20 : vector<1x256xi1> to vector<1x256xi1>
    %672 = vector.broadcast %671 : vector<1x256xi1> to vector<16x256xi1>
    %673 = arith.select %672, %669, %670 : vector<16x256xi1>, vector<16x256xbf16>
    %c1_554 = arith.constant 1 : index
    %c96_555 = arith.constant 96 : index
    %c0_556 = arith.constant 0 : index
    %674 = vector.load %arg14[%c1_554, %c96_555, %c0_556] : memref<2x144x256xbf16, #tpu.memory_space<vmem>>, vector<1x16x256xbf16>
    %675 = vector.shape_cast %674 : vector<1x16x256xbf16> to vector<16x256xbf16>
    %676 = vector.shape_cast %673 : vector<16x256xbf16> to vector<1x16x256xbf16>
    tpu.vector_store %arg14[%c1_554, %c96_555, %c0_556], %676 {strides = array<i32>} : memref<2x144x256xbf16, #tpu.memory_space<vmem>>, vector<1x16x256xbf16>,
    %c1_557 = arith.constant 1 : index
    %c0_558 = arith.constant 0 : index
    %c33_559 = arith.constant 33 : index
    %677 = vector.load %arg13[%c1_557, %c0_558, %c33_559] : memref<2x16x290xbf16, #tpu.memory_space<vmem>>, vector<1x16x256xbf16>
    %678 = vector.shape_cast %677 : vector<1x16x256xbf16> to vector<16x256xbf16>
    %c1_560 = arith.constant 1 : index
    %c112_561 = arith.constant 112 : index
    %c0_562 = arith.constant 0 : index
    %679 = vector.load %arg14[%c1_560, %c112_561, %c0_562] : memref<2x144x256xbf16, #tpu.memory_space<vmem>>, vector<1x16x256xbf16>
    %680 = vector.shape_cast %679 : vector<1x16x256xbf16> to vector<16x256xbf16>
    %681 = vector.shape_cast %678 : vector<16x256xbf16> to vector<1x16x256xbf16>
    tpu.vector_store %arg14[%c1_560, %c112_561, %c0_562], %681 {strides = array<i32>} : memref<2x144x256xbf16, #tpu.memory_space<vmem>>, vector<1x16x256xbf16>,
    %c1_563 = arith.constant 1 : index
    %c0_564 = arith.constant 0 : index
    %c34_565 = arith.constant 34 : index
    %682 = vector.load %arg13[%c1_563, %c0_564, %c34_565] : memref<2x16x290xbf16, #tpu.memory_space<vmem>>, vector<1x16x256xbf16>
    %683 = vector.shape_cast %682 : vector<1x16x256xbf16> to vector<16x256xbf16>
    %cst_566 = arith.constant 0.000000e+00 : bf16
    %684 = vector.broadcast %cst_566 : bf16 to vector<16x256xbf16>
    %685 = vector.shape_cast %22 : vector<1x256xi1> to vector<1x256xi1>
    %686 = vector.broadcast %685 : vector<1x256xi1> to vector<16x256xi1>
    %687 = arith.select %686, %683, %684 : vector<16x256xi1>, vector<16x256xbf16>
    %c1_567 = arith.constant 1 : index
    %c128_568 = arith.constant 128 : index
    %c0_569 = arith.constant 0 : index
    %688 = vector.load %arg14[%c1_567, %c128_568, %c0_569] : memref<2x144x256xbf16, #tpu.memory_space<vmem>>, vector<1x16x256xbf16>
    %689 = vector.shape_cast %688 : vector<1x16x256xbf16> to vector<16x256xbf16>
    %690 = vector.shape_cast %687 : vector<16x256xbf16> to vector<1x16x256xbf16>
    tpu.vector_store %arg14[%c1_567, %c128_568, %c0_569], %690 {strides = array<i32>} : memref<2x144x256xbf16, #tpu.memory_space<vmem>>, vector<1x16x256xbf16>,
    %c0_570 = arith.constant 0 : index
    %c0_571 = arith.constant 0 : index
    %691 = vector.load %arg8[%c0_570, %c0_571] : memref<32x144xbf16, #tpu.memory_space<vmem>>, vector<32x144xbf16>
    %c1_572 = arith.constant 1 : index
    %c0_573 = arith.constant 0 : index
    %c0_574 = arith.constant 0 : index
    %692 = vector.load %arg14[%c1_572, %c0_573, %c0_574] : memref<2x144x256xbf16, #tpu.memory_space<vmem>>, vector<1x144x256xbf16>
    %693 = vector.shape_cast %692 : vector<1x144x256xbf16> to vector<144x256xbf16>
    %cst_575 = arith.constant dense<0.000000e+00> : vector<32x256xf32>
    %694 = tpu.matmul %691, %693, %cst_575 {dimension_numbers = #tpu.dot_dimension_numbers<[1], [0], [0], [1], [0, 0, 1, 1], [], []>} : vector<32x144xbf16>, vector<144x256xbf16>, vector<32x256xf32> -> vector<32x256xf32>
    %c0_576 = arith.constant 0 : index
    %c0_577 = arith.constant 0 : index
    %695 = vector.load %arg9[%c0_576, %c0_577] : memref<32x1xf32, #tpu.memory_space<vmem>>, vector<32x1xf32>
    %696 = vector.broadcast %695 : vector<32x1xf32> to vector<32x256xf32>
    %697 = arith.addf %694, %696 : vector<32x256xf32>
    %cst_578 = arith.constant 0.000000e+00 : f32
    %698 = vector.broadcast %cst_578 : f32 to vector<32x256xf32>
    %699 = arith.maximumf %697, %698 : vector<32x256xf32>
    %cst_579 = arith.constant dense<0.000000e+00> : vector<32xf32>
    %700 = vector.multi_reduction <add>, %699, %cst_579 [1] : vector<32x256xf32> to vector<32xf32>
    %701 = vector.shape_cast %700 : vector<32xf32> to vector<32x1xf32>
    %cst_580 = arith.constant 3.906250e-03 : f32
    %702 = vector.broadcast %cst_580 : f32 to vector<32x1xf32>
    %703 = arith.mulf %701, %702 : vector<32x1xf32>
    %704 = tpu.concatenate %533, %703 in 1 : vector<32x1xf32>, vector<32x1xf32> -> vector<32x2xf32>
    %705 = tpu.concatenate %363, %704 in 0 : vector<32x2xf32>, vector<32x2xf32> -> vector<64x2xf32>
    %c0_581 = arith.constant 0 : index
    %c0_582 = arith.constant 0 : index
    %706 = vector.load %arg10[%c0_581, %c0_582] : memref<5x64xf32, #tpu.memory_space<vmem>>, vector<5x64xf32>
    %cst_583 = arith.constant dense<0.000000e+00> : vector<5x2xf32>
    %707 = tpu.matmul %706, %705, %cst_583 {dimension_numbers = #tpu.dot_dimension_numbers<[1], [0], [0], [1], [0, 0, 1, 1], [], []>} : vector<5x64xf32>, vector<64x2xf32>, vector<5x2xf32> -> vector<5x2xf32>
    %c0_584 = arith.constant 0 : index
    %c0_585 = arith.constant 0 : index
    %708 = vector.load %arg11[%c0_584, %c0_585] : memref<5x1xf32, #tpu.memory_space<vmem>>, vector<5x1xf32>
    %709 = vector.broadcast %708 : vector<5x1xf32> to vector<5x2xf32>
    %710 = arith.addf %707, %709 : vector<5x2xf32>
    %c0_586 = arith.constant 0 : index
    %c0_587 = arith.constant 0 : index
    %711 = vector.load %arg12[%c0_586, %c0_587] : memref<5x2xf32, #tpu.memory_space<vmem>>, vector<5x2xf32>
    tpu.vector_store %arg12[%c0_586, %c0_587], %710 {strides = array<i32>} : memref<5x2xf32, #tpu.memory_space<vmem>>, vector<5x2xf32>,
    return
  }
}

</mosaic_0001>

<llo_original>
// kernel: dsdbnet_forward.1
$region0: #{dsdbnet_forward.1}
  #allocation0 [shape = 'u32[]', space=smem, size = 0x4, offset = 0x4, fixed_abs, tag = 'smem constant byte address 0x4 - core index']
  #allocation1 [shape = 'u32[144,128]{1,0:T(1,128)}', space=vmem, size = 0x12000, scoped, tag = 'internal scratch']
  #allocation2 [shape = 'bf16[2,16,290]{2,1,0:T(16,128)(2,1)}', space=vmem, size = 0x6000, scoped, tag = 'scratch operand']
  #allocation3 [shape = 'bf16[2,144,256]{2,1,0:T(16,128)(2,1)}', space=vmem, size = 0x24000, scoped, tag = 'scratch operand']
  %s0 = inlined_call_operand.vmem [shape: f32[2,3,256], index: 0, kind: input, shape index: {}]
  %s1 = inlined_call_operand.vmem [shape: f32[2,3,256], index: 1, kind: input, shape index: {}]
  %s2 = inlined_call_operand.vmem [shape: bf16[16,27], index: 2, kind: input, shape index: {}]
  %s3 = inlined_call_operand.vmem [shape: f32[16,1], index: 3, kind: input, shape index: {}]
  %s4 = inlined_call_operand.vmem [shape: bf16[32,144], index: 4, kind: input, shape index: {}]
  %s5 = inlined_call_operand.vmem [shape: f32[32,1], index: 5, kind: input, shape index: {}]
  %s6 = inlined_call_operand.vmem [shape: bf16[16,27], index: 6, kind: input, shape index: {}]
  %s7 = inlined_call_operand.vmem [shape: f32[16,1], index: 7, kind: input, shape index: {}]
  %s8 = inlined_call_operand.vmem [shape: bf16[32,144], index: 8, kind: input, shape index: {}]
  %s9 = inlined_call_operand.vmem [shape: f32[32,1], index: 9, kind: input, shape index: {}]
  %s10 = inlined_call_operand.vmem [shape: f32[5,64], index: 10, kind: input, shape index: {}]
  %s11 = inlined_call_operand.vmem [shape: f32[5,1], index: 11, kind: input, shape index: {}]
  %s12 = inlined_call_operand.vmem [shape: f32[5,2], index: 12, kind: output, shape index: {}]
  %s13 = sld [smem:[#allocation0]]
  $region58: #{dsdbnet_forward.1} parent=0
    _
  %s15 = ssub.s32 1, %s13
  %s16 = scalar_select 0, %s15, %s13
  // Predicated region
  $region2: #{dsdbnet_forward.1} parent=0 // pred_check
    _
  $region3: #{dsdbnet_forward.1} parent=0 // pred_check_branch
    %18 = sbr.rel (0) target = $region5
  $region4: #{dsdbnet_forward.1} parent=0 // pred_region
    _
  $region5: #{dsdbnet_forward.1} parent=0 // pred_fallthru
    _
  // Predicated region
  $region6: #{dsdbnet_forward.1} parent=0 // pred_check
    _
  $region7: #{dsdbnet_forward.1} parent=0 // pred_check_branch
    %20 = sbr.rel (0) target = $region9
  $region8: #{dsdbnet_forward.1} parent=0 // pred_region
    _
  $region9: #{dsdbnet_forward.1} parent=0 // pred_fallthru
    _
  // Predicated region
  $region10: #{dsdbnet_forward.1} parent=0 // pred_check
    _
  $region11: #{dsdbnet_forward.1} parent=0 // pred_check_branch
    %22 = sbr.rel (0) target = $region13
  $region12: #{dsdbnet_forward.1} parent=0 // pred_region
    _
  $region13: #{dsdbnet_forward.1} parent=0 // pred_fallthru
    _
  // Predicated region
  $region14: #{dsdbnet_forward.1} parent=0 // pred_check
    _
  $region15: #{dsdbnet_forward.1} parent=0 // pred_check_branch
    %24 = sbr.rel (0) target = $region17
  $region16: #{dsdbnet_forward.1} parent=0 // pred_region
    _
  $region17: #{dsdbnet_forward.1} parent=0 // pred_fallthru
    _
  // Predicated region
  $region18: #{dsdbnet_forward.1} parent=0 // pred_check
    _
  $region19: #{dsdbnet_forward.1} parent=0 // pred_check_branch
    %26 = sbr.rel (0) target = $region21
  $region20: #{dsdbnet_forward.1} parent=0 // pred_region
    _
  $region21: #{dsdbnet_forward.1} parent=0 // pred_fallthru
    _
  // Predicated region
  $region22: #{dsdbnet_forward.1} parent=0 // pred_check
    _
  $region23: #{dsdbnet_forward.1} parent=0 // pred_check_branch
    %28 = sbr.rel (0) target = $region25
  $region24: #{dsdbnet_forward.1} parent=0 // pred_region
    _
  $region25: #{dsdbnet_forward.1} parent=0 // pred_fallthru
    _
  // Predicated region
  $region26: #{dsdbnet_forward.1} parent=0 // pred_check
    _
  $region27: #{dsdbnet_forward.1} parent=0 // pred_check_branch
    %30 = sbr.rel (0) target = $region29
  $region28: #{dsdbnet_forward.1} parent=0 // pred_region
    _
  $region29: #{dsdbnet_forward.1} parent=0 // pred_fallthru
    _
  // Predicated region
  $region30: #{dsdbnet_forward.1} parent=0 // pred_check
    _
  $region31: #{dsdbnet_forward.1} parent=0 // pred_check_branch
    %32 = sbr.rel (0) target = $region33
  $region32: #{dsdbnet_forward.1} parent=0 // pred_region
    _
  $region33: #{dsdbnet_forward.1} parent=0 // pred_fallthru
    _
  // Predicated region
  $region34: #{dsdbnet_forward.1} parent=0 // pred_check
    _
  $region35: #{dsdbnet_forward.1} parent=0 // pred_check_branch
    %34 = sbr.rel (0) target = $region37
  $region36: #{dsdbnet_forward.1} parent=0 // pred_region
    _
  $region37: #{dsdbnet_forward.1} parent=0 // pred_fallthru
    _
  // Predicated region
  $region38: #{dsdbnet_forward.1} parent=0 // pred_check
    _
  $region39: #{dsdbnet_forward.1} parent=0 // pred_check_branch
    %36 = sbr.rel (0) target = $region41
  $region40: #{dsdbnet_forward.1} parent=0 // pred_region
    _
  $region41: #{dsdbnet_forward.1} parent=0 // pred_fallthru
    _
  // Predicated region
  $region42: #{dsdbnet_forward.1} parent=0 // pred_check
    _
  $region43: #{dsdbnet_forward.1} parent=0 // pred_check_branch
    %38 = sbr.rel (0) target = $region45
  $region44: #{dsdbnet_forward.1} parent=0 // pred_region
    _
  $region45: #{dsdbnet_forward.1} parent=0 // pred_fallthru
    _
  // Predicated region
  $region46: #{dsdbnet_forward.1} parent=0 // pred_check
    _
  $region47: #{dsdbnet_forward.1} parent=0 // pred_check_branch
    %40 = sbr.rel (0) target = $region49
  $region48: #{dsdbnet_forward.1} parent=0 // pred_region
    _
  $region49: #{dsdbnet_forward.1} parent=0 // pred_fallthru
    _
  %44 = vst [vmem:[#allocation2] sm:$0xff] 0
  %45 = vst [vmem:[#allocation2 + $0x8] sm:$0xff] 0
  %vm46 = vcmask 277504
  %47 = vst.msk [vmem:[#allocation2 + $0x10] sm:$0xff] %vm46, 0
  %48 = vst [vmem:[#allocation2 + $0x18] sm:$0xff] 0
  %49 = vst [vmem:[#allocation2 + $0x20] sm:$0xff] 0
  %50 = vst.msk [vmem:[#allocation2 + $0x28] sm:$0xff] %vm46, 0
  %v51 = vlaneseq
  %v52 = vand.u32 %v51, 127
  %v53 = vadd.s32 %v52, 128
  %vm54 = vcmp.lt.s32.totalorder %v52, 0
  %v55 = vsub.s32 0, %v52
  %v56 = vsel %vm54, %v55, %v52
  %v57 = vshrl.u32 %v56, 4
  %v58 = vand.u32 %v56, 15
  %v59 = vsub.s32 0, %v58
  %v60 = vsel %vm54, %v59, %v58
  %vm61 = vcmp.lt.s32.totalorder %v53, 0
  %v62 = vsub.s32 0, %v53
  %v63 = vsel %vm61, %v62, %v53
  %v64 = vshrl.u32 %v63, 4
  %v65 = vand.u32 %v63, 15
  %v66 = vsub.s32 0, %v65
  %v67 = vsel %vm61, %v66, %v65
  %vm68 = vcmp.ne.s32.totalorder %v60, 0
  %vm69 = vcmp.ne.s32.totalorder %v67, 0
  %vm70 = vcmp.lt.s32.totalorder %v60, 0
  %vm71 = vcmp.lt.s32.totalorder %v67, 0
  %vm72 = vmand %vm70, %vm68
  %vm73 = vmand %vm71, %vm69
  %v74 = vadd.s32 %v60, 16
  %v75 = vadd.s32 %v67, 16
  %v76 = vsel %vm72, %v74, %v60
  %v77 = vsel %vm73, %v75, %v67
  %vm78 = vcmp.ge.s32.totalorder %v76, 1
  %vm79 = vcmp.ge.s32.totalorder %v77, 1
  %vm80 = vcmp.le.s32.totalorder %v76, 14
  %vm81 = vcmp.le.s32.totalorder %v77, 14
  %v82 = vld [vmem:[%s0] sm:$0x77]
  %v84 = vcombine.high %v82, %v82
  %v86 = vpack.c.bf16 %v82, %v82
  %v87 = vpack.c.bf16 %v84, %v84
  %90 = vrot.lane.b32.xlu0 %v86, 17
  %v91 = vpop.permute.xlu0 %90
  %92 = vrot.lane.b32.xlu0 %v87, 17
  %v93 = vpop.permute.xlu0 %92
  %vm94 = vcmask 138240
  %v95 = vsel %vm94, %v91, %v93
  %vm99 = vcmask 1041544
  %vm100 = vsmask.f32 1280
  %vm101 = vmand %vm99, %vm100
  %v102 = vld [vmem:[#allocation2] sm:$0x3]
  %v103 = vsel %vm101, %v91, %v102
  %104 = vst [vmem:[#allocation2] sm:$0x3] %v103
  %vm105 = vcmask 1041408
  %vm106 = vmand %vm105, %vm100
  %v107 = vld [vmem:[#allocation2 + $0x8] sm:$0x3]
  %v108 = vsel %vm106, %v95, %v107
  %109 = vst [vmem:[#allocation2 + $0x8] sm:$0x3] %v108
  %vm110 = vcmask 132096
  %vm111 = vmand %vm110, %vm100
  %v112 = vld [vmem:[#allocation2 + $0x10] sm:$0x3]
  %v113 = vsel %vm111, %v93, %v112
  %114 = vst [vmem:[#allocation2 + $0x10] sm:$0x3] %v113
  %v115 = vld [vmem:[#allocation2] sm:$0x3]
  %v116 = vld [vmem:[#allocation2 + $0x8] sm:$0x3]
  %v117 = vsel %vm78, 1, 0
  %v118 = vsel %vm79, 1, 0
  %vm119 = vcmp.eq.s32.totalorder %v117, 1
  %vm120 = vcmp.eq.s32.totalorder %v118, 1
  %vm121 = vmpackc.low %vm120, %vm119
  %v122 = vsel %vm121, 65537, 0
  %v123 = vlaneseq
  %v124 = vshrl.u32 %v123, 7
  %v125 = vsub.s32 0, %v124
  %v126 = vrot.slane %v122, %v125
  %v127 = vlaneseq
  %v128 = vshrl.u32 %v127, 7
  %v129 = vsub.s32 4, %v128
  %v130 = vrot.slane %v122, %v129
  %vm131 = vcmp.ne.s16.totalorder %v126, 0
  %vm132 = vcmp.ne.s16.totalorder %v130, 0
  %v133 = vsel %vm131, %v115, 0
  %v134 = vsel %vm132, %v116, 0
  %v135 = vld [vmem:[#allocation3] sm:$0x3]
  %v136 = vsel %vm106, %v133, %v135
  %137 = vst [vmem:[#allocation3] sm:$0x3] %v136
  %v138 = vld [vmem:[#allocation3 + $0x8] sm:$0x3]
  %v139 = vsel %vm106, %v134, %v138
  %140 = vst [vmem:[#allocation3 + $0x8] sm:$0x3] %v139
  %v141 = vld [vmem:[#allocation2] sm:$0x3]
  %v142 = vld [vmem:[#allocation2 + $0x8] sm:$0x3]
  %v143 = vld [vmem:[#allocation2 + $0x10] sm:$0x3]
  %v145 = vshrl.u32 %v141, 16
  %v147 = vrot.slane %v145, 6
  %v148 = vshll.u32 %v141, 16
  %v150 = vrot.slane %v148, 7
  %v151 = vor.u32 %v147, %v150
  %v153 = vshrl.u32 %v142, 16
  %v155 = vrot.slane %v153, 6
  %v156 = vshll.u32 %v142, 16
  %v158 = vrot.slane %v156, 7
  %v159 = vor.u32 %v155, %v158
  %v161 = vshrl.u32 %v143, 16
  %v163 = vrot.slane %v161, 6
  %v164 = vshll.u32 %v143, 16
  %v166 = vrot.slane %v164, 7
  %v167 = vor.u32 %v163, %v166
  %168 = vrot.lane.b32.xlu0 %v151, 127
  %v169 = vpop.permute.xlu0 %168
  %170 = vrot.lane.b32.xlu0 %v159, 127
  %v171 = vpop.permute.xlu0 %170
  %172 = vrot.lane.b32.xlu0 %v167, 127
  %v173 = vpop.permute.xlu0 %172
  %vm174 = vcmask 1039360
  %v175 = vsel %vm174, %v169, %v171
  %v176 = vsel %vm174, %v171, %v173
  %vm179 = vcmask 1042433
  %vm180 = vsmask.f32 7942
  %vm181 = vmand %vm179, %vm180
  %v182 = vld [vmem:[#allocation3] sm:$0x6]
  %v183 = vsel %vm181, %v175, %v182
  %184 = vst [vmem:[#allocation3] sm:$0x6] %v183
  %v185 = vld [vmem:[#allocation3 + $0x8] sm:$0x6]
  %v186 = vsel %vm181, %v176, %v185
  %187 = vst [vmem:[#allocation3 + $0x8] sm:$0x6] %v186
  %v188 = vld [vmem:[#allocation2] sm:$0x3]
  %v189 = vld [vmem:[#allocation2 + $0x8] sm:$0x3]
  %v190 = vld [vmem:[#allocation2 + $0x10] sm:$0x3]
  %v191 = vsel %vm80, 1, 0
  %v192 = vsel %vm81, 1, 0
  %vm193 = vcmp.eq.s32.totalorder %v191, 1
  %vm194 = vcmp.eq.s32.totalorder %v192, 1
  %vm195 = vmpackc.low %vm194, %vm193
  %v196 = vsel %vm195, 65537, 0
  %v197 = vlaneseq
  %v198 = vshrl.u32 %v197, 7
  %v199 = vsub.s32 0, %v198
  %v200 = vrot.slane %v196, %v199
  %v201 = vlaneseq
  %v202 = vshrl.u32 %v201, 7
  %v203 = vsub.s32 4, %v202
  %v204 = vrot.slane %v196, %v203
  %205 = vrot.lane.b32.xlu0 %v200, 2
  %v206 = vpop.permute.xlu0 %205
  %207 = vrot.lane.b32.xlu0 %v204, 2
  %v208 = vpop.permute.xlu0 %207
  %vm209 = vcmask 15360
  %v210 = vsel %vm209, %v206, %v208
  %vm211 = vcmp.ne.s16.totalorder %v206, 0
  %vm212 = vcmp.ne.s16.totalorder %v210, 0
  %vm213 = vcmp.ne.s16.totalorder %v208, 0
  %v214 = vsel %vm211, %v188, 0
  %v215 = vsel %vm212, %v189, 0
  %v216 = vsel %vm213, %v190, 0
  %v220 = vrot.slane %v214, 5
  %v221 = vrot.slane %v215, 5
  %v222 = vrot.slane %v216, 5
  %223 = vrot.lane.b32.xlu0 %v220, 126
  %v224 = vpop.permute.xlu0 %223
  %225 = vrot.lane.b32.xlu0 %v221, 126
  %v226 = vpop.permute.xlu0 %225
  %227 = vrot.lane.b32.xlu0 %v222, 126
  %v228 = vpop.permute.xlu0 %227
  %vm229 = vcmask 1031168
  %v230 = vsel %vm229, %v224, %v226
  %v231 = vsel %vm229, %v226, %v228
  %vm234 = vcmask 1044483
  %vm235 = vsmask.f32 4352
  %vm236 = vmand %vm234, %vm235
  %v237 = vld [vmem:[#allocation3] sm:$0x18]
  %v238 = vsel %vm236, %v230, %v237
  %239 = vst [vmem:[#allocation3] sm:$0x18] %v238
  %v240 = vld [vmem:[#allocation3 + $0x8] sm:$0x18]
  %v241 = vsel %vm236, %v231, %v240
  %242 = vst [vmem:[#allocation3 + $0x8] sm:$0x18] %v241
  %v243 = vld [vmem:[#allocation2] sm:$0x3]
  %v244 = vld [vmem:[#allocation2 + $0x8] sm:$0x3]
  %v245 = vld [vmem:[#allocation2 + $0x10] sm:$0x3]
  %246 = vrot.lane.b32.xlu0 %v126, 16
  %v247 = vpop.permute.xlu0 %246
  %248 = vrot.lane.b32.xlu0 %v130, 16
  %v249 = vpop.permute.xlu0 %248
  %vm250 = vcmask 130048
  %v251 = vsel %vm250, %v247, %v249
  %vm252 = vcmp.ne.s16.totalorder %v247, 0
  %vm253 = vcmp.ne.s16.totalorder %v251, 0
  %vm254 = vcmp.ne.s16.totalorder %v249, 0
  %v255 = vsel %vm252, %v243, 0
  %v256 = vsel %vm253, %v244, 0
  %v257 = vsel %vm254, %v245, 0
  %v259 = vshrl.u32 %v255, 16
  %v261 = vrot.slane %v259, 3
  %v262 = vshll.u32 %v255, 16
  %v264 = vrot.slane %v262, 4
  %v265 = vor.u32 %v261, %v264
  %v267 = vshrl.u32 %v256, 16
  %v269 = vrot.slane %v267, 3
  %v270 = vshll.u32 %v256, 16
  %v272 = vrot.slane %v270, 4
  %v273 = vor.u32 %v269, %v272
  %v275 = vshrl.u32 %v257, 16
  %v277 = vrot.slane %v275, 3
  %v278 = vshll.u32 %v257, 16
  %v280 = vrot.slane %v278, 4
  %v281 = vor.u32 %v277, %v280
  %282 = vrot.lane.b32.xlu0 %v265, 112
  %v283 = vpop.permute.xlu0 %282
  %284 = vrot.lane.b32.xlu0 %v273, 112
  %v285 = vpop.permute.xlu0 %284
  %286 = vrot.lane.b32.xlu0 %v281, 112
  %v287 = vpop.permute.xlu0 %286
  %vm288 = vcmask 916480
  %v289 = vsel %vm288, %v283, %v285
  %v290 = vsel %vm288, %v285, %v287
  %vm293 = vcmask 1045508
  %vm294 = vsmask.f32 7954
  %vm295 = vmand %vm293, %vm294
  %v296 = vld [vmem:[#allocation3] sm:$0x30]
  %v297 = vsel %vm295, %v289, %v296
  %298 = vst [vmem:[#allocation3] sm:$0x30] %v297
  %v299 = vld [vmem:[#allocation3 + $0x8] sm:$0x30]
  %v300 = vsel %vm295, %v290, %v299
  %301 = vst [vmem:[#allocation3 + $0x8] sm:$0x30] %v300
  %v302 = vld [vmem:[#allocation2] sm:$0x3]
  %v303 = vld [vmem:[#allocation2 + $0x8] sm:$0x3]
  %v304 = vld [vmem:[#allocation2 + $0x10] sm:$0x3]
  %v308 = vrot.slane %v302, 2
  %v309 = vrot.slane %v303, 2
  %v310 = vrot.slane %v304, 2
  %311 = vrot.lane.b32.xlu0 %v308, 111
  %v312 = vpop.permute.xlu0 %311
  %313 = vrot.lane.b32.xlu0 %v309, 111
  %v314 = vpop.permute.xlu0 %313
  %315 = vrot.lane.b32.xlu0 %v310, 111
  %v316 = vpop.permute.xlu0 %315
  %vm317 = vcmask 908288
  %v318 = vsel %vm317, %v312, %v314
  %v319 = vsel %vm317, %v314, %v316
  %vm322 = vcmask 1047558
  %vm323 = vsmask.f32 7424
  %vm324 = vmand %vm322, %vm323
  %v325 = vld [vmem:[#allocation3] sm:$0xc0]
  %v326 = vsel %vm324, %v318, %v325
  %327 = vst [vmem:[#allocation3] sm:$0xc0] %v326
  %v328 = vld [vmem:[#allocation3 + $0x8] sm:$0xc0]
  %v329 = vsel %vm324, %v319, %v328
  %330 = vst [vmem:[#allocation3 + $0x8] sm:$0xc0] %v329
  %v331 = vld [vmem:[#allocation2] sm:$0x3]
  %v332 = vld [vmem:[#allocation2 + $0x8] sm:$0x3]
  %v333 = vld [vmem:[#allocation2 + $0x10] sm:$0x3]
  %334 = vrot.lane.b32.xlu0 %v200, 18
  %v335 = vpop.permute.xlu0 %334
  %336 = vrot.lane.b32.xlu0 %v204, 18
  %v337 = vpop.permute.xlu0 %336
  %vm338 = vcmask 146432
  %v339 = vsel %vm338, %v335, %v337
  %vm340 = vcmp.ne.s16.totalorder %v335, 0
  %vm341 = vcmp.ne.s16.totalorder %v339, 0
  %vm342 = vcmp.ne.s16.totalorder %v337, 0
  %v343 = vsel %vm340, %v331, 0
  %v344 = vsel %vm341, %v332, 0
  %v345 = vsel %vm342, %v333, 0
  %v347 = vshll.u32 %v343, 16
  %v349 = vrot.slane %v347, 1
  %v351 = vshll.u32 %v344, 16
  %v353 = vrot.slane %v351, 1
  %v355 = vshll.u32 %v345, 16
  %v357 = vrot.slane %v355, 1
  %v358 = vshrl.u32 %v343, 16
  %v360 = vor.u32 %v358, %v349
  %v361 = vshrl.u32 %v344, 16
  %v363 = vor.u32 %v361, %v353
  %v364 = vshrl.u32 %v345, 16
  %v366 = vor.u32 %v364, %v357
  %367 = vrot.lane.b32.xlu0 %v349, 110
  %v368 = vpop.permute.xlu0 %367
  %369 = vrot.lane.b32.xlu0 %v353, 110
  %v370 = vpop.permute.xlu0 %369
  %371 = vrot.lane.b32.xlu0 %v357, 110
  %v372 = vpop.permute.xlu0 %371
  %373 = vrot.lane.b32.xlu0 %v360, 110
  %v374 = vpop.permute.xlu0 %373
  %375 = vrot.lane.b32.xlu0 %v363, 110
  %v376 = vpop.permute.xlu0 %375
  %377 = vrot.lane.b32.xlu0 %v366, 110
  %v378 = vpop.permute.xlu0 %377
  %vm379 = vcmask 900096
  %v380 = vsel %vm379, %v368, %v370
  %v381 = vsel %vm379, %v370, %v372
  %v382 = vsel %vm379, %v374, %v376
  %v383 = vsel %vm379, %v376, %v378
  %vm388 = vcmask 1047559
  %vm389 = vsmask.f32 7966
  %vm390 = vmand %vm388, %vm389
  %v391 = vld [vmem:[#allocation3] sm:$0x80]
  %v392 = vsel %vm390, %v380, %v391
  %393 = vst [vmem:[#allocation3] sm:$0x80] %v392
  %v394 = vld [vmem:[#allocation3 + $0x8] sm:$0x80]
  %v395 = vsel %vm390, %v381, %v394
  %396 = vst [vmem:[#allocation3 + $0x8] sm:$0x80] %v395
  %397 = vst [vmem:[#allocation3 + $0x10] sm:$0x1] %v382
  %398 = vst [vmem:[#allocation3 + $0x18] sm:$0x1] %v383
  %v399 = vld [vmem:[#allocation2] sm:$0x3]
  %v400 = vld [vmem:[#allocation2 + $0x8] sm:$0x3]
  %v401 = vld [vmem:[#allocation2 + $0x10] sm:$0x3]
  %402 = vrot.lane.b32.xlu0 %v126, 32
  %v403 = vpop.permute.xlu0 %402
  %404 = vrot.lane.b32.xlu0 %v130, 32
  %v405 = vpop.permute.xlu0 %404
  %vm406 = vcmask 261120
  %v407 = vsel %vm406, %v403, %v405
  %vm408 = vcmp.ne.s16.totalorder %v403, 0
  %vm409 = vcmp.ne.s16.totalorder %v407, 0
  %vm410 = vcmp.ne.s16.totalorder %v405, 0
  %v411 = vsel %vm408, %v399, 0
  %v412 = vsel %vm409, %v400, 0
  %v413 = vsel %vm410, %v401, 0
  %v417 = vrot.slane %v411, 7
  %v418 = vrot.slane %v412, 7
  %v419 = vrot.slane %v413, 7
  %420 = vrot.lane.b32.xlu0 %v417, 96
  %v421 = vpop.permute.xlu0 %420
  %422 = vrot.lane.b32.xlu0 %v418, 96
  %v423 = vpop.permute.xlu0 %422
  %424 = vrot.lane.b32.xlu0 %v419, 96
  %v425 = vpop.permute.xlu0 %424
  %vm426 = vcmask 785408
  %v427 = vsel %vm426, %v421, %v423
  %v428 = vsel %vm426, %v423, %v425
  %vm431 = vsmask.f32 2304
  %vm432 = vmand %vm179, %vm431
  %v433 = vld [vmem:[#allocation3 + $0x10] sm:$0x6]
  %v434 = vsel %vm432, %v427, %v433
  %435 = vst [vmem:[#allocation3 + $0x10] sm:$0x6] %v434
  %v436 = vld [vmem:[#allocation3 + $0x18] sm:$0x6]
  %v437 = vsel %vm432, %v428, %v436
  %438 = vst [vmem:[#allocation3 + $0x18] sm:$0x6] %v437
  %v439 = vld [vmem:[#allocation2] sm:$0x3]
  %v440 = vld [vmem:[#allocation2 + $0x8] sm:$0x3]
  %v441 = vld [vmem:[#allocation2 + $0x10] sm:$0x3]
  %v443 = vshrl.u32 %v439, 16
  %v445 = vrot.slane %v443, 5
  %v446 = vshll.u32 %v439, 16
  %v448 = vrot.slane %v446, 6
  %v449 = vor.u32 %v445, %v448
  %v451 = vshrl.u32 %v440, 16
  %v453 = vrot.slane %v451, 5
  %v454 = vshll.u32 %v440, 16
  %v456 = vrot.slane %v454, 6
  %v457 = vor.u32 %v453, %v456
  %v459 = vshrl.u32 %v441, 16
  %v461 = vrot.slane %v459, 5
  %v462 = vshll.u32 %v441, 16
  %v464 = vrot.slane %v462, 6
  %v465 = vor.u32 %v461, %v464
  %466 = vrot.lane.b32.xlu0 %v449, 95
  %v467 = vpop.permute.xlu0 %466
  %468 = vrot.lane.b32.xlu0 %v457, 95
  %v469 = vpop.permute.xlu0 %468
  %470 = vrot.lane.b32.xlu0 %v465, 95
  %v471 = vpop.permute.xlu0 %470
  %vm472 = vcmask 777216
  %v473 = vsel %vm472, %v467, %v469
  %v474 = vsel %vm472, %v469, %v471
  %vm477 = vcmask 1043458
  %vm478 = vsmask.f32 7946
  %vm479 = vmand %vm477, %vm478
  %v480 = vld [vmem:[#allocation3 + $0x10] sm:$0xc]
  %v481 = vsel %vm479, %v473, %v480
  %482 = vst [vmem:[#allocation3 + $0x10] sm:$0xc] %v481
  %v483 = vld [vmem:[#allocation3 + $0x18] sm:$0xc]
  %v484 = vsel %vm479, %v474, %v483
  %485 = vst [vmem:[#allocation3 + $0x18] sm:$0xc] %v484
  %v486 = vld [vmem:[#allocation2] sm:$0x3]
  %v487 = vld [vmem:[#allocation2 + $0x8] sm:$0x3]
  %v488 = vld [vmem:[#allocation2 + $0x10] sm:$0x3]
  %489 = vrot.lane.b32.xlu0 %v200, 34
  %v490 = vpop.permute.xlu0 %489
  %491 = vrot.lane.b32.xlu0 %v204, 34
  %v492 = vpop.permute.xlu0 %491
  %vm493 = vcmask 277504
  %v494 = vsel %vm493, %v490, %v492
  %vm495 = vcmp.ne.s16.totalorder %v490, 0
  %vm496 = vcmp.ne.s16.totalorder %v494, 0
  %vm497 = vcmp.ne.s16.totalorder %v492, 0
  %v498 = vsel %vm495, %v486, 0
  %v499 = vsel %vm496, %v487, 0
  %v500 = vsel %vm497, %v488, 0
  %v504 = vrot.slane %v498, 4
  %v505 = vrot.slane %v499, 4
  %v506 = vrot.slane %v500, 4
  %507 = vrot.lane.b32.xlu0 %v504, 94
  %v508 = vpop.permute.xlu0 %507
  %509 = vrot.lane.b32.xlu0 %v505, 94
  %v510 = vpop.permute.xlu0 %509
  %511 = vrot.lane.b32.xlu0 %v506, 94
  %v512 = vpop.permute.xlu0 %511
  %vm513 = vcmask 769024
  %v514 = vsel %vm513, %v508, %v510
  %v515 = vsel %vm513, %v510, %v512
  %vm518 = vsmask.f32 5376
  %vm519 = vmand %vm293, %vm518
  %v520 = vld [vmem:[#allocation3 + $0x10] sm:$0x30]
  %v521 = vsel %vm519, %v514, %v520
  %522 = vst [vmem:[#allocation3 + $0x10] sm:$0x30] %v521
  %v523 = vld [vmem:[#allocation3 + $0x18] sm:$0x30]
  %v524 = vsel %vm519, %v515, %v523
  %525 = vst [vmem:[#allocation3 + $0x18] sm:$0x30] %v524
  %v526 = vld [vmem:[%s2] sm:$0xf]
  %v527 = vld [vmem:[%s2 + $0x4] sm:$0xf]
  %v528 = vld [vmem:[#allocation3] sm:$0xff]
  %v529 = vld [vmem:[#allocation3 + $0x8] sm:$0xff]
  %v530 = vld [vmem:[#allocation3 + $0x10] sm:$0x3f]
  %v531 = vld [vmem:[#allocation3 + $0x18] sm:$0x3f]
  %v532 = vld [vmem:[%s3] sm:$0xff]
  %v533 = vld [vmem:[%s3 + $0x8] sm:$0xff]
  %535 = vset.pattern.permute.xlu0 0
  %536 = vperm.xlu0 %535, %v532
  %v537 = vpop.permute.xlu0 %536
  %540 = vset.pattern.permute.xlu0 0
  %541 = vperm.xlu0 %540, %v533
  %v542 = vpop.permute.xlu0 %541
  %v546 = vunpack.c.l.b16 %v526
  %v547 = vunpack.c.l.b16 %v527
  %v548 = vpack.c.b16 %v547, %v546
  %vm549 = vcmask 220160
  %v551 = vsel %vm549, %v548, 0
  %vm553 = vcmask 1044480
  %vm554 = vcmask 1045504
  %v555 = vsel %vm553, 4294967295, 65535
  %v556 = vsel %vm554, %v555, 0
  %v558 = vand.u32 %v530, %v556
  %v561 = vand.u32 %v531, %v556
  %563 = vmatprep.subr.bf16.mxu0 %v529
  %564 = vmatpush1.bf16.msra.mxu0 %v528
  %565 = vmatprep.subr.bf16.mxu0 %v561
  %566 = vmatpush1.bf16.msra.mxu0 %v558
  %567 = vmatprep.subr.bf16.mxu0 0
  %568 = vmatpush1.bf16.msra.mxu0 0
  %569 = vmatprep.subr.bf16.mxu0 0
  %570 = vmatpush1.bf16.msra.mxu0 0
  %571 = vmatprep.subr.bf16.mxu0 0
  %572 = vmatpush1.bf16.msra.mxu0 0
  %573 = vmatprep.subr.bf16.mxu0 0
  %574 = vmatpush1.bf16.msra.mxu0 0
  %575 = vmatprep.subr.bf16.mxu0 0
  %576 = vmatpush1.bf16.msra.mxu0 0
  %577 = vmatprep.subr.bf16.mxu0 0
  %578 = vmatpush1.bf16.msra.mxu0 0
  %579 = vmatprep.subr.bf16.mxu0 0
  %580 = vmatpush1.bf16.msra.mxu0 0
  %581 = vmatprep.subr.bf16.mxu0 0
  %582 = vmatpush1.bf16.msra.mxu0 0
  %583 = vmatprep.subr.bf16.mxu0 0
  %584 = vmatpush1.bf16.msra.mxu0 0
  %585 = vmatprep.subr.bf16.mxu0 0
  %586 = vmatpush1.bf16.msra.mxu0 0
  %587 = vmatprep.subr.bf16.mxu0 0
  %588 = vmatpush1.bf16.msra.mxu0 0
  %589 = vmatprep.subr.bf16.mxu0 0
  %590 = vmatpush1.bf16.msra.mxu0 0
  %591 = vmatprep.subr.bf16.mxu0 0
  %592 = vmatpush1.bf16.msra.mxu0 0
  %593 = vmatprep.subr.bf16.mxu0 0
  %594 = vmatpush1.bf16.msra.mxu0 0
  %595 = vmatprep.mubr.bf16.mxu0 0
  %596 = vmatmul.mubr.bf16.gmra.mrb[0].mxu0 %v551
  %v597 = vpop.f32.mrb[0].mxu0
  %v598 = vadd.f32 %v537, %v597
  %v599 = vpop.f32.mrb[0].mxu0
  %v600 = vadd.f32 %v537, %v599
  %v601 = vpop.f32.mrb[0].mxu0
  %v602 = vadd.f32 %v542, %v601
  %v603 = vpop.f32.mrb[0].mxu0
  %v604 = vadd.f32 %v542, %v603
  %605 = vdwg.mxu0
  %v606 = vmax.f32 %v598, 0.0
  %v607 = vmax.f32 %v600, 0.0
  %v608 = vmax.f32 %v602, 0.0
  %v609 = vmax.f32 %v604, 0.0
  %v610 = vpack.c.bf16 %v608, %v606
  %v611 = vpack.c.bf16 %v609, %v607
  %614 = vrot.lane.b32.xlu0 %v610, 17
  %v615 = vpop.permute.xlu0 %614
  %616 = vrot.lane.b32.xlu0 %v611, 17
  %v617 = vpop.permute.xlu0 %616
  %v618 = vsel %vm94, %v615, %v617
  %vm622 = vcmask 1047688
  %623 = vst.msk [vmem:[#allocation2] sm:$0xff] %vm622, %v615
  %624 = vst [vmem:[#allocation2 + $0x8] sm:$0xff] %v618
  %vm625 = vcmask 138240
  %626 = vst.msk [vmem:[#allocation2 + $0x10] sm:$0xff] %vm625, %v617
  %v627 = vld [vmem:[#allocation2] sm:$0xff]
  %v628 = vld [vmem:[#allocation2 + $0x8] sm:$0xff]
  %v629 = vsel %vm131, %v627, 0
  %v630 = vsel %vm132, %v628, 0
  %631 = vst [vmem:[#allocation3] sm:$0xff] %v629
  %632 = vst [vmem:[#allocation3 + $0x8] sm:$0xff] %v630
  %v633 = vld [vmem:[#allocation2] sm:$0xff]
  %v634 = vld [vmem:[#allocation2 + $0x8] sm:$0xff]
  %v635 = vld [vmem:[#allocation2 + $0x10] sm:$0xff]
  %639 = vrot.lane.b32.xlu0 %v633, 127
  %v640 = vpop.permute.xlu0 %639
  %641 = vrot.lane.b32.xlu0 %v634, 127
  %v642 = vpop.permute.xlu0 %641
  %643 = vrot.lane.b32.xlu0 %v635, 127
  %v644 = vpop.permute.xlu0 %643
  %v645 = vsel %vm174, %v640, %v642
  %v646 = vsel %vm174, %v642, %v644
  %649 = vst [vmem:[#allocation3 + $0x10] sm:$0xff] %v645
  %650 = vst [vmem:[#allocation3 + $0x18] sm:$0xff] %v646
  %v651 = vld [vmem:[#allocation2] sm:$0xff]
  %v652 = vld [vmem:[#allocation2 + $0x8] sm:$0xff]
  %v653 = vld [vmem:[#allocation2 + $0x10] sm:$0xff]
  %v654 = vsel %vm211, %v651, 0
  %v655 = vsel %vm212, %v652, 0
  %v656 = vsel %vm213, %v653, 0
  %660 = vrot.lane.b32.xlu0 %v654, 126
  %v661 = vpop.permute.xlu0 %660
  %662 = vrot.lane.b32.xlu0 %v655, 126
  %v663 = vpop.permute.xlu0 %662
  %664 = vrot.lane.b32.xlu0 %v656, 126
  %v665 = vpop.permute.xlu0 %664
  %v666 = vsel %vm229, %v661, %v663
  %v667 = vsel %vm229, %v663, %v665
  %670 = vst [vmem:[#allocation3 + $0x20] sm:$0xff] %v666
  %671 = vst [vmem:[#allocation3 + $0x28] sm:$0xff] %v667
  %v672 = vld [vmem:[#allocation2] sm:$0xff]
  %v673 = vld [vmem:[#allocation2 + $0x8] sm:$0xff]
  %v674 = vld [vmem:[#allocation2 + $0x10] sm:$0xff]
  %v675 = vsel %vm252, %v672, 0
  %v676 = vsel %vm253, %v673, 0
  %v677 = vsel %vm254, %v674, 0
  %681 = vrot.lane.b32.xlu0 %v675, 112
  %v682 = vpop.permute.xlu0 %681
  %683 = vrot.lane.b32.xlu0 %v676, 112
  %v684 = vpop.permute.xlu0 %683
  %685 = vrot.lane.b32.xlu0 %v677, 112
  %v686 = vpop.permute.xlu0 %685
  %v687 = vsel %vm288, %v682, %v684
  %v688 = vsel %vm288, %v684, %v686
  %691 = vst [vmem:[#allocation3 + $0x30] sm:$0xff] %v687
  %692 = vst [vmem:[#allocation3 + $0x38] sm:$0xff] %v688
  %v693 = vld [vmem:[#allocation2] sm:$0xff]
  %v694 = vld [vmem:[#allocation2 + $0x8] sm:$0xff]
  %v695 = vld [vmem:[#allocation2 + $0x10] sm:$0xff]
  %699 = vrot.lane.b32.xlu0 %v693, 111
  %v700 = vpop.permute.xlu0 %699
  %701 = vrot.lane.b32.xlu0 %v694, 111
  %v702 = vpop.permute.xlu0 %701
  %703 = vrot.lane.b32.xlu0 %v695, 111
  %v704 = vpop.permute.xlu0 %703
  %v705 = vsel %vm317, %v700, %v702
  %v706 = vsel %vm317, %v702, %v704
  %709 = vst [vmem:[#allocation3 + $0x40] sm:$0xff] %v705
  %710 = vst [vmem:[#allocation3 + $0x48] sm:$0xff] %v706
  %v711 = vld [vmem:[#allocation2] sm:$0xff]
  %v712 = vld [vmem:[#allocation2 + $0x8] sm:$0xff]
  %v713 = vld [vmem:[#allocation2 + $0x10] sm:$0xff]
  %v714 = vsel %vm340, %v711, 0
  %v715 = vsel %vm341, %v712, 0
  %v716 = vsel %vm342, %v713, 0
  %720 = vrot.lane.b32.xlu0 %v714, 110
  %v721 = vpop.permute.xlu0 %720
  %722 = vrot.lane.b32.xlu0 %v715, 110
  %v723 = vpop.permute.xlu0 %722
  %724 = vrot.lane.b32.xlu0 %v716, 110
  %v725 = vpop.permute.xlu0 %724
  %v726 = vsel %vm379, %v721, %v723
  %v727 = vsel %vm379, %v723, %v725
  %730 = vst [vmem:[#allocation3 + $0x50] sm:$0xff] %v726
  %731 = vst [vmem:[#allocation3 + $0x58] sm:$0xff] %v727
  %v732 = vld [vmem:[#allocation2] sm:$0xff]
  %v733 = vld [vmem:[#allocation2 + $0x8] sm:$0xff]
  %v734 = vld [vmem:[#allocation2 + $0x10] sm:$0xff]
  %v735 = vsel %vm408, %v732, 0
  %v736 = vsel %vm409, %v733, 0
  %v737 = vsel %vm410, %v734, 0
  %741 = vrot.lane.b32.xlu0 %v735, 96
  %v742 = vpop.permute.xlu0 %741
  %743 = vrot.lane.b32.xlu0 %v736, 96
  %v744 = vpop.permute.xlu0 %743
  %745 = vrot.lane.b32.xlu0 %v737, 96
  %v746 = vpop.permute.xlu0 %745
  %v747 = vsel %vm426, %v742, %v744
  %v748 = vsel %vm426, %v744, %v746
  %751 = vst [vmem:[#allocation3 + $0x60] sm:$0xff] %v747
  %752 = vst [vmem:[#allocation3 + $0x68] sm:$0xff] %v748
  %v753 = vld [vmem:[#allocation2] sm:$0xff]
  %v754 = vld [vmem:[#allocation2 + $0x8] sm:$0xff]
  %v755 = vld [vmem:[#allocation2 + $0x10] sm:$0xff]
  %759 = vrot.lane.b32.xlu0 %v753, 95
  %v760 = vpop.permute.xlu0 %759
  %761 = vrot.lane.b32.xlu0 %v754, 95
  %v762 = vpop.permute.xlu0 %761
  %763 = vrot.lane.b32.xlu0 %v755, 95
  %v764 = vpop.permute.xlu0 %763
  %v765 = vsel %vm472, %v760, %v762
  %v766 = vsel %vm472, %v762, %v764
  %769 = vst [vmem:[#allocation3 + $0x70] sm:$0xff] %v765
  %770 = vst [vmem:[#allocation3 + $0x78] sm:$0xff] %v766
  %v771 = vld [vmem:[#allocation2] sm:$0xff]
  %v772 = vld [vmem:[#allocation2 + $0x8] sm:$0xff]
  %v773 = vld [vmem:[#allocation2 + $0x10] sm:$0xff]
  %v774 = vsel %vm495, %v771, 0
  %v775 = vsel %vm496, %v772, 0
  %v776 = vsel %vm497, %v773, 0
  %780 = vrot.lane.b32.xlu0 %v774, 94
  %v781 = vpop.permute.xlu0 %780
  %782 = vrot.lane.b32.xlu0 %v775, 94
  %v783 = vpop.permute.xlu0 %782
  %784 = vrot.lane.b32.xlu0 %v776, 94
  %v785 = vpop.permute.xlu0 %784
  %v786 = vsel %vm513, %v781, %v783
  %v787 = vsel %vm513, %v783, %v785
  %790 = vst [vmem:[#allocation3 + $0x80] sm:$0xff] %v786
  %791 = vst [vmem:[#allocation3 + $0x88] sm:$0xff] %v787
  %v792 = vld [vmem:[%s4] sm:$0xff]
  %v793 = vld [vmem:[%s4 + $0x8] sm:$0xff]
  %v794 = vld [vmem:[%s4 + $0x10] sm:$0xff]
  %v795 = vld [vmem:[%s4 + $0x18] sm:$0xff]
  %v796 = vld [vmem:[#allocation3] sm:$0xff]
  %v797 = vld [vmem:[#allocation3 + $0x8] sm:$0xff]
  %v798 = vld [vmem:[#allocation3 + $0x10] sm:$0xff]
  %v799 = vld [vmem:[#allocation3 + $0x18] sm:$0xff]
  %v800 = vld [vmem:[#allocation3 + $0x20] sm:$0xff]
  %v801 = vld [vmem:[#allocation3 + $0x28] sm:$0xff]
  %v802 = vld [vmem:[#allocation3 + $0x30] sm:$0xff]
  %v803 = vld [vmem:[#allocation3 + $0x38] sm:$0xff]
  %v804 = vld [vmem:[#allocation3 + $0x40] sm:$0xff]
  %v805 = vld [vmem:[#allocation3 + $0x48] sm:$0xff]
  %v806 = vld [vmem:[#allocation3 + $0x50] sm:$0xff]
  %v807 = vld [vmem:[#allocation3 + $0x58] sm:$0xff]
  %v808 = vld [vmem:[#allocation3 + $0x60] sm:$0xff]
  %v809 = vld [vmem:[#allocation3 + $0x68] sm:$0xff]
  %v810 = vld [vmem:[#allocation3 + $0x70] sm:$0xff]
  %v811 = vld [vmem:[#allocation3 + $0x78] sm:$0xff]
  %v812 = vld [vmem:[#allocation3 + $0x80] sm:$0xff]
  %v813 = vld [vmem:[#allocation3 + $0x88] sm:$0xff]
  %v814 = vld [vmem:[%s5] sm:$0xff]
  %v815 = vld [vmem:[%s5 + $0x8] sm:$0xff]
  %v816 = vld [vmem:[%s5 + $0x10] sm:$0xff]
  %v817 = vld [vmem:[%s5 + $0x18] sm:$0xff]
  %819 = vset.pattern.permute.xlu0 0
  %820 = vperm.xlu0 %819, %v814
  %v821 = vpop.permute.xlu0 %820
  %824 = vset.pattern.permute.xlu0 0
  %825 = vperm.xlu0 %824, %v815
  %v826 = vpop.permute.xlu0 %825
  %829 = vset.pattern.permute.xlu0 0
  %830 = vperm.xlu0 %829, %v816
  %v831 = vpop.permute.xlu0 %830
  %834 = vset.pattern.permute.xlu0 0
  %835 = vperm.xlu0 %834, %v817
  %v836 = vpop.permute.xlu0 %835
  %v842 = vunpack.c.l.b16 %v792
  %v843 = vunpack.c.h.b16 %v792
  %v844 = vunpack.c.l.b16 %v793
  %v845 = vunpack.c.h.b16 %v793
  %v846 = vunpack.c.l.b16 %v794
  %v847 = vunpack.c.h.b16 %v794
  %v848 = vunpack.c.l.b16 %v795
  %v849 = vunpack.c.h.b16 %v795
  %v850 = vpack.c.b16 %v844, %v842
  %v851 = vpack.c.b16 %v845, %v843
  %v852 = vpack.c.b16 %v848, %v846
  %v853 = vpack.c.b16 %v849, %v847
  %vm856 = vcmask 130048
  %v858 = vsel %vm856, %v851, 0
  %v861 = vsel %vm856, %v853, 0
  %863 = vmatprep.subr.bf16.mxu0 %v797
  %864 = vmatpush1.bf16.msra.mxu0 %v796
  %865 = vmatprep.subr.bf16.mxu0 %v799
  %866 = vmatpush1.bf16.msra.mxu0 %v798
  %867 = vmatprep.subr.bf16.mxu0 %v801
  %868 = vmatpush1.bf16.msra.mxu0 %v800
  %869 = vmatprep.subr.bf16.mxu0 %v803
  %870 = vmatpush1.bf16.msra.mxu0 %v802
  %871 = vmatprep.subr.bf16.mxu0 %v805
  %872 = vmatpush1.bf16.msra.mxu0 %v804
  %873 = vmatprep.subr.bf16.mxu0 %v807
  %874 = vmatpush1.bf16.msra.mxu0 %v806
  %875 = vmatprep.subr.bf16.mxu0 %v809
  %876 = vmatpush1.bf16.msra.mxu0 %v808
  %877 = vmatprep.subr.bf16.mxu0 %v811
  %878 = vmatpush1.bf16.msra.mxu0 %v810
  %879 = vmatprep.subr.bf16.mxu0 %v813
  %880 = vmatpush1.bf16.msra.mxu0 %v812
  %881 = vmatprep.subr.bf16.mxu0 0
  %882 = vmatpush1.bf16.msra.mxu0 0
  %883 = vmatprep.subr.bf16.mxu0 0
  %884 = vmatpush1.bf16.msra.mxu0 0
  %885 = vmatprep.subr.bf16.mxu0 0
  %886 = vmatpush1.bf16.msra.mxu0 0
  %887 = vmatprep.subr.bf16.mxu0 0
  %888 = vmatpush1.bf16.msra.mxu0 0
  %889 = vmatprep.subr.bf16.mxu0 0
  %890 = vmatpush1.bf16.msra.mxu0 0
  %891 = vmatprep.subr.bf16.mxu0 0
  %892 = vmatpush1.bf16.msra.mxu0 0
  %893 = vmatprep.subr.bf16.mxu0 0
  %894 = vmatpush1.bf16.msra.mxu0 0
  %895 = vmatprep.mubr.bf16.mxu0 %v858
  %896 = vmatmul.mubr.bf16.gmra.mrb[0].mxu0 %v850
  %v897 = vpop.f32.mrb[0].mxu0
  %v898 = vadd.f32 %v821, %v897
  %v899 = vpop.f32.mrb[0].mxu0
  %v900 = vadd.f32 %v821, %v899
  %v901 = vpop.f32.mrb[0].mxu0
  %v902 = vadd.f32 %v826, %v901
  %v903 = vpop.f32.mrb[0].mxu0
  %v904 = vadd.f32 %v826, %v903
  %905 = vmatprep.mubr.bf16.mxu0 %v861
  %906 = vmatmul.mubr.bf16.gmra.mrb[0].mxu0 %v852
  %v907 = vpop.f32.mrb[0].mxu0
  %v908 = vadd.f32 %v831, %v907
  %v909 = vpop.f32.mrb[0].mxu0
  %v910 = vadd.f32 %v831, %v909
  %v911 = vpop.f32.mrb[0].mxu0
  %v912 = vadd.f32 %v836, %v911
  %v913 = vpop.f32.mrb[0].mxu0
  %v914 = vadd.f32 %v836, %v913
  %915 = vdwg.mxu0
  %v916 = vmax.f32 %v898, 0.0
  %v917 = vmax.f32 %v900, 0.0
  %v918 = vmax.f32 %v902, 0.0
  %v919 = vmax.f32 %v904, 0.0
  %v920 = vmax.f32 %v908, 0.0
  %v921 = vmax.f32 %v910, 0.0
  %v922 = vmax.f32 %v912, 0.0
  %v923 = vmax.f32 %v914, 0.0
  %v924 = vadd.f32 %v916, %v917
  %925 = vadd.xlane.f32.xlu0 %v924
  %v926 = vpop.xlane.xlu0 %925
  %v927 = vadd.f32 %v918, %v919
  %928 = vadd.xlane.f32.xlu0 %v927
  %v929 = vpop.xlane.xlu0 %928
  %v930 = vadd.f32 %v920, %v921
  %931 = vadd.xlane.f32.xlu0 %v930
  %v932 = vpop.xlane.xlu0 %931
  %v933 = vadd.f32 %v922, %v923
  %934 = vadd.xlane.f32.xlu0 %v933
  %v935 = vpop.xlane.xlu0 %934
  %v936 = vmul.f32 %v926, 0.00390625
  %v937 = vmul.f32 %v929, 0.00390625
  %v938 = vmul.f32 %v932, 0.00390625
  %v939 = vmul.f32 %v935, 0.00390625
  %s940 = scalar_lea.vmem %s0, 8
  %v941 = vld [vmem:[%s940] sm:$0x77]
  %v943 = vcombine.high %v941, %v941
  %v945 = vpack.c.bf16 %v941, %v941
  %v946 = vpack.c.bf16 %v943, %v943
  %949 = vrot.lane.b32.xlu0 %v945, 17
  %v950 = vpop.permute.xlu0 %949
  %951 = vrot.lane.b32.xlu0 %v946, 17
  %v952 = vpop.permute.xlu0 %951
  %v953 = vsel %vm94, %v950, %v952
  %s957 = scalar_lea.vmem [#allocation2], 24
  %v958 = vld [vmem:[%s957] sm:$0x3]
  %v959 = vsel %vm101, %v950, %v958
  %960 = vst [vmem:[%s957] sm:$0x3] %v959
  %v961 = vld [vmem:[%s957 + $0x8] sm:$0x3]
  %v962 = vsel %vm106, %v953, %v961
  %963 = vst [vmem:[%s957 + $0x8] sm:$0x3] %v962
  %v964 = vld [vmem:[%s957 + $0x10] sm:$0x3]
  %v965 = vsel %vm111, %v952, %v964
  %966 = vst [vmem:[%s957 + $0x10] sm:$0x3] %v965
  %v967 = vld [vmem:[%s957] sm:$0x3]
  %v968 = vld [vmem:[%s957 + $0x8] sm:$0x3]
  %v969 = vsel %vm131, %v967, 0
  %v970 = vsel %vm132, %v968, 0
  %s971 = scalar_lea.vmem [#allocation3], 144
  %v972 = vld [vmem:[%s971] sm:$0x3]
  %v973 = vsel %vm106, %v969, %v972
  %974 = vst [vmem:[%s971] sm:$0x3] %v973
  %v975 = vld [vmem:[%s971 + $0x8] sm:$0x3]
  %v976 = vsel %vm106, %v970, %v975
  %977 = vst [vmem:[%s971 + $0x8] sm:$0x3] %v976
  %v978 = vld [vmem:[%s957] sm:$0x3]
  %v979 = vld [vmem:[%s957 + $0x8] sm:$0x3]
  %v980 = vld [vmem:[%s957 + $0x10] sm:$0x3]
  %v982 = vshrl.u32 %v978, 16
  %v984 = vrot.slane %v982, 6
  %v985 = vshll.u32 %v978, 16
  %v987 = vrot.slane %v985, 7
  %v988 = vor.u32 %v984, %v987
  %v990 = vshrl.u32 %v979, 16
  %v992 = vrot.slane %v990, 6
  %v993 = vshll.u32 %v979, 16
  %v995 = vrot.slane %v993, 7
  %v996 = vor.u32 %v992, %v995
  %v998 = vshrl.u32 %v980, 16
  %v1000 = vrot.slane %v998, 6
  %v1001 = vshll.u32 %v980, 16
  %v1003 = vrot.slane %v1001, 7
  %v1004 = vor.u32 %v1000, %v1003
  %1005 = vrot.lane.b32.xlu0 %v988, 127
  %v1006 = vpop.permute.xlu0 %1005
  %1007 = vrot.lane.b32.xlu0 %v996, 127
  %v1008 = vpop.permute.xlu0 %1007
  %1009 = vrot.lane.b32.xlu0 %v1004, 127
  %v1010 = vpop.permute.xlu0 %1009
  %v1011 = vsel %vm174, %v1006, %v1008
  %v1012 = vsel %vm174, %v1008, %v1010
  %v1015 = vld [vmem:[%s971] sm:$0x6]
  %v1016 = vsel %vm181, %v1011, %v1015
  %1017 = vst [vmem:[%s971] sm:$0x6] %v1016
  %v1018 = vld [vmem:[%s971 + $0x8] sm:$0x6]
  %v1019 = vsel %vm181, %v1012, %v1018
  %1020 = vst [vmem:[%s971 + $0x8] sm:$0x6] %v1019
  %v1021 = vld [vmem:[%s957] sm:$0x3]
  %v1022 = vld [vmem:[%s957 + $0x8] sm:$0x3]
  %v1023 = vld [vmem:[%s957 + $0x10] sm:$0x3]
  %v1024 = vsel %vm211, %v1021, 0
  %v1025 = vsel %vm212, %v1022, 0
  %v1026 = vsel %vm213, %v1023, 0
  %v1030 = vrot.slane %v1024, 5
  %v1031 = vrot.slane %v1025, 5
  %v1032 = vrot.slane %v1026, 5
  %1033 = vrot.lane.b32.xlu0 %v1030, 126
  %v1034 = vpop.permute.xlu0 %1033
  %1035 = vrot.lane.b32.xlu0 %v1031, 126
  %v1036 = vpop.permute.xlu0 %1035
  %1037 = vrot.lane.b32.xlu0 %v1032, 126
  %v1038 = vpop.permute.xlu0 %1037
  %v1039 = vsel %vm229, %v1034, %v1036
  %v1040 = vsel %vm229, %v1036, %v1038
  %v1043 = vld [vmem:[%s971] sm:$0x18]
  %v1044 = vsel %vm236, %v1039, %v1043
  %1045 = vst [vmem:[%s971] sm:$0x18] %v1044
  %v1046 = vld [vmem:[%s971 + $0x8] sm:$0x18]
  %v1047 = vsel %vm236, %v1040, %v1046
  %1048 = vst [vmem:[%s971 + $0x8] sm:$0x18] %v1047
  %v1049 = vld [vmem:[%s957] sm:$0x3]
  %v1050 = vld [vmem:[%s957 + $0x8] sm:$0x3]
  %v1051 = vld [vmem:[%s957 + $0x10] sm:$0x3]
  %v1052 = vsel %vm252, %v1049, 0
  %v1053 = vsel %vm253, %v1050, 0
  %v1054 = vsel %vm254, %v1051, 0
  %v1056 = vshrl.u32 %v1052, 16
  %v1058 = vrot.slane %v1056, 3
  %v1059 = vshll.u32 %v1052, 16
  %v1061 = vrot.slane %v1059, 4
  %v1062 = vor.u32 %v1058, %v1061
  %v1064 = vshrl.u32 %v1053, 16
  %v1066 = vrot.slane %v1064, 3
  %v1067 = vshll.u32 %v1053, 16
  %v1069 = vrot.slane %v1067, 4
  %v1070 = vor.u32 %v1066, %v1069
  %v1072 = vshrl.u32 %v1054, 16
  %v1074 = vrot.slane %v1072, 3
  %v1075 = vshll.u32 %v1054, 16
  %v1077 = vrot.slane %v1075, 4
  %v1078 = vor.u32 %v1074, %v1077
  %1079 = vrot.lane.b32.xlu0 %v1062, 112
  %v1080 = vpop.permute.xlu0 %1079
  %1081 = vrot.lane.b32.xlu0 %v1070, 112
  %v1082 = vpop.permute.xlu0 %1081
  %1083 = vrot.lane.b32.xlu0 %v1078, 112
  %v1084 = vpop.permute.xlu0 %1083
  %v1085 = vsel %vm288, %v1080, %v1082
  %v1086 = vsel %vm288, %v1082, %v1084
  %v1089 = vld [vmem:[%s971] sm:$0x30]
  %v1090 = vsel %vm295, %v1085, %v1089
  %1091 = vst [vmem:[%s971] sm:$0x30] %v1090
  %v1092 = vld [vmem:[%s971 + $0x8] sm:$0x30]
  %v1093 = vsel %vm295, %v1086, %v1092
  %1094 = vst [vmem:[%s971 + $0x8] sm:$0x30] %v1093
  %v1095 = vld [vmem:[%s957] sm:$0x3]
  %v1096 = vld [vmem:[%s957 + $0x8] sm:$0x3]
  %v1097 = vld [vmem:[%s957 + $0x10] sm:$0x3]
  %v1101 = vrot.slane %v1095, 2
  %v1102 = vrot.slane %v1096, 2
  %v1103 = vrot.slane %v1097, 2
  %1104 = vrot.lane.b32.xlu0 %v1101, 111
  %v1105 = vpop.permute.xlu0 %1104
  %1106 = vrot.lane.b32.xlu0 %v1102, 111
  %v1107 = vpop.permute.xlu0 %1106
  %1108 = vrot.lane.b32.xlu0 %v1103, 111
  %v1109 = vpop.permute.xlu0 %1108
  %v1110 = vsel %vm317, %v1105, %v1107
  %v1111 = vsel %vm317, %v1107, %v1109
  %v1114 = vld [vmem:[%s971] sm:$0xc0]
  %v1115 = vsel %vm324, %v1110, %v1114
  %1116 = vst [vmem:[%s971] sm:$0xc0] %v1115
  %v1117 = vld [vmem:[%s971 + $0x8] sm:$0xc0]
  %v1118 = vsel %vm324, %v1111, %v1117
  %1119 = vst [vmem:[%s971 + $0x8] sm:$0xc0] %v1118
  %v1120 = vld [vmem:[%s957] sm:$0x3]
  %v1121 = vld [vmem:[%s957 + $0x8] sm:$0x3]
  %v1122 = vld [vmem:[%s957 + $0x10] sm:$0x3]
  %v1123 = vsel %vm340, %v1120, 0
  %v1124 = vsel %vm341, %v1121, 0
  %v1125 = vsel %vm342, %v1122, 0
  %v1127 = vshll.u32 %v1123, 16
  %v1129 = vrot.slane %v1127, 1
  %v1131 = vshll.u32 %v1124, 16
  %v1133 = vrot.slane %v1131, 1
  %v1135 = vshll.u32 %v1125, 16
  %v1137 = vrot.slane %v1135, 1
  %v1138 = vshrl.u32 %v1123, 16
  %v1140 = vor.u32 %v1138, %v1129
  %v1141 = vshrl.u32 %v1124, 16
  %v1143 = vor.u32 %v1141, %v1133
  %v1144 = vshrl.u32 %v1125, 16
  %v1146 = vor.u32 %v1144, %v1137
  %1147 = vrot.lane.b32.xlu0 %v1129, 110
  %v1148 = vpop.permute.xlu0 %1147
  %1149 = vrot.lane.b32.xlu0 %v1133, 110
  %v1150 = vpop.permute.xlu0 %1149
  %1151 = vrot.lane.b32.xlu0 %v1137, 110
  %v1152 = vpop.permute.xlu0 %1151
  %1153 = vrot.lane.b32.xlu0 %v1140, 110
  %v1154 = vpop.permute.xlu0 %1153
  %1155 = vrot.lane.b32.xlu0 %v1143, 110
  %v1156 = vpop.permute.xlu0 %1155
  %1157 = vrot.lane.b32.xlu0 %v1146, 110
  %v1158 = vpop.permute.xlu0 %1157
  %v1159 = vsel %vm379, %v1148, %v1150
  %v1160 = vsel %vm379, %v1150, %v1152
  %v1161 = vsel %vm379, %v1154, %v1156
  %v1162 = vsel %vm379, %v1156, %v1158
  %v1167 = vld [vmem:[%s971] sm:$0x80]
  %v1168 = vsel %vm390, %v1159, %v1167
  %1169 = vst [vmem:[%s971] sm:$0x80] %v1168
  %v1170 = vld [vmem:[%s971 + $0x8] sm:$0x80]
  %v1171 = vsel %vm390, %v1160, %v1170
  %1172 = vst [vmem:[%s971 + $0x8] sm:$0x80] %v1171
  %1173 = vst [vmem:[%s971 + $0x10] sm:$0x1] %v1161
  %1174 = vst [vmem:[%s971 + $0x18] sm:$0x1] %v1162
  %v1175 = vld [vmem:[%s957] sm:$0x3]
  %v1176 = vld [vmem:[%s957 + $0x8] sm:$0x3]
  %v1177 = vld [vmem:[%s957 + $0x10] sm:$0x3]
  %v1178 = vsel %vm408, %v1175, 0
  %v1179 = vsel %vm409, %v1176, 0
  %v1180 = vsel %vm410, %v1177, 0
  %v1184 = vrot.slane %v1178, 7
  %v1185 = vrot.slane %v1179, 7
  %v1186 = vrot.slane %v1180, 7
  %1187 = vrot.lane.b32.xlu0 %v1184, 96
  %v1188 = vpop.permute.xlu0 %1187
  %1189 = vrot.lane.b32.xlu0 %v1185, 96
  %v1190 = vpop.permute.xlu0 %1189
  %1191 = vrot.lane.b32.xlu0 %v1186, 96
  %v1192 = vpop.permute.xlu0 %1191
  %v1193 = vsel %vm426, %v1188, %v1190
  %v1194 = vsel %vm426, %v1190, %v1192
  %v1197 = vld [vmem:[%s971 + $0x10] sm:$0x6]
  %v1198 = vsel %vm432, %v1193, %v1197
  %1199 = vst [vmem:[%s971 + $0x10] sm:$0x6] %v1198
  %v1200 = vld [vmem:[%s971 + $0x18] sm:$0x6]
  %v1201 = vsel %vm432, %v1194, %v1200
  %1202 = vst [vmem:[%s971 + $0x18] sm:$0x6] %v1201
  %v1203 = vld [vmem:[%s957] sm:$0x3]
  %v1204 = vld [vmem:[%s957 + $0x8] sm:$0x3]
  %v1205 = vld [vmem:[%s957 + $0x10] sm:$0x3]
  %v1207 = vshrl.u32 %v1203, 16
  %v1209 = vrot.slane %v1207, 5
  %v1210 = vshll.u32 %v1203, 16
  %v1212 = vrot.slane %v1210, 6
  %v1213 = vor.u32 %v1209, %v1212
  %v1215 = vshrl.u32 %v1204, 16
  %v1217 = vrot.slane %v1215, 5
  %v1218 = vshll.u32 %v1204, 16
  %v1220 = vrot.slane %v1218, 6
  %v1221 = vor.u32 %v1217, %v1220
  %v1223 = vshrl.u32 %v1205, 16
  %v1225 = vrot.slane %v1223, 5
  %v1226 = vshll.u32 %v1205, 16
  %v1228 = vrot.slane %v1226, 6
  %v1229 = vor.u32 %v1225, %v1228
  %1230 = vrot.lane.b32.xlu0 %v1213, 95
  %v1231 = vpop.permute.xlu0 %1230
  %1232 = vrot.lane.b32.xlu0 %v1221, 95
  %v1233 = vpop.permute.xlu0 %1232
  %1234 = vrot.lane.b32.xlu0 %v1229, 95
  %v1235 = vpop.permute.xlu0 %1234
  %v1236 = vsel %vm472, %v1231, %v1233
  %v1237 = vsel %vm472, %v1233, %v1235
  %v1240 = vld [vmem:[%s971 + $0x10] sm:$0xc]
  %v1241 = vsel %vm479, %v1236, %v1240
  %1242 = vst [vmem:[%s971 + $0x10] sm:$0xc] %v1241
  %v1243 = vld [vmem:[%s971 + $0x18] sm:$0xc]
  %v1244 = vsel %vm479, %v1237, %v1243
  %1245 = vst [vmem:[%s971 + $0x18] sm:$0xc] %v1244
  %v1246 = vld [vmem:[%s957] sm:$0x3]
  %v1247 = vld [vmem:[%s957 + $0x8] sm:$0x3]
  %v1248 = vld [vmem:[%s957 + $0x10] sm:$0x3]
  %v1249 = vsel %vm495, %v1246, 0
  %v1250 = vsel %vm496, %v1247, 0
  %v1251 = vsel %vm497, %v1248, 0
  %v1255 = vrot.slane %v1249, 4
  %v1256 = vrot.slane %v1250, 4
  %v1257 = vrot.slane %v1251, 4
  %1258 = vrot.lane.b32.xlu0 %v1255, 94
  %v1259 = vpop.permute.xlu0 %1258
  %1260 = vrot.lane.b32.xlu0 %v1256, 94
  %v1261 = vpop.permute.xlu0 %1260
  %1262 = vrot.lane.b32.xlu0 %v1257, 94
  %v1263 = vpop.permute.xlu0 %1262
  %v1264 = vsel %vm513, %v1259, %v1261
  %v1265 = vsel %vm513, %v1261, %v1263
  %v1268 = vld [vmem:[%s971 + $0x10] sm:$0x30]
  %v1269 = vsel %vm519, %v1264, %v1268
  %1270 = vst [vmem:[%s971 + $0x10] sm:$0x30] %v1269
  %v1271 = vld [vmem:[%s971 + $0x18] sm:$0x30]
  %v1272 = vsel %vm519, %v1265, %v1271
  %1273 = vst [vmem:[%s971 + $0x18] sm:$0x30] %v1272
  %v1274 = vld [vmem:[%s2] sm:$0xf]
  %v1275 = vld [vmem:[%s2 + $0x4] sm:$0xf]
  %v1276 = vld [vmem:[%s971] sm:$0xff]
  %v1277 = vld [vmem:[%s971 + $0x8] sm:$0xff]
  %v1278 = vld [vmem:[%s971 + $0x10] sm:$0x3f]
  %v1279 = vld [vmem:[%s971 + $0x18] sm:$0x3f]
  %v1280 = vld [vmem:[%s3] sm:$0xff]
  %v1281 = vld [vmem:[%s3 + $0x8] sm:$0xff]
  %1283 = vset.pattern.permute.xlu0 0
  %1284 = vperm.xlu0 %1283, %v1280
  %v1285 = vpop.permute.xlu0 %1284
  %1288 = vset.pattern.permute.xlu0 0
  %1289 = vperm.xlu0 %1288, %v1281
  %v1290 = vpop.permute.xlu0 %1289
  %v1294 = vunpack.c.l.b16 %v1274
  %v1295 = vunpack.c.l.b16 %v1275
  %v1296 = vpack.c.b16 %v1295, %v1294
  %v1298 = vsel %vm549, %v1296, 0
  %v1301 = vand.u32 %v1278, %v556
  %v1304 = vand.u32 %v1279, %v556
  %1306 = vmatprep.subr.bf16.mxu0 %v1277
  %1307 = vmatpush1.bf16.msra.mxu0 %v1276
  %1308 = vmatprep.subr.bf16.mxu0 %v1304
  %1309 = vmatpush1.bf16.msra.mxu0 %v1301
  %1310 = vmatprep.subr.bf16.mxu0 0
  %1311 = vmatpush1.bf16.msra.mxu0 0
  %1312 = vmatprep.subr.bf16.mxu0 0
  %1313 = vmatpush1.bf16.msra.mxu0 0
  %1314 = vmatprep.subr.bf16.mxu0 0
  %1315 = vmatpush1.bf16.msra.mxu0 0
  %1316 = vmatprep.subr.bf16.mxu0 0
  %1317 = vmatpush1.bf16.msra.mxu0 0
  %1318 = vmatprep.subr.bf16.mxu0 0
  %1319 = vmatpush1.bf16.msra.mxu0 0
  %1320 = vmatprep.subr.bf16.mxu0 0
  %1321 = vmatpush1.bf16.msra.mxu0 0
  %1322 = vmatprep.subr.bf16.mxu0 0
  %1323 = vmatpush1.bf16.msra.mxu0 0
  %1324 = vmatprep.subr.bf16.mxu0 0
  %1325 = vmatpush1.bf16.msra.mxu0 0
  %1326 = vmatprep.subr.bf16.mxu0 0
  %1327 = vmatpush1.bf16.msra.mxu0 0
  %1328 = vmatprep.subr.bf16.mxu0 0
  %1329 = vmatpush1.bf16.msra.mxu0 0
  %1330 = vmatprep.subr.bf16.mxu0 0
  %1331 = vmatpush1.bf16.msra.mxu0 0
  %1332 = vmatprep.subr.bf16.mxu0 0
  %1333 = vmatpush1.bf16.msra.mxu0 0
  %1334 = vmatprep.subr.bf16.mxu0 0
  %1335 = vmatpush1.bf16.msra.mxu0 0
  %1336 = vmatprep.subr.bf16.mxu0 0
  %1337 = vmatpush1.bf16.msra.mxu0 0
  %1338 = vmatprep.mubr.bf16.mxu0 0
  %1339 = vmatmul.mubr.bf16.gmra.mrb[0].mxu0 %v1298
  %v1340 = vpop.f32.mrb[0].mxu0
  %v1341 = vadd.f32 %v1285, %v1340
  %v1342 = vpop.f32.mrb[0].mxu0
  %v1343 = vadd.f32 %v1285, %v1342
  %v1344 = vpop.f32.mrb[0].mxu0
  %v1345 = vadd.f32 %v1290, %v1344
  %v1346 = vpop.f32.mrb[0].mxu0
  %v1347 = vadd.f32 %v1290, %v1346
  %1348 = vdwg.mxu0
  %v1349 = vmax.f32 %v1341, 0.0
  %v1350 = vmax.f32 %v1343, 0.0
  %v1351 = vmax.f32 %v1345, 0.0
  %v1352 = vmax.f32 %v1347, 0.0
  %v1353 = vpack.c.bf16 %v1351, %v1349
  %v1354 = vpack.c.bf16 %v1352, %v1350
  %1357 = vrot.lane.b32.xlu0 %v1353, 17
  %v1358 = vpop.permute.xlu0 %1357
  %1359 = vrot.lane.b32.xlu0 %v1354, 17
  %v1360 = vpop.permute.xlu0 %1359
  %v1361 = vsel %vm94, %v1358, %v1360
  %1365 = vst.msk [vmem:[%s957] sm:$0xff] %vm622, %v1358
  %1366 = vst [vmem:[%s957 + $0x8] sm:$0xff] %v1361
  %1367 = vst.msk [vmem:[%s957 + $0x10] sm:$0xff] %vm625, %v1360
  %v1368 = vld [vmem:[%s957] sm:$0xff]
  %v1369 = vld [vmem:[%s957 + $0x8] sm:$0xff]
  %v1370 = vsel %vm131, %v1368, 0
  %v1371 = vsel %vm132, %v1369, 0
  %1372 = vst [vmem:[%s971] sm:$0xff] %v1370
  %1373 = vst [vmem:[%s971 + $0x8] sm:$0xff] %v1371
  %v1374 = vld [vmem:[%s957] sm:$0xff]
  %v1375 = vld [vmem:[%s957 + $0x8] sm:$0xff]
  %v1376 = vld [vmem:[%s957 + $0x10] sm:$0xff]
  %1380 = vrot.lane.b32.xlu0 %v1374, 127
  %v1381 = vpop.permute.xlu0 %1380
  %1382 = vrot.lane.b32.xlu0 %v1375, 127
  %v1383 = vpop.permute.xlu0 %1382
  %1384 = vrot.lane.b32.xlu0 %v1376, 127
  %v1385 = vpop.permute.xlu0 %1384
  %v1386 = vsel %vm174, %v1381, %v1383
  %v1387 = vsel %vm174, %v1383, %v1385
  %1390 = vst [vmem:[%s971 + $0x10] sm:$0xff] %v1386
  %1391 = vst [vmem:[%s971 + $0x18] sm:$0xff] %v1387
  %v1392 = vld [vmem:[%s957] sm:$0xff]
  %v1393 = vld [vmem:[%s957 + $0x8] sm:$0xff]
  %v1394 = vld [vmem:[%s957 + $0x10] sm:$0xff]
  %v1395 = vsel %vm211, %v1392, 0
  %v1396 = vsel %vm212, %v1393, 0
  %v1397 = vsel %vm213, %v1394, 0
  %1401 = vrot.lane.b32.xlu0 %v1395, 126
  %v1402 = vpop.permute.xlu0 %1401
  %1403 = vrot.lane.b32.xlu0 %v1396, 126
  %v1404 = vpop.permute.xlu0 %1403
  %1405 = vrot.lane.b32.xlu0 %v1397, 126
  %v1406 = vpop.permute.xlu0 %1405
  %v1407 = vsel %vm229, %v1402, %v1404
  %v1408 = vsel %vm229, %v1404, %v1406
  %1411 = vst [vmem:[%s971 + $0x20] sm:$0xff] %v1407
  %1412 = vst [vmem:[%s971 + $0x28] sm:$0xff] %v1408
  %v1413 = vld [vmem:[%s957] sm:$0xff]
  %v1414 = vld [vmem:[%s957 + $0x8] sm:$0xff]
  %v1415 = vld [vmem:[%s957 + $0x10] sm:$0xff]
  %v1416 = vsel %vm252, %v1413, 0
  %v1417 = vsel %vm253, %v1414, 0
  %v1418 = vsel %vm254, %v1415, 0
  %1422 = vrot.lane.b32.xlu0 %v1416, 112
  %v1423 = vpop.permute.xlu0 %1422
  %1424 = vrot.lane.b32.xlu0 %v1417, 112
  %v1425 = vpop.permute.xlu0 %1424
  %1426 = vrot.lane.b32.xlu0 %v1418, 112
  %v1427 = vpop.permute.xlu0 %1426
  %v1428 = vsel %vm288, %v1423, %v1425
  %v1429 = vsel %vm288, %v1425, %v1427
  %1432 = vst [vmem:[%s971 + $0x30] sm:$0xff] %v1428
  %1433 = vst [vmem:[%s971 + $0x38] sm:$0xff] %v1429
  %v1434 = vld [vmem:[%s957] sm:$0xff]
  %v1435 = vld [vmem:[%s957 + $0x8] sm:$0xff]
  %v1436 = vld [vmem:[%s957 + $0x10] sm:$0xff]
  %1440 = vrot.lane.b32.xlu0 %v1434, 111
  %v1441 = vpop.permute.xlu0 %1440
  %1442 = vrot.lane.b32.xlu0 %v1435, 111
  %v1443 = vpop.permute.xlu0 %1442
  %1444 = vrot.lane.b32.xlu0 %v1436, 111
  %v1445 = vpop.permute.xlu0 %1444
  %v1446 = vsel %vm317, %v1441, %v1443
  %v1447 = vsel %vm317, %v1443, %v1445
  %1450 = vst [vmem:[%s971 + $0x40] sm:$0xff] %v1446
  %1451 = vst [vmem:[%s971 + $0x48] sm:$0xff] %v1447
  %v1452 = vld [vmem:[%s957] sm:$0xff]
  %v1453 = vld [vmem:[%s957 + $0x8] sm:$0xff]
  %v1454 = vld [vmem:[%s957 + $0x10] sm:$0xff]
  %v1455 = vsel %vm340, %v1452, 0
  %v1456 = vsel %vm341, %v1453, 0
  %v1457 = vsel %vm342, %v1454, 0
  %1461 = vrot.lane.b32.xlu0 %v1455, 110
  %v1462 = vpop.permute.xlu0 %1461
  %1463 = vrot.lane.b32.xlu0 %v1456, 110
  %v1464 = vpop.permute.xlu0 %1463
  %1465 = vrot.lane.b32.xlu0 %v1457, 110
  %v1466 = vpop.permute.xlu0 %1465
  %v1467 = vsel %vm379, %v1462, %v1464
  %v1468 = vsel %vm379, %v1464, %v1466
  %1471 = vst [vmem:[%s971 + $0x50] sm:$0xff] %v1467
  %1472 = vst [vmem:[%s971 + $0x58] sm:$0xff] %v1468
  %v1473 = vld [vmem:[%s957] sm:$0xff]
  %v1474 = vld [vmem:[%s957 + $0x8] sm:$0xff]
  %v1475 = vld [vmem:[%s957 + $0x10] sm:$0xff]
  %v1476 = vsel %vm408, %v1473, 0
  %v1477 = vsel %vm409, %v1474, 0
  %v1478 = vsel %vm410, %v1475, 0
  %1482 = vrot.lane.b32.xlu0 %v1476, 96
  %v1483 = vpop.permute.xlu0 %1482
  %1484 = vrot.lane.b32.xlu0 %v1477, 96
  %v1485 = vpop.permute.xlu0 %1484
  %1486 = vrot.lane.b32.xlu0 %v1478, 96
  %v1487 = vpop.permute.xlu0 %1486
  %v1488 = vsel %vm426, %v1483, %v1485
  %v1489 = vsel %vm426, %v1485, %v1487
  %1492 = vst [vmem:[%s971 + $0x60] sm:$0xff] %v1488
  %1493 = vst [vmem:[%s971 + $0x68] sm:$0xff] %v1489
  %v1494 = vld [vmem:[%s957] sm:$0xff]
  %v1495 = vld [vmem:[%s957 + $0x8] sm:$0xff]
  %v1496 = vld [vmem:[%s957 + $0x10] sm:$0xff]
  %1500 = vrot.lane.b32.xlu0 %v1494, 95
  %v1501 = vpop.permute.xlu0 %1500
  %1502 = vrot.lane.b32.xlu0 %v1495, 95
  %v1503 = vpop.permute.xlu0 %1502
  %1504 = vrot.lane.b32.xlu0 %v1496, 95
  %v1505 = vpop.permute.xlu0 %1504
  %v1506 = vsel %vm472, %v1501, %v1503
  %v1507 = vsel %vm472, %v1503, %v1505
  %1510 = vst [vmem:[%s971 + $0x70] sm:$0xff] %v1506
  %1511 = vst [vmem:[%s971 + $0x78] sm:$0xff] %v1507
  %v1512 = vld [vmem:[%s957] sm:$0xff]
  %v1513 = vld [vmem:[%s957 + $0x8] sm:$0xff]
  %v1514 = vld [vmem:[%s957 + $0x10] sm:$0xff]
  %v1515 = vsel %vm495, %v1512, 0
  %v1516 = vsel %vm496, %v1513, 0
  %v1517 = vsel %vm497, %v1514, 0
  %1521 = vrot.lane.b32.xlu0 %v1515, 94
  %v1522 = vpop.permute.xlu0 %1521
  %1523 = vrot.lane.b32.xlu0 %v1516, 94
  %v1524 = vpop.permute.xlu0 %1523
  %1525 = vrot.lane.b32.xlu0 %v1517, 94
  %v1526 = vpop.permute.xlu0 %1525
  %v1527 = vsel %vm513, %v1522, %v1524
  %v1528 = vsel %vm513, %v1524, %v1526
  %1531 = vst [vmem:[%s971 + $0x80] sm:$0xff] %v1527
  %1532 = vst [vmem:[%s971 + $0x88] sm:$0xff] %v1528
  %v1533 = vld [vmem:[%s4] sm:$0xff]
  %v1534 = vld [vmem:[%s4 + $0x8] sm:$0xff]
  %v1535 = vld [vmem:[%s4 + $0x10] sm:$0xff]
  %v1536 = vld [vmem:[%s4 + $0x18] sm:$0xff]
  %v1537 = vld [vmem:[%s971] sm:$0xff]
  %v1538 = vld [vmem:[%s971 + $0x8] sm:$0xff]
  %v1539 = vld [vmem:[%s971 + $0x10] sm:$0xff]
  %v1540 = vld [vmem:[%s971 + $0x18] sm:$0xff]
  %v1541 = vld [vmem:[%s971 + $0x20] sm:$0xff]
  %v1542 = vld [vmem:[%s971 + $0x28] sm:$0xff]
  %v1543 = vld [vmem:[%s971 + $0x30] sm:$0xff]
  %v1544 = vld [vmem:[%s971 + $0x38] sm:$0xff]
  %v1545 = vld [vmem:[%s971 + $0x40] sm:$0xff]
  %v1546 = vld [vmem:[%s971 + $0x48] sm:$0xff]
  %v1547 = vld [vmem:[%s971 + $0x50] sm:$0xff]
  %v1548 = vld [vmem:[%s971 + $0x58] sm:$0xff]
  %v1549 = vld [vmem:[%s971 + $0x60] sm:$0xff]
  %v1550 = vld [vmem:[%s971 + $0x68] sm:$0xff]
  %v1551 = vld [vmem:[%s971 + $0x70] sm:$0xff]
  %v1552 = vld [vmem:[%s971 + $0x78] sm:$0xff]
  %v1553 = vld [vmem:[%s971 + $0x80] sm:$0xff]
  %v1554 = vld [vmem:[%s971 + $0x88] sm:$0xff]
  %v1555 = vld [vmem:[%s5] sm:$0xff]
  %v1556 = vld [vmem:[%s5 + $0x8] sm:$0xff]
  %v1557 = vld [vmem:[%s5 + $0x10] sm:$0xff]
  %v1558 = vld [vmem:[%s5 + $0x18] sm:$0xff]
  %1560 = vset.pattern.permute.xlu0 0
  %1561 = vperm.xlu0 %1560, %v1555
  %v1562 = vpop.permute.xlu0 %1561
  %1565 = vset.pattern.permute.xlu0 0
  %1566 = vperm.xlu0 %1565, %v1556
  %v1567 = vpop.permute.xlu0 %1566
  %1570 = vset.pattern.permute.xlu0 0
  %1571 = vperm.xlu0 %1570, %v1557
  %v1572 = vpop.permute.xlu0 %1571
  %1575 = vset.pattern.permute.xlu0 0
  %1576 = vperm.xlu0 %1575, %v1558
  %v1577 = vpop.permute.xlu0 %1576
  %v1583 = vunpack.c.l.b16 %v1533
  %v1584 = vunpack.c.h.b16 %v1533
  %v1585 = vunpack.c.l.b16 %v1534
  %v1586 = vunpack.c.h.b16 %v1534
  %v1587 = vunpack.c.l.b16 %v1535
  %v1588 = vunpack.c.h.b16 %v1535
  %v1589 = vunpack.c.l.b16 %v1536
  %v1590 = vunpack.c.h.b16 %v1536
  %v1591 = vpack.c.b16 %v1585, %v1583
  %v1592 = vpack.c.b16 %v1586, %v1584
  %v1593 = vpack.c.b16 %v1589, %v1587
  %v1594 = vpack.c.b16 %v1590, %v1588
  %v1598 = vsel %vm856, %v1592, 0
  %v1601 = vsel %vm856, %v1594, 0
  %1603 = vmatprep.subr.bf16.mxu0 %v1538
  %1604 = vmatpush1.bf16.msra.mxu0 %v1537
  %1605 = vmatprep.subr.bf16.mxu0 %v1540
  %1606 = vmatpush1.bf16.msra.mxu0 %v1539
  %1607 = vmatprep.subr.bf16.mxu0 %v1542
  %1608 = vmatpush1.bf16.msra.mxu0 %v1541
  %1609 = vmatprep.subr.bf16.mxu0 %v1544
  %1610 = vmatpush1.bf16.msra.mxu0 %v1543
  %1611 = vmatprep.subr.bf16.mxu0 %v1546
  %1612 = vmatpush1.bf16.msra.mxu0 %v1545
  %1613 = vmatprep.subr.bf16.mxu0 %v1548
  %1614 = vmatpush1.bf16.msra.mxu0 %v1547
  %1615 = vmatprep.subr.bf16.mxu0 %v1550
  %1616 = vmatpush1.bf16.msra.mxu0 %v1549
  %1617 = vmatprep.subr.bf16.mxu0 %v1552
  %1618 = vmatpush1.bf16.msra.mxu0 %v1551
  %1619 = vmatprep.subr.bf16.mxu0 %v1554
  %1620 = vmatpush1.bf16.msra.mxu0 %v1553
  %1621 = vmatprep.subr.bf16.mxu0 0
  %1622 = vmatpush1.bf16.msra.mxu0 0
  %1623 = vmatprep.subr.bf16.mxu0 0
  %1624 = vmatpush1.bf16.msra.mxu0 0
  %1625 = vmatprep.subr.bf16.mxu0 0
  %1626 = vmatpush1.bf16.msra.mxu0 0
  %1627 = vmatprep.subr.bf16.mxu0 0
  %1628 = vmatpush1.bf16.msra.mxu0 0
  %1629 = vmatprep.subr.bf16.mxu0 0
  %1630 = vmatpush1.bf16.msra.mxu0 0
  %1631 = vmatprep.subr.bf16.mxu0 0
  %1632 = vmatpush1.bf16.msra.mxu0 0
  %1633 = vmatprep.subr.bf16.mxu0 0
  %1634 = vmatpush1.bf16.msra.mxu0 0
  %1635 = vmatprep.mubr.bf16.mxu0 %v1598
  %1636 = vmatmul.mubr.bf16.gmra.mrb[0].mxu0 %v1591
  %v1637 = vpop.f32.mrb[0].mxu0
  %v1638 = vadd.f32 %v1562, %v1637
  %v1639 = vpop.f32.mrb[0].mxu0
  %v1640 = vadd.f32 %v1562, %v1639
  %v1641 = vpop.f32.mrb[0].mxu0
  %v1642 = vadd.f32 %v1567, %v1641
  %v1643 = vpop.f32.mrb[0].mxu0
  %v1644 = vadd.f32 %v1567, %v1643
  %1645 = vmatprep.mubr.bf16.mxu0 %v1601
  %1646 = vmatmul.mubr.bf16.gmra.mrb[0].mxu0 %v1593
  %v1647 = vpop.f32.mrb[0].mxu0
  %v1648 = vadd.f32 %v1572, %v1647
  %v1649 = vpop.f32.mrb[0].mxu0
  %v1650 = vadd.f32 %v1572, %v1649
  %v1651 = vpop.f32.mrb[0].mxu0
  %v1652 = vadd.f32 %v1577, %v1651
  %v1653 = vpop.f32.mrb[0].mxu0
  %v1654 = vadd.f32 %v1577, %v1653
  %1655 = vdwg.mxu0
  %v1656 = vmax.f32 %v1638, 0.0
  %v1657 = vmax.f32 %v1640, 0.0
  %v1658 = vmax.f32 %v1642, 0.0
  %v1659 = vmax.f32 %v1644, 0.0
  %v1660 = vmax.f32 %v1648, 0.0
  %v1661 = vmax.f32 %v1650, 0.0
  %v1662 = vmax.f32 %v1652, 0.0
  %v1663 = vmax.f32 %v1654, 0.0
  %v1664 = vadd.f32 %v1656, %v1657
  %1665 = vadd.xlane.f32.xlu0 %v1664
  %v1666 = vpop.xlane.xlu0 %1665
  %v1667 = vadd.f32 %v1658, %v1659
  %1668 = vadd.xlane.f32.xlu0 %v1667
  %v1669 = vpop.xlane.xlu0 %1668
  %v1670 = vadd.f32 %v1660, %v1661
  %1671 = vadd.xlane.f32.xlu0 %v1670
  %v1672 = vpop.xlane.xlu0 %1671
  %v1673 = vadd.f32 %v1662, %v1663
  %1674 = vadd.xlane.f32.xlu0 %v1673
  %v1675 = vpop.xlane.xlu0 %1674
  %v1676 = vmul.f32 %v1666, 0.00390625
  %v1677 = vmul.f32 %v1669, 0.00390625
  %v1678 = vmul.f32 %v1672, 0.00390625
  %v1679 = vmul.f32 %v1675, 0.00390625
  %vm1680 = vcmask 7168
  %v1681 = vsel %vm1680, %v936, %v1676
  %v1682 = vsel %vm1680, %v937, %v1677
  %v1683 = vsel %vm1680, %v938, %v1678
  %v1684 = vsel %vm1680, %v939, %v1679
  %v1685 = vld [vmem:[%s1] sm:$0x77]
  %v1687 = vcombine.high %v1685, %v1685
  %v1689 = vpack.c.bf16 %v1685, %v1685
  %v1690 = vpack.c.bf16 %v1687, %v1687
  %1693 = vrot.lane.b32.xlu0 %v1689, 17
  %v1694 = vpop.permute.xlu0 %1693
  %1695 = vrot.lane.b32.xlu0 %v1690, 17
  %v1696 = vpop.permute.xlu0 %1695
  %v1697 = vsel %vm94, %v1694, %v1696
  %v1701 = vld [vmem:[#allocation2] sm:$0x3]
  %v1702 = vsel %vm101, %v1694, %v1701
  %1703 = vst [vmem:[#allocation2] sm:$0x3] %v1702
  %v1704 = vld [vmem:[#allocation2 + $0x8] sm:$0x3]
  %v1705 = vsel %vm106, %v1697, %v1704
  %1706 = vst [vmem:[#allocation2 + $0x8] sm:$0x3] %v1705
  %v1707 = vld [vmem:[#allocation2 + $0x10] sm:$0x3]
  %v1708 = vsel %vm111, %v1696, %v1707
  %1709 = vst [vmem:[#allocation2 + $0x10] sm:$0x3] %v1708
  %v1710 = vld [vmem:[#allocation2] sm:$0x3]
  %v1711 = vld [vmem:[#allocation2 + $0x8] sm:$0x3]
  %v1712 = vsel %vm131, %v1710, 0
  %v1713 = vsel %vm132, %v1711, 0
  %v1714 = vld [vmem:[#allocation3] sm:$0x3]
  %v1715 = vsel %vm106, %v1712, %v1714
  %1716 = vst [vmem:[#allocation3] sm:$0x3] %v1715
  %v1717 = vld [vmem:[#allocation3 + $0x8] sm:$0x3]
  %v1718 = vsel %vm106, %v1713, %v1717
  %1719 = vst [vmem:[#allocation3 + $0x8] sm:$0x3] %v1718
  %v1720 = vld [vmem:[#allocation2] sm:$0x3]
  %v1721 = vld [vmem:[#allocation2 + $0x8] sm:$0x3]
  %v1722 = vld [vmem:[#allocation2 + $0x10] sm:$0x3]
  %v1724 = vshrl.u32 %v1720, 16
  %v1726 = vrot.slane %v1724, 6
  %v1727 = vshll.u32 %v1720, 16
  %v1729 = vrot.slane %v1727, 7
  %v1730 = vor.u32 %v1726, %v1729
  %v1732 = vshrl.u32 %v1721, 16
  %v1734 = vrot.slane %v1732, 6
  %v1735 = vshll.u32 %v1721, 16
  %v1737 = vrot.slane %v1735, 7
  %v1738 = vor.u32 %v1734, %v1737
  %v1740 = vshrl.u32 %v1722, 16
  %v1742 = vrot.slane %v1740, 6
  %v1743 = vshll.u32 %v1722, 16
  %v1745 = vrot.slane %v1743, 7
  %v1746 = vor.u32 %v1742, %v1745
  %1747 = vrot.lane.b32.xlu0 %v1730, 127
  %v1748 = vpop.permute.xlu0 %1747
  %1749 = vrot.lane.b32.xlu0 %v1738, 127
  %v1750 = vpop.permute.xlu0 %1749
  %1751 = vrot.lane.b32.xlu0 %v1746, 127
  %v1752 = vpop.permute.xlu0 %1751
  %v1753 = vsel %vm174, %v1748, %v1750
  %v1754 = vsel %vm174, %v1750, %v1752
  %v1757 = vld [vmem:[#allocation3] sm:$0x6]
  %v1758 = vsel %vm181, %v1753, %v1757
  %1759 = vst [vmem:[#allocation3] sm:$0x6] %v1758
  %v1760 = vld [vmem:[#allocation3 + $0x8] sm:$0x6]
  %v1761 = vsel %vm181, %v1754, %v1760
  %1762 = vst [vmem:[#allocation3 + $0x8] sm:$0x6] %v1761
  %v1763 = vld [vmem:[#allocation2] sm:$0x3]
  %v1764 = vld [vmem:[#allocation2 + $0x8] sm:$0x3]
  %v1765 = vld [vmem:[#allocation2 + $0x10] sm:$0x3]
  %v1766 = vsel %vm211, %v1763, 0
  %v1767 = vsel %vm212, %v1764, 0
  %v1768 = vsel %vm213, %v1765, 0
  %v1772 = vrot.slane %v1766, 5
  %v1773 = vrot.slane %v1767, 5
  %v1774 = vrot.slane %v1768, 5
  %1775 = vrot.lane.b32.xlu0 %v1772, 126
  %v1776 = vpop.permute.xlu0 %1775
  %1777 = vrot.lane.b32.xlu0 %v1773, 126
  %v1778 = vpop.permute.xlu0 %1777
  %1779 = vrot.lane.b32.xlu0 %v1774, 126
  %v1780 = vpop.permute.xlu0 %1779
  %v1781 = vsel %vm229, %v1776, %v1778
  %v1782 = vsel %vm229, %v1778, %v1780
  %v1785 = vld [vmem:[#allocation3] sm:$0x18]
  %v1786 = vsel %vm236, %v1781, %v1785
  %1787 = vst [vmem:[#allocation3] sm:$0x18] %v1786
  %v1788 = vld [vmem:[#allocation3 + $0x8] sm:$0x18]
  %v1789 = vsel %vm236, %v1782, %v1788
  %1790 = vst [vmem:[#allocation3 + $0x8] sm:$0x18] %v1789
  %v1791 = vld [vmem:[#allocation2] sm:$0x3]
  %v1792 = vld [vmem:[#allocation2 + $0x8] sm:$0x3]
  %v1793 = vld [vmem:[#allocation2 + $0x10] sm:$0x3]
  %v1794 = vsel %vm252, %v1791, 0
  %v1795 = vsel %vm253, %v1792, 0
  %v1796 = vsel %vm254, %v1793, 0
  %v1798 = vshrl.u32 %v1794, 16
  %v1800 = vrot.slane %v1798, 3
  %v1801 = vshll.u32 %v1794, 16
  %v1803 = vrot.slane %v1801, 4
  %v1804 = vor.u32 %v1800, %v1803
  %v1806 = vshrl.u32 %v1795, 16
  %v1808 = vrot.slane %v1806, 3
  %v1809 = vshll.u32 %v1795, 16
  %v1811 = vrot.slane %v1809, 4
  %v1812 = vor.u32 %v1808, %v1811
  %v1814 = vshrl.u32 %v1796, 16
  %v1816 = vrot.slane %v1814, 3
  %v1817 = vshll.u32 %v1796, 16
  %v1819 = vrot.slane %v1817, 4
  %v1820 = vor.u32 %v1816, %v1819
  %1821 = vrot.lane.b32.xlu0 %v1804, 112
  %v1822 = vpop.permute.xlu0 %1821
  %1823 = vrot.lane.b32.xlu0 %v1812, 112
  %v1824 = vpop.permute.xlu0 %1823
  %1825 = vrot.lane.b32.xlu0 %v1820, 112
  %v1826 = vpop.permute.xlu0 %1825
  %v1827 = vsel %vm288, %v1822, %v1824
  %v1828 = vsel %vm288, %v1824, %v1826
  %v1831 = vld [vmem:[#allocation3] sm:$0x30]
  %v1832 = vsel %vm295, %v1827, %v1831
  %1833 = vst [vmem:[#allocation3] sm:$0x30] %v1832
  %v1834 = vld [vmem:[#allocation3 + $0x8] sm:$0x30]
  %v1835 = vsel %vm295, %v1828, %v1834
  %1836 = vst [vmem:[#allocation3 + $0x8] sm:$0x30] %v1835
  %v1837 = vld [vmem:[#allocation2] sm:$0x3]
  %v1838 = vld [vmem:[#allocation2 + $0x8] sm:$0x3]
  %v1839 = vld [vmem:[#allocation2 + $0x10] sm:$0x3]
  %v1843 = vrot.slane %v1837, 2
  %v1844 = vrot.slane %v1838, 2
  %v1845 = vrot.slane %v1839, 2
  %1846 = vrot.lane.b32.xlu0 %v1843, 111
  %v1847 = vpop.permute.xlu0 %1846
  %1848 = vrot.lane.b32.xlu0 %v1844, 111
  %v1849 = vpop.permute.xlu0 %1848
  %1850 = vrot.lane.b32.xlu0 %v1845, 111
  %v1851 = vpop.permute.xlu0 %1850
  %v1852 = vsel %vm317, %v1847, %v1849
  %v1853 = vsel %vm317, %v1849, %v1851
  %v1856 = vld [vmem:[#allocation3] sm:$0xc0]
  %v1857 = vsel %vm324, %v1852, %v1856
  %1858 = vst [vmem:[#allocation3] sm:$0xc0] %v1857
  %v1859 = vld [vmem:[#allocation3 + $0x8] sm:$0xc0]
  %v1860 = vsel %vm324, %v1853, %v1859
  %1861 = vst [vmem:[#allocation3 + $0x8] sm:$0xc0] %v1860
  %v1862 = vld [vmem:[#allocation2] sm:$0x3]
  %v1863 = vld [vmem:[#allocation2 + $0x8] sm:$0x3]
  %v1864 = vld [vmem:[#allocation2 + $0x10] sm:$0x3]
  %v1865 = vsel %vm340, %v1862, 0
  %v1866 = vsel %vm341, %v1863, 0
  %v1867 = vsel %vm342, %v1864, 0
  %v1869 = vshll.u32 %v1865, 16
  %v1871 = vrot.slane %v1869, 1
  %v1873 = vshll.u32 %v1866, 16
  %v1875 = vrot.slane %v1873, 1
  %v1877 = vshll.u32 %v1867, 16
  %v1879 = vrot.slane %v1877, 1
  %v1880 = vshrl.u32 %v1865, 16
  %v1882 = vor.u32 %v1880, %v1871
  %v1883 = vshrl.u32 %v1866, 16
  %v1885 = vor.u32 %v1883, %v1875
  %v1886 = vshrl.u32 %v1867, 16
  %v1888 = vor.u32 %v1886, %v1879
  %1889 = vrot.lane.b32.xlu0 %v1871, 110
  %v1890 = vpop.permute.xlu0 %1889
  %1891 = vrot.lane.b32.xlu0 %v1875, 110
  %v1892 = vpop.permute.xlu0 %1891
  %1893 = vrot.lane.b32.xlu0 %v1879, 110
  %v1894 = vpop.permute.xlu0 %1893
  %1895 = vrot.lane.b32.xlu0 %v1882, 110
  %v1896 = vpop.permute.xlu0 %1895
  %1897 = vrot.lane.b32.xlu0 %v1885, 110
  %v1898 = vpop.permute.xlu0 %1897
  %1899 = vrot.lane.b32.xlu0 %v1888, 110
  %v1900 = vpop.permute.xlu0 %1899
  %v1901 = vsel %vm379, %v1890, %v1892
  %v1902 = vsel %vm379, %v1892, %v1894
  %v1903 = vsel %vm379, %v1896, %v1898
  %v1904 = vsel %vm379, %v1898, %v1900
  %v1909 = vld [vmem:[#allocation3] sm:$0x80]
  %v1910 = vsel %vm390, %v1901, %v1909
  %1911 = vst [vmem:[#allocation3] sm:$0x80] %v1910
  %v1912 = vld [vmem:[#allocation3 + $0x8] sm:$0x80]
  %v1913 = vsel %vm390, %v1902, %v1912
  %1914 = vst [vmem:[#allocation3 + $0x8] sm:$0x80] %v1913
  %1915 = vst [vmem:[#allocation3 + $0x10] sm:$0x1] %v1903
  %1916 = vst [vmem:[#allocation3 + $0x18] sm:$0x1] %v1904
  %v1917 = vld [vmem:[#allocation2] sm:$0x3]
  %v1918 = vld [vmem:[#allocation2 + $0x8] sm:$0x3]
  %v1919 = vld [vmem:[#allocation2 + $0x10] sm:$0x3]
  %v1920 = vsel %vm408, %v1917, 0
  %v1921 = vsel %vm409, %v1918, 0
  %v1922 = vsel %vm410, %v1919, 0
  %v1926 = vrot.slane %v1920, 7
  %v1927 = vrot.slane %v1921, 7
  %v1928 = vrot.slane %v1922, 7
  %1929 = vrot.lane.b32.xlu0 %v1926, 96
  %v1930 = vpop.permute.xlu0 %1929
  %1931 = vrot.lane.b32.xlu0 %v1927, 96
  %v1932 = vpop.permute.xlu0 %1931
  %1933 = vrot.lane.b32.xlu0 %v1928, 96
  %v1934 = vpop.permute.xlu0 %1933
  %v1935 = vsel %vm426, %v1930, %v1932
  %v1936 = vsel %vm426, %v1932, %v1934
  %v1939 = vld [vmem:[#allocation3 + $0x10] sm:$0x6]
  %v1940 = vsel %vm432, %v1935, %v1939
  %1941 = vst [vmem:[#allocation3 + $0x10] sm:$0x6] %v1940
  %v1942 = vld [vmem:[#allocation3 + $0x18] sm:$0x6]
  %v1943 = vsel %vm432, %v1936, %v1942
  %1944 = vst [vmem:[#allocation3 + $0x18] sm:$0x6] %v1943
  %v1945 = vld [vmem:[#allocation2] sm:$0x3]
  %v1946 = vld [vmem:[#allocation2 + $0x8] sm:$0x3]
  %v1947 = vld [vmem:[#allocation2 + $0x10] sm:$0x3]
  %v1949 = vshrl.u32 %v1945, 16
  %v1951 = vrot.slane %v1949, 5
  %v1952 = vshll.u32 %v1945, 16
  %v1954 = vrot.slane %v1952, 6
  %v1955 = vor.u32 %v1951, %v1954
  %v1957 = vshrl.u32 %v1946, 16
  %v1959 = vrot.slane %v1957, 5
  %v1960 = vshll.u32 %v1946, 16
  %v1962 = vrot.slane %v1960, 6
  %v1963 = vor.u32 %v1959, %v1962
  %v1965 = vshrl.u32 %v1947, 16
  %v1967 = vrot.slane %v1965, 5
  %v1968 = vshll.u32 %v1947, 16
  %v1970 = vrot.slane %v1968, 6
  %v1971 = vor.u32 %v1967, %v1970
  %1972 = vrot.lane.b32.xlu0 %v1955, 95
  %v1973 = vpop.permute.xlu0 %1972
  %1974 = vrot.lane.b32.xlu0 %v1963, 95
  %v1975 = vpop.permute.xlu0 %1974
  %1976 = vrot.lane.b32.xlu0 %v1971, 95
  %v1977 = vpop.permute.xlu0 %1976
  %v1978 = vsel %vm472, %v1973, %v1975
  %v1979 = vsel %vm472, %v1975, %v1977
  %v1982 = vld [vmem:[#allocation3 + $0x10] sm:$0xc]
  %v1983 = vsel %vm479, %v1978, %v1982
  %1984 = vst [vmem:[#allocation3 + $0x10] sm:$0xc] %v1983
  %v1985 = vld [vmem:[#allocation3 + $0x18] sm:$0xc]
  %v1986 = vsel %vm479, %v1979, %v1985
  %1987 = vst [vmem:[#allocation3 + $0x18] sm:$0xc] %v1986
  %v1988 = vld [vmem:[#allocation2] sm:$0x3]
  %v1989 = vld [vmem:[#allocation2 + $0x8] sm:$0x3]
  %v1990 = vld [vmem:[#allocation2 + $0x10] sm:$0x3]
  %v1991 = vsel %vm495, %v1988, 0
  %v1992 = vsel %vm496, %v1989, 0
  %v1993 = vsel %vm497, %v1990, 0
  %v1997 = vrot.slane %v1991, 4
  %v1998 = vrot.slane %v1992, 4
  %v1999 = vrot.slane %v1993, 4
  %2000 = vrot.lane.b32.xlu0 %v1997, 94
  %v2001 = vpop.permute.xlu0 %2000
  %2002 = vrot.lane.b32.xlu0 %v1998, 94
  %v2003 = vpop.permute.xlu0 %2002
  %2004 = vrot.lane.b32.xlu0 %v1999, 94
  %v2005 = vpop.permute.xlu0 %2004
  %v2006 = vsel %vm513, %v2001, %v2003
  %v2007 = vsel %vm513, %v2003, %v2005
  %v2010 = vld [vmem:[#allocation3 + $0x10] sm:$0x30]
  %v2011 = vsel %vm519, %v2006, %v2010
  %2012 = vst [vmem:[#allocation3 + $0x10] sm:$0x30] %v2011
  %v2013 = vld [vmem:[#allocation3 + $0x18] sm:$0x30]
  %v2014 = vsel %vm519, %v2007, %v2013
  %2015 = vst [vmem:[#allocation3 + $0x18] sm:$0x30] %v2014
  %v2016 = vld [vmem:[%s6] sm:$0xf]
  %v2017 = vld [vmem:[%s6 + $0x4] sm:$0xf]
  %v2018 = vld [vmem:[#allocation3] sm:$0xff]
  %v2019 = vld [vmem:[#allocation3 + $0x8] sm:$0xff]
  %v2020 = vld [vmem:[#allocation3 + $0x10] sm:$0x3f]
  %v2021 = vld [vmem:[#allocation3 + $0x18] sm:$0x3f]
  %v2022 = vld [vmem:[%s7] sm:$0xff]
  %v2023 = vld [vmem:[%s7 + $0x8] sm:$0xff]
  %2025 = vset.pattern.permute.xlu0 0
  %2026 = vperm.xlu0 %2025, %v2022
  %v2027 = vpop.permute.xlu0 %2026
  %2030 = vset.pattern.permute.xlu0 0
  %2031 = vperm.xlu0 %2030, %v2023
  %v2032 = vpop.permute.xlu0 %2031
  %v2036 = vunpack.c.l.b16 %v2016
  %v2037 = vunpack.c.l.b16 %v2017
  %v2038 = vpack.c.b16 %v2037, %v2036
  %v2040 = vsel %vm549, %v2038, 0
  %v2043 = vand.u32 %v2020, %v556
  %v2046 = vand.u32 %v2021, %v556
  %2048 = vmatprep.subr.bf16.mxu0 %v2019
  %2049 = vmatpush1.bf16.msra.mxu0 %v2018
  %2050 = vmatprep.subr.bf16.mxu0 %v2046
  %2051 = vmatpush1.bf16.msra.mxu0 %v2043
  %2052 = vmatprep.subr.bf16.mxu0 0
  %2053 = vmatpush1.bf16.msra.mxu0 0
  %2054 = vmatprep.subr.bf16.mxu0 0
  %2055 = vmatpush1.bf16.msra.mxu0 0
  %2056 = vmatprep.subr.bf16.mxu0 0
  %2057 = vmatpush1.bf16.msra.mxu0 0
  %2058 = vmatprep.subr.bf16.mxu0 0
  %2059 = vmatpush1.bf16.msra.mxu0 0
  %2060 = vmatprep.subr.bf16.mxu0 0
  %2061 = vmatpush1.bf16.msra.mxu0 0
  %2062 = vmatprep.subr.bf16.mxu0 0
  %2063 = vmatpush1.bf16.msra.mxu0 0
  %2064 = vmatprep.subr.bf16.mxu0 0
  %2065 = vmatpush1.bf16.msra.mxu0 0
  %2066 = vmatprep.subr.bf16.mxu0 0
  %2067 = vmatpush1.bf16.msra.mxu0 0
  %2068 = vmatprep.subr.bf16.mxu0 0
  %2069 = vmatpush1.bf16.msra.mxu0 0
  %2070 = vmatprep.subr.bf16.mxu0 0
  %2071 = vmatpush1.bf16.msra.mxu0 0
  %2072 = vmatprep.subr.bf16.mxu0 0
  %2073 = vmatpush1.bf16.msra.mxu0 0
  %2074 = vmatprep.subr.bf16.mxu0 0
  %2075 = vmatpush1.bf16.msra.mxu0 0
  %2076 = vmatprep.subr.bf16.mxu0 0
  %2077 = vmatpush1.bf16.msra.mxu0 0
  %2078 = vmatprep.subr.bf16.mxu0 0
  %2079 = vmatpush1.bf16.msra.mxu0 0
  %2080 = vmatprep.mubr.bf16.mxu0 0
  %2081 = vmatmul.mubr.bf16.gmra.mrb[0].mxu0 %v2040
  %v2082 = vpop.f32.mrb[0].mxu0
  %v2083 = vadd.f32 %v2027, %v2082
  %v2084 = vpop.f32.mrb[0].mxu0
  %v2085 = vadd.f32 %v2027, %v2084
  %v2086 = vpop.f32.mrb[0].mxu0
  %v2087 = vadd.f32 %v2032, %v2086
  %v2088 = vpop.f32.mrb[0].mxu0
  %v2089 = vadd.f32 %v2032, %v2088
  %2090 = vdwg.mxu0
  %v2091 = vmax.f32 %v2083, 0.0
  %v2092 = vmax.f32 %v2085, 0.0
  %v2093 = vmax.f32 %v2087, 0.0
  %v2094 = vmax.f32 %v2089, 0.0
  %v2095 = vpack.c.bf16 %v2093, %v2091
  %v2096 = vpack.c.bf16 %v2094, %v2092
  %2099 = vrot.lane.b32.xlu0 %v2095, 17
  %v2100 = vpop.permute.xlu0 %2099
  %2101 = vrot.lane.b32.xlu0 %v2096, 17
  %v2102 = vpop.permute.xlu0 %2101
  %v2103 = vsel %vm94, %v2100, %v2102
  %2107 = vst.msk [vmem:[#allocation2] sm:$0xff] %vm622, %v2100
  %2108 = vst [vmem:[#allocation2 + $0x8] sm:$0xff] %v2103
  %2109 = vst.msk [vmem:[#allocation2 + $0x10] sm:$0xff] %vm625, %v2102
  %v2110 = vld [vmem:[#allocation2] sm:$0xff]
  %v2111 = vld [vmem:[#allocation2 + $0x8] sm:$0xff]
  %v2112 = vsel %vm131, %v2110, 0
  %v2113 = vsel %vm132, %v2111, 0
  %2114 = vst [vmem:[#allocation3] sm:$0xff] %v2112
  %2115 = vst [vmem:[#allocation3 + $0x8] sm:$0xff] %v2113
  %v2116 = vld [vmem:[#allocation2] sm:$0xff]
  %v2117 = vld [vmem:[#allocation2 + $0x8] sm:$0xff]
  %v2118 = vld [vmem:[#allocation2 + $0x10] sm:$0xff]
  %2122 = vrot.lane.b32.xlu0 %v2116, 127
  %v2123 = vpop.permute.xlu0 %2122
  %2124 = vrot.lane.b32.xlu0 %v2117, 127
  %v2125 = vpop.permute.xlu0 %2124
  %2126 = vrot.lane.b32.xlu0 %v2118, 127
  %v2127 = vpop.permute.xlu0 %2126
  %v2128 = vsel %vm174, %v2123, %v2125
  %v2129 = vsel %vm174, %v2125, %v2127
  %2132 = vst [vmem:[#allocation3 + $0x10] sm:$0xff] %v2128
  %2133 = vst [vmem:[#allocation3 + $0x18] sm:$0xff] %v2129
  %v2134 = vld [vmem:[#allocation2] sm:$0xff]
  %v2135 = vld [vmem:[#allocation2 + $0x8] sm:$0xff]
  %v2136 = vld [vmem:[#allocation2 + $0x10] sm:$0xff]
  %v2137 = vsel %vm211, %v2134, 0
  %v2138 = vsel %vm212, %v2135, 0
  %v2139 = vsel %vm213, %v2136, 0
  %2143 = vrot.lane.b32.xlu0 %v2137, 126
  %v2144 = vpop.permute.xlu0 %2143
  %2145 = vrot.lane.b32.xlu0 %v2138, 126
  %v2146 = vpop.permute.xlu0 %2145
  %2147 = vrot.lane.b32.xlu0 %v2139, 126
  %v2148 = vpop.permute.xlu0 %2147
  %v2149 = vsel %vm229, %v2144, %v2146
  %v2150 = vsel %vm229, %v2146, %v2148
  %2153 = vst [vmem:[#allocation3 + $0x20] sm:$0xff] %v2149
  %2154 = vst [vmem:[#allocation3 + $0x28] sm:$0xff] %v2150
  %v2155 = vld [vmem:[#allocation2] sm:$0xff]
  %v2156 = vld [vmem:[#allocation2 + $0x8] sm:$0xff]
  %v2157 = vld [vmem:[#allocation2 + $0x10] sm:$0xff]
  %v2158 = vsel %vm252, %v2155, 0
  %v2159 = vsel %vm253, %v2156, 0
  %v2160 = vsel %vm254, %v2157, 0
  %2164 = vrot.lane.b32.xlu0 %v2158, 112
  %v2165 = vpop.permute.xlu0 %2164
  %2166 = vrot.lane.b32.xlu0 %v2159, 112
  %v2167 = vpop.permute.xlu0 %2166
  %2168 = vrot.lane.b32.xlu0 %v2160, 112
  %v2169 = vpop.permute.xlu0 %2168
  %v2170 = vsel %vm288, %v2165, %v2167
  %v2171 = vsel %vm288, %v2167, %v2169
  %2174 = vst [vmem:[#allocation3 + $0x30] sm:$0xff] %v2170
  %2175 = vst [vmem:[#allocation3 + $0x38] sm:$0xff] %v2171
  %v2176 = vld [vmem:[#allocation2] sm:$0xff]
  %v2177 = vld [vmem:[#allocation2 + $0x8] sm:$0xff]
  %v2178 = vld [vmem:[#allocation2 + $0x10] sm:$0xff]
  %2182 = vrot.lane.b32.xlu0 %v2176, 111
  %v2183 = vpop.permute.xlu0 %2182
  %2184 = vrot.lane.b32.xlu0 %v2177, 111
  %v2185 = vpop.permute.xlu0 %2184
  %2186 = vrot.lane.b32.xlu0 %v2178, 111
  %v2187 = vpop.permute.xlu0 %2186
  %v2188 = vsel %vm317, %v2183, %v2185
  %v2189 = vsel %vm317, %v2185, %v2187
  %2192 = vst [vmem:[#allocation3 + $0x40] sm:$0xff] %v2188
  %2193 = vst [vmem:[#allocation3 + $0x48] sm:$0xff] %v2189
  %v2194 = vld [vmem:[#allocation2] sm:$0xff]
  %v2195 = vld [vmem:[#allocation2 + $0x8] sm:$0xff]
  %v2196 = vld [vmem:[#allocation2 + $0x10] sm:$0xff]
  %v2197 = vsel %vm340, %v2194, 0
  %v2198 = vsel %vm341, %v2195, 0
  %v2199 = vsel %vm342, %v2196, 0
  %2203 = vrot.lane.b32.xlu0 %v2197, 110
  %v2204 = vpop.permute.xlu0 %2203
  %2205 = vrot.lane.b32.xlu0 %v2198, 110
  %v2206 = vpop.permute.xlu0 %2205
  %2207 = vrot.lane.b32.xlu0 %v2199, 110
  %v2208 = vpop.permute.xlu0 %2207
  %v2209 = vsel %vm379, %v2204, %v2206
  %v2210 = vsel %vm379, %v2206, %v2208
  %2213 = vst [vmem:[#allocation3 + $0x50] sm:$0xff] %v2209
  %2214 = vst [vmem:[#allocation3 + $0x58] sm:$0xff] %v2210
  %v2215 = vld [vmem:[#allocation2] sm:$0xff]
  %v2216 = vld [vmem:[#allocation2 + $0x8] sm:$0xff]
  %v2217 = vld [vmem:[#allocation2 + $0x10] sm:$0xff]
  %v2218 = vsel %vm408, %v2215, 0
  %v2219 = vsel %vm409, %v2216, 0
  %v2220 = vsel %vm410, %v2217, 0
  %2224 = vrot.lane.b32.xlu0 %v2218, 96
  %v2225 = vpop.permute.xlu0 %2224
  %2226 = vrot.lane.b32.xlu0 %v2219, 96
  %v2227 = vpop.permute.xlu0 %2226
  %2228 = vrot.lane.b32.xlu0 %v2220, 96
  %v2229 = vpop.permute.xlu0 %2228
  %v2230 = vsel %vm426, %v2225, %v2227
  %v2231 = vsel %vm426, %v2227, %v2229
  %2234 = vst [vmem:[#allocation3 + $0x60] sm:$0xff] %v2230
  %2235 = vst [vmem:[#allocation3 + $0x68] sm:$0xff] %v2231
  %v2236 = vld [vmem:[#allocation2] sm:$0xff]
  %v2237 = vld [vmem:[#allocation2 + $0x8] sm:$0xff]
  %v2238 = vld [vmem:[#allocation2 + $0x10] sm:$0xff]
  %2242 = vrot.lane.b32.xlu0 %v2236, 95
  %v2243 = vpop.permute.xlu0 %2242
  %2244 = vrot.lane.b32.xlu0 %v2237, 95
  %v2245 = vpop.permute.xlu0 %2244
  %2246 = vrot.lane.b32.xlu0 %v2238, 95
  %v2247 = vpop.permute.xlu0 %2246
  %v2248 = vsel %vm472, %v2243, %v2245
  %v2249 = vsel %vm472, %v2245, %v2247
  %2252 = vst [vmem:[#allocation3 + $0x70] sm:$0xff] %v2248
  %2253 = vst [vmem:[#allocation3 + $0x78] sm:$0xff] %v2249
  %v2254 = vld [vmem:[#allocation2] sm:$0xff]
  %v2255 = vld [vmem:[#allocation2 + $0x8] sm:$0xff]
  %v2256 = vld [vmem:[#allocation2 + $0x10] sm:$0xff]
  %v2257 = vsel %vm495, %v2254, 0
  %v2258 = vsel %vm496, %v2255, 0
  %v2259 = vsel %vm497, %v2256, 0
  %2263 = vrot.lane.b32.xlu0 %v2257, 94
  %v2264 = vpop.permute.xlu0 %2263
  %2265 = vrot.lane.b32.xlu0 %v2258, 94
  %v2266 = vpop.permute.xlu0 %2265
  %2267 = vrot.lane.b32.xlu0 %v2259, 94
  %v2268 = vpop.permute.xlu0 %2267
  %v2269 = vsel %vm513, %v2264, %v2266
  %v2270 = vsel %vm513, %v2266, %v2268
  %2273 = vst [vmem:[#allocation3 + $0x80] sm:$0xff] %v2269
  %2274 = vst [vmem:[#allocation3 + $0x88] sm:$0xff] %v2270
  %v2275 = vld [vmem:[%s8] sm:$0xff]
  %v2276 = vld [vmem:[%s8 + $0x8] sm:$0xff]
  %v2277 = vld [vmem:[%s8 + $0x10] sm:$0xff]
  %v2278 = vld [vmem:[%s8 + $0x18] sm:$0xff]
  %v2279 = vld [vmem:[#allocation3] sm:$0xff]
  %v2280 = vld [vmem:[#allocation3 + $0x8] sm:$0xff]
  %v2281 = vld [vmem:[#allocation3 + $0x10] sm:$0xff]
  %v2282 = vld [vmem:[#allocation3 + $0x18] sm:$0xff]
  %v2283 = vld [vmem:[#allocation3 + $0x20] sm:$0xff]
  %v2284 = vld [vmem:[#allocation3 + $0x28] sm:$0xff]
  %v2285 = vld [vmem:[#allocation3 + $0x30] sm:$0xff]
  %v2286 = vld [vmem:[#allocation3 + $0x38] sm:$0xff]
  %v2287 = vld [vmem:[#allocation3 + $0x40] sm:$0xff]
  %v2288 = vld [vmem:[#allocation3 + $0x48] sm:$0xff]
  %v2289 = vld [vmem:[#allocation3 + $0x50] sm:$0xff]
  %v2290 = vld [vmem:[#allocation3 + $0x58] sm:$0xff]
  %v2291 = vld [vmem:[#allocation3 + $0x60] sm:$0xff]
  %v2292 = vld [vmem:[#allocation3 + $0x68] sm:$0xff]
  %v2293 = vld [vmem:[#allocation3 + $0x70] sm:$0xff]
  %v2294 = vld [vmem:[#allocation3 + $0x78] sm:$0xff]
  %v2295 = vld [vmem:[#allocation3 + $0x80] sm:$0xff]
  %v2296 = vld [vmem:[#allocation3 + $0x88] sm:$0xff]
  %v2297 = vld [vmem:[%s9] sm:$0xff]
  %v2298 = vld [vmem:[%s9 + $0x8] sm:$0xff]
  %v2299 = vld [vmem:[%s9 + $0x10] sm:$0xff]
  %v2300 = vld [vmem:[%s9 + $0x18] sm:$0xff]
  %2302 = vset.pattern.permute.xlu0 0
  %2303 = vperm.xlu0 %2302, %v2297
  %v2304 = vpop.permute.xlu0 %2303
  %2307 = vset.pattern.permute.xlu0 0
  %2308 = vperm.xlu0 %2307, %v2298
  %v2309 = vpop.permute.xlu0 %2308
  %2312 = vset.pattern.permute.xlu0 0
  %2313 = vperm.xlu0 %2312, %v2299
  %v2314 = vpop.permute.xlu0 %2313
  %2317 = vset.pattern.permute.xlu0 0
  %2318 = vperm.xlu0 %2317, %v2300
  %v2319 = vpop.permute.xlu0 %2318
  %v2325 = vunpack.c.l.b16 %v2275
  %v2326 = vunpack.c.h.b16 %v2275
  %v2327 = vunpack.c.l.b16 %v2276
  %v2328 = vunpack.c.h.b16 %v2276
  %v2329 = vunpack.c.l.b16 %v2277
  %v2330 = vunpack.c.h.b16 %v2277
  %v2331 = vunpack.c.l.b16 %v2278
  %v2332 = vunpack.c.h.b16 %v2278
  %v2333 = vpack.c.b16 %v2327, %v2325
  %v2334 = vpack.c.b16 %v2328, %v2326
  %v2335 = vpack.c.b16 %v2331, %v2329
  %v2336 = vpack.c.b16 %v2332, %v2330
  %v2340 = vsel %vm856, %v2334, 0
  %v2343 = vsel %vm856, %v2336, 0
  %2345 = vmatprep.subr.bf16.mxu0 %v2280
  %2346 = vmatpush1.bf16.msra.mxu0 %v2279
  %2347 = vmatprep.subr.bf16.mxu0 %v2282
  %2348 = vmatpush1.bf16.msra.mxu0 %v2281
  %2349 = vmatprep.subr.bf16.mxu0 %v2284
  %2350 = vmatpush1.bf16.msra.mxu0 %v2283
  %2351 = vmatprep.subr.bf16.mxu0 %v2286
  %2352 = vmatpush1.bf16.msra.mxu0 %v2285
  %2353 = vmatprep.subr.bf16.mxu0 %v2288
  %2354 = vmatpush1.bf16.msra.mxu0 %v2287
  %2355 = vmatprep.subr.bf16.mxu0 %v2290
  %2356 = vmatpush1.bf16.msra.mxu0 %v2289
  %2357 = vmatprep.subr.bf16.mxu0 %v2292
  %2358 = vmatpush1.bf16.msra.mxu0 %v2291
  %2359 = vmatprep.subr.bf16.mxu0 %v2294
  %2360 = vmatpush1.bf16.msra.mxu0 %v2293
  %2361 = vmatprep.subr.bf16.mxu0 %v2296
  %2362 = vmatpush1.bf16.msra.mxu0 %v2295
  %2363 = vmatprep.subr.bf16.mxu0 0
  %2364 = vmatpush1.bf16.msra.mxu0 0
  %2365 = vmatprep.subr.bf16.mxu0 0
  %2366 = vmatpush1.bf16.msra.mxu0 0
  %2367 = vmatprep.subr.bf16.mxu0 0
  %2368 = vmatpush1.bf16.msra.mxu0 0
  %2369 = vmatprep.subr.bf16.mxu0 0
  %2370 = vmatpush1.bf16.msra.mxu0 0
  %2371 = vmatprep.subr.bf16.mxu0 0
  %2372 = vmatpush1.bf16.msra.mxu0 0
  %2373 = vmatprep.subr.bf16.mxu0 0
  %2374 = vmatpush1.bf16.msra.mxu0 0
  %2375 = vmatprep.subr.bf16.mxu0 0
  %2376 = vmatpush1.bf16.msra.mxu0 0
  %2377 = vmatprep.mubr.bf16.mxu0 %v2340
  %2378 = vmatmul.mubr.bf16.gmra.mrb[0].mxu0 %v2333
  %v2379 = vpop.f32.mrb[0].mxu0
  %v2380 = vadd.f32 %v2304, %v2379
  %v2381 = vpop.f32.mrb[0].mxu0
  %v2382 = vadd.f32 %v2304, %v2381
  %v2383 = vpop.f32.mrb[0].mxu0
  %v2384 = vadd.f32 %v2309, %v2383
  %v2385 = vpop.f32.mrb[0].mxu0
  %v2386 = vadd.f32 %v2309, %v2385
  %2387 = vmatprep.mubr.bf16.mxu0 %v2343
  %2388 = vmatmul.mubr.bf16.gmra.mrb[0].mxu0 %v2335
  %v2389 = vpop.f32.mrb[0].mxu0
  %v2390 = vadd.f32 %v2314, %v2389
  %v2391 = vpop.f32.mrb[0].mxu0
  %v2392 = vadd.f32 %v2314, %v2391
  %v2393 = vpop.f32.mrb[0].mxu0
  %v2394 = vadd.f32 %v2319, %v2393
  %v2395 = vpop.f32.mrb[0].mxu0
  %v2396 = vadd.f32 %v2319, %v2395
  %2397 = vdwg.mxu0
  %v2398 = vmax.f32 %v2380, 0.0
  %v2399 = vmax.f32 %v2382, 0.0
  %v2400 = vmax.f32 %v2384, 0.0
  %v2401 = vmax.f32 %v2386, 0.0
  %v2402 = vmax.f32 %v2390, 0.0
  %v2403 = vmax.f32 %v2392, 0.0
  %v2404 = vmax.f32 %v2394, 0.0
  %v2405 = vmax.f32 %v2396, 0.0
  %v2406 = vadd.f32 %v2398, %v2399
  %2407 = vadd.xlane.f32.xlu0 %v2406
  %v2408 = vpop.xlane.xlu0 %2407
  %v2409 = vadd.f32 %v2400, %v2401
  %2410 = vadd.xlane.f32.xlu0 %v2409
  %v2411 = vpop.xlane.xlu0 %2410
  %v2412 = vadd.f32 %v2402, %v2403
  %2413 = vadd.xlane.f32.xlu0 %v2412
  %v2414 = vpop.xlane.xlu0 %2413
  %v2415 = vadd.f32 %v2404, %v2405
  %2416 = vadd.xlane.f32.xlu0 %v2415
  %v2417 = vpop.xlane.xlu0 %2416
  %v2418 = vmul.f32 %v2408, 0.00390625
  %v2419 = vmul.f32 %v2411, 0.00390625
  %v2420 = vmul.f32 %v2414, 0.00390625
  %v2421 = vmul.f32 %v2417, 0.00390625
  %s2422 = scalar_lea.vmem %s1, 8
  %v2423 = vld [vmem:[%s2422] sm:$0x77]
  %v2425 = vcombine.high %v2423, %v2423
  %v2427 = vpack.c.bf16 %v2423, %v2423
  %v2428 = vpack.c.bf16 %v2425, %v2425
  %2431 = vrot.lane.b32.xlu0 %v2427, 17
  %v2432 = vpop.permute.xlu0 %2431
  %2433 = vrot.lane.b32.xlu0 %v2428, 17
  %v2434 = vpop.permute.xlu0 %2433
  %v2435 = vsel %vm94, %v2432, %v2434
  %v2439 = vld [vmem:[%s957] sm:$0x3]
  %v2440 = vsel %vm101, %v2432, %v2439
  %2441 = vst [vmem:[%s957] sm:$0x3] %v2440
  %v2442 = vld [vmem:[%s957 + $0x8] sm:$0x3]
  %v2443 = vsel %vm106, %v2435, %v2442
  %2444 = vst [vmem:[%s957 + $0x8] sm:$0x3] %v2443
  %v2445 = vld [vmem:[%s957 + $0x10] sm:$0x3]
  %v2446 = vsel %vm111, %v2434, %v2445
  %2447 = vst [vmem:[%s957 + $0x10] sm:$0x3] %v2446
  %v2448 = vld [vmem:[%s957] sm:$0x3]
  %v2449 = vld [vmem:[%s957 + $0x8] sm:$0x3]
  %v2450 = vsel %vm131, %v2448, 0
  %v2451 = vsel %vm132, %v2449, 0
  %v2452 = vld [vmem:[%s971] sm:$0x3]
  %v2453 = vsel %vm106, %v2450, %v2452
  %2454 = vst [vmem:[%s971] sm:$0x3] %v2453
  %v2455 = vld [vmem:[%s971 + $0x8] sm:$0x3]
  %v2456 = vsel %vm106, %v2451, %v2455
  %2457 = vst [vmem:[%s971 + $0x8] sm:$0x3] %v2456
  %v2458 = vld [vmem:[%s957] sm:$0x3]
  %v2459 = vld [vmem:[%s957 + $0x8] sm:$0x3]
  %v2460 = vld [vmem:[%s957 + $0x10] sm:$0x3]
  %v2462 = vshrl.u32 %v2458, 16
  %v2464 = vrot.slane %v2462, 6
  %v2465 = vshll.u32 %v2458, 16
  %v2467 = vrot.slane %v2465, 7
  %v2468 = vor.u32 %v2464, %v2467
  %v2470 = vshrl.u32 %v2459, 16
  %v2472 = vrot.slane %v2470, 6
  %v2473 = vshll.u32 %v2459, 16
  %v2475 = vrot.slane %v2473, 7
  %v2476 = vor.u32 %v2472, %v2475
  %v2478 = vshrl.u32 %v2460, 16
  %v2480 = vrot.slane %v2478, 6
  %v2481 = vshll.u32 %v2460, 16
  %v2483 = vrot.slane %v2481, 7
  %v2484 = vor.u32 %v2480, %v2483
  %2485 = vrot.lane.b32.xlu0 %v2468, 127
  %v2486 = vpop.permute.xlu0 %2485
  %2487 = vrot.lane.b32.xlu0 %v2476, 127
  %v2488 = vpop.permute.xlu0 %2487
  %2489 = vrot.lane.b32.xlu0 %v2484, 127
  %v2490 = vpop.permute.xlu0 %2489
  %v2491 = vsel %vm174, %v2486, %v2488
  %v2492 = vsel %vm174, %v2488, %v2490
  %v2495 = vld [vmem:[%s971] sm:$0x6]
  %v2496 = vsel %vm181, %v2491, %v2495
  %2497 = vst [vmem:[%s971] sm:$0x6] %v2496
  %v2498 = vld [vmem:[%s971 + $0x8] sm:$0x6]
  %v2499 = vsel %vm181, %v2492, %v2498
  %2500 = vst [vmem:[%s971 + $0x8] sm:$0x6] %v2499
  %v2501 = vld [vmem:[%s957] sm:$0x3]
  %v2502 = vld [vmem:[%s957 + $0x8] sm:$0x3]
  %v2503 = vld [vmem:[%s957 + $0x10] sm:$0x3]
  %v2504 = vsel %vm211, %v2501, 0
  %v2505 = vsel %vm212, %v2502, 0
  %v2506 = vsel %vm213, %v2503, 0
  %v2510 = vrot.slane %v2504, 5
  %v2511 = vrot.slane %v2505, 5
  %v2512 = vrot.slane %v2506, 5
  %2513 = vrot.lane.b32.xlu0 %v2510, 126
  %v2514 = vpop.permute.xlu0 %2513
  %2515 = vrot.lane.b32.xlu0 %v2511, 126
  %v2516 = vpop.permute.xlu0 %2515
  %2517 = vrot.lane.b32.xlu0 %v2512, 126
  %v2518 = vpop.permute.xlu0 %2517
  %v2519 = vsel %vm229, %v2514, %v2516
  %v2520 = vsel %vm229, %v2516, %v2518
  %v2523 = vld [vmem:[%s971] sm:$0x18]
  %v2524 = vsel %vm236, %v2519, %v2523
  %2525 = vst [vmem:[%s971] sm:$0x18] %v2524
  %v2526 = vld [vmem:[%s971 + $0x8] sm:$0x18]
  %v2527 = vsel %vm236, %v2520, %v2526
  %2528 = vst [vmem:[%s971 + $0x8] sm:$0x18] %v2527
  %v2529 = vld [vmem:[%s957] sm:$0x3]
  %v2530 = vld [vmem:[%s957 + $0x8] sm:$0x3]
  %v2531 = vld [vmem:[%s957 + $0x10] sm:$0x3]
  %v2532 = vsel %vm252, %v2529, 0
  %v2533 = vsel %vm253, %v2530, 0
  %v2534 = vsel %vm254, %v2531, 0
  %v2536 = vshrl.u32 %v2532, 16
  %v2538 = vrot.slane %v2536, 3
  %v2539 = vshll.u32 %v2532, 16
  %v2541 = vrot.slane %v2539, 4
  %v2542 = vor.u32 %v2538, %v2541
  %v2544 = vshrl.u32 %v2533, 16
  %v2546 = vrot.slane %v2544, 3
  %v2547 = vshll.u32 %v2533, 16
  %v2549 = vrot.slane %v2547, 4
  %v2550 = vor.u32 %v2546, %v2549
  %v2552 = vshrl.u32 %v2534, 16
  %v2554 = vrot.slane %v2552, 3
  %v2555 = vshll.u32 %v2534, 16
  %v2557 = vrot.slane %v2555, 4
  %v2558 = vor.u32 %v2554, %v2557
  %2559 = vrot.lane.b32.xlu0 %v2542, 112
  %v2560 = vpop.permute.xlu0 %2559
  %2561 = vrot.lane.b32.xlu0 %v2550, 112
  %v2562 = vpop.permute.xlu0 %2561
  %2563 = vrot.lane.b32.xlu0 %v2558, 112
  %v2564 = vpop.permute.xlu0 %2563
  %v2565 = vsel %vm288, %v2560, %v2562
  %v2566 = vsel %vm288, %v2562, %v2564
  %v2569 = vld [vmem:[%s971] sm:$0x30]
  %v2570 = vsel %vm295, %v2565, %v2569
  %2571 = vst [vmem:[%s971] sm:$0x30] %v2570
  %v2572 = vld [vmem:[%s971 + $0x8] sm:$0x30]
  %v2573 = vsel %vm295, %v2566, %v2572
  %2574 = vst [vmem:[%s971 + $0x8] sm:$0x30] %v2573
  %v2575 = vld [vmem:[%s957] sm:$0x3]
  %v2576 = vld [vmem:[%s957 + $0x8] sm:$0x3]
  %v2577 = vld [vmem:[%s957 + $0x10] sm:$0x3]
  %v2581 = vrot.slane %v2575, 2
  %v2582 = vrot.slane %v2576, 2
  %v2583 = vrot.slane %v2577, 2
  %2584 = vrot.lane.b32.xlu0 %v2581, 111
  %v2585 = vpop.permute.xlu0 %2584
  %2586 = vrot.lane.b32.xlu0 %v2582, 111
  %v2587 = vpop.permute.xlu0 %2586
  %2588 = vrot.lane.b32.xlu0 %v2583, 111
  %v2589 = vpop.permute.xlu0 %2588
  %v2590 = vsel %vm317, %v2585, %v2587
  %v2591 = vsel %vm317, %v2587, %v2589
  %v2594 = vld [vmem:[%s971] sm:$0xc0]
  %v2595 = vsel %vm324, %v2590, %v2594
  %2596 = vst [vmem:[%s971] sm:$0xc0] %v2595
  %v2597 = vld [vmem:[%s971 + $0x8] sm:$0xc0]
  %v2598 = vsel %vm324, %v2591, %v2597
  %2599 = vst [vmem:[%s971 + $0x8] sm:$0xc0] %v2598
  %v2600 = vld [vmem:[%s957] sm:$0x3]
  %v2601 = vld [vmem:[%s957 + $0x8] sm:$0x3]
  %v2602 = vld [vmem:[%s957 + $0x10] sm:$0x3]
  %v2603 = vsel %vm340, %v2600, 0
  %v2604 = vsel %vm341, %v2601, 0
  %v2605 = vsel %vm342, %v2602, 0
  %v2607 = vshll.u32 %v2603, 16
  %v2609 = vrot.slane %v2607, 1
  %v2611 = vshll.u32 %v2604, 16
  %v2613 = vrot.slane %v2611, 1
  %v2615 = vshll.u32 %v2605, 16
  %v2617 = vrot.slane %v2615, 1
  %v2618 = vshrl.u32 %v2603, 16
  %v2620 = vor.u32 %v2618, %v2609
  %v2621 = vshrl.u32 %v2604, 16
  %v2623 = vor.u32 %v2621, %v2613
  %v2624 = vshrl.u32 %v2605, 16
  %v2626 = vor.u32 %v2624, %v2617
  %2627 = vrot.lane.b32.xlu0 %v2609, 110
  %v2628 = vpop.permute.xlu0 %2627
  %2629 = vrot.lane.b32.xlu0 %v2613, 110
  %v2630 = vpop.permute.xlu0 %2629
  %2631 = vrot.lane.b32.xlu0 %v2617, 110
  %v2632 = vpop.permute.xlu0 %2631
  %2633 = vrot.lane.b32.xlu0 %v2620, 110
  %v2634 = vpop.permute.xlu0 %2633
  %2635 = vrot.lane.b32.xlu0 %v2623, 110
  %v2636 = vpop.permute.xlu0 %2635
  %2637 = vrot.lane.b32.xlu0 %v2626, 110
  %v2638 = vpop.permute.xlu0 %2637
  %v2639 = vsel %vm379, %v2628, %v2630
  %v2640 = vsel %vm379, %v2630, %v2632
  %v2641 = vsel %vm379, %v2634, %v2636
  %v2642 = vsel %vm379, %v2636, %v2638
  %v2647 = vld [vmem:[%s971] sm:$0x80]
  %v2648 = vsel %vm390, %v2639, %v2647
  %2649 = vst [vmem:[%s971] sm:$0x80] %v2648
  %v2650 = vld [vmem:[%s971 + $0x8] sm:$0x80]
  %v2651 = vsel %vm390, %v2640, %v2650
  %2652 = vst [vmem:[%s971 + $0x8] sm:$0x80] %v2651
  %2653 = vst [vmem:[%s971 + $0x10] sm:$0x1] %v2641
  %2654 = vst [vmem:[%s971 + $0x18] sm:$0x1] %v2642
  %v2655 = vld [vmem:[%s957] sm:$0x3]
  %v2656 = vld [vmem:[%s957 + $0x8] sm:$0x3]
  %v2657 = vld [vmem:[%s957 + $0x10] sm:$0x3]
  %v2658 = vsel %vm408, %v2655, 0
  %v2659 = vsel %vm409, %v2656, 0
  %v2660 = vsel %vm410, %v2657, 0
  %v2664 = vrot.slane %v2658, 7
  %v2665 = vrot.slane %v2659, 7
  %v2666 = vrot.slane %v2660, 7
  %2667 = vrot.lane.b32.xlu0 %v2664, 96
  %v2668 = vpop.permute.xlu0 %2667
  %2669 = vrot.lane.b32.xlu0 %v2665, 96
  %v2670 = vpop.permute.xlu0 %2669
  %2671 = vrot.lane.b32.xlu0 %v2666, 96
  %v2672 = vpop.permute.xlu0 %2671
  %v2673 = vsel %vm426, %v2668, %v2670
  %v2674 = vsel %vm426, %v2670, %v2672
  %v2677 = vld [vmem:[%s971 + $0x10] sm:$0x6]
  %v2678 = vsel %vm432, %v2673, %v2677
  %2679 = vst [vmem:[%s971 + $0x10] sm:$0x6] %v2678
  %v2680 = vld [vmem:[%s971 + $0x18] sm:$0x6]
  %v2681 = vsel %vm432, %v2674, %v2680
  %2682 = vst [vmem:[%s971 + $0x18] sm:$0x6] %v2681
  %v2683 = vld [vmem:[%s957] sm:$0x3]
  %v2684 = vld [vmem:[%s957 + $0x8] sm:$0x3]
  %v2685 = vld [vmem:[%s957 + $0x10] sm:$0x3]
  %v2687 = vshrl.u32 %v2683, 16
  %v2689 = vrot.slane %v2687, 5
  %v2690 = vshll.u32 %v2683, 16
  %v2692 = vrot.slane %v2690, 6
  %v2693 = vor.u32 %v2689, %v2692
  %v2695 = vshrl.u32 %v2684, 16
  %v2697 = vrot.slane %v2695, 5
  %v2698 = vshll.u32 %v2684, 16
  %v2700 = vrot.slane %v2698, 6
  %v2701 = vor.u32 %v2697, %v2700
  %v2703 = vshrl.u32 %v2685, 16
  %v2705 = vrot.slane %v2703, 5
  %v2706 = vshll.u32 %v2685, 16
  %v2708 = vrot.slane %v2706, 6
  %v2709 = vor.u32 %v2705, %v2708
  %2710 = vrot.lane.b32.xlu0 %v2693, 95
  %v2711 = vpop.permute.xlu0 %2710
  %2712 = vrot.lane.b32.xlu0 %v2701, 95
  %v2713 = vpop.permute.xlu0 %2712
  %2714 = vrot.lane.b32.xlu0 %v2709, 95
  %v2715 = vpop.permute.xlu0 %2714
  %v2716 = vsel %vm472, %v2711, %v2713
  %v2717 = vsel %vm472, %v2713, %v2715
  %v2720 = vld [vmem:[%s971 + $0x10] sm:$0xc]
  %v2721 = vsel %vm479, %v2716, %v2720
  %2722 = vst [vmem:[%s971 + $0x10] sm:$0xc] %v2721
  %v2723 = vld [vmem:[%s971 + $0x18] sm:$0xc]
  %v2724 = vsel %vm479, %v2717, %v2723
  %2725 = vst [vmem:[%s971 + $0x18] sm:$0xc] %v2724
  %v2726 = vld [vmem:[%s957] sm:$0x3]
  %v2727 = vld [vmem:[%s957 + $0x8] sm:$0x3]
  %v2728 = vld [vmem:[%s957 + $0x10] sm:$0x3]
  %v2729 = vsel %vm495, %v2726, 0
  %v2730 = vsel %vm496, %v2727, 0
  %v2731 = vsel %vm497, %v2728, 0
  %v2735 = vrot.slane %v2729, 4
  %v2736 = vrot.slane %v2730, 4
  %v2737 = vrot.slane %v2731, 4
  %2738 = vrot.lane.b32.xlu0 %v2735, 94
  %v2739 = vpop.permute.xlu0 %2738
  %2740 = vrot.lane.b32.xlu0 %v2736, 94
  %v2741 = vpop.permute.xlu0 %2740
  %2742 = vrot.lane.b32.xlu0 %v2737, 94
  %v2743 = vpop.permute.xlu0 %2742
  %v2744 = vsel %vm513, %v2739, %v2741
  %v2745 = vsel %vm513, %v2741, %v2743
  %v2748 = vld [vmem:[%s971 + $0x10] sm:$0x30]
  %v2749 = vsel %vm519, %v2744, %v2748
  %2750 = vst [vmem:[%s971 + $0x10] sm:$0x30] %v2749
  %v2751 = vld [vmem:[%s971 + $0x18] sm:$0x30]
  %v2752 = vsel %vm519, %v2745, %v2751
  %2753 = vst [vmem:[%s971 + $0x18] sm:$0x30] %v2752
  %v2754 = vld [vmem:[%s6] sm:$0xf]
  %v2755 = vld [vmem:[%s6 + $0x4] sm:$0xf]
  %v2756 = vld [vmem:[%s971] sm:$0xff]
  %v2757 = vld [vmem:[%s971 + $0x8] sm:$0xff]
  %v2758 = vld [vmem:[%s971 + $0x10] sm:$0x3f]
  %v2759 = vld [vmem:[%s971 + $0x18] sm:$0x3f]
  %v2760 = vld [vmem:[%s7] sm:$0xff]
  %v2761 = vld [vmem:[%s7 + $0x8] sm:$0xff]
  %2763 = vset.pattern.permute.xlu0 0
  %2764 = vperm.xlu0 %2763, %v2760
  %v2765 = vpop.permute.xlu0 %2764
  %2768 = vset.pattern.permute.xlu0 0
  %2769 = vperm.xlu0 %2768, %v2761
  %v2770 = vpop.permute.xlu0 %2769
  %v2774 = vunpack.c.l.b16 %v2754
  %v2775 = vunpack.c.l.b16 %v2755
  %v2776 = vpack.c.b16 %v2775, %v2774
  %v2778 = vsel %vm549, %v2776, 0
  %v2781 = vand.u32 %v2758, %v556
  %v2784 = vand.u32 %v2759, %v556
  %2786 = vmatprep.subr.bf16.mxu0 %v2757
  %2787 = vmatpush1.bf16.msra.mxu0 %v2756
  %2788 = vmatprep.subr.bf16.mxu0 %v2784
  %2789 = vmatpush1.bf16.msra.mxu0 %v2781
  %2790 = vmatprep.subr.bf16.mxu0 0
  %2791 = vmatpush1.bf16.msra.mxu0 0
  %2792 = vmatprep.subr.bf16.mxu0 0
  %2793 = vmatpush1.bf16.msra.mxu0 0
  %2794 = vmatprep.subr.bf16.mxu0 0
  %2795 = vmatpush1.bf16.msra.mxu0 0
  %2796 = vmatprep.subr.bf16.mxu0 0
  %2797 = vmatpush1.bf16.msra.mxu0 0
  %2798 = vmatprep.subr.bf16.mxu0 0
  %2799 = vmatpush1.bf16.msra.mxu0 0
  %2800 = vmatprep.subr.bf16.mxu0 0
  %2801 = vmatpush1.bf16.msra.mxu0 0
  %2802 = vmatprep.subr.bf16.mxu0 0
  %2803 = vmatpush1.bf16.msra.mxu0 0
  %2804 = vmatprep.subr.bf16.mxu0 0
  %2805 = vmatpush1.bf16.msra.mxu0 0
  %2806 = vmatprep.subr.bf16.mxu0 0
  %2807 = vmatpush1.bf16.msra.mxu0 0
  %2808 = vmatprep.subr.bf16.mxu0 0
  %2809 = vmatpush1.bf16.msra.mxu0 0
  %2810 = vmatprep.subr.bf16.mxu0 0
  %2811 = vmatpush1.bf16.msra.mxu0 0
  %2812 = vmatprep.subr.bf16.mxu0 0
  %2813 = vmatpush1.bf16.msra.mxu0 0
  %2814 = vmatprep.subr.bf16.mxu0 0
  %2815 = vmatpush1.bf16.msra.mxu0 0
  %2816 = vmatprep.subr.bf16.mxu0 0
  %2817 = vmatpush1.bf16.msra.mxu0 0
  %2818 = vmatprep.mubr.bf16.mxu0 0
  %2819 = vmatmul.mubr.bf16.gmra.mrb[0].mxu0 %v2778
  %v2820 = vpop.f32.mrb[0].mxu0
  %v2821 = vadd.f32 %v2765, %v2820
  %v2822 = vpop.f32.mrb[0].mxu0
  %v2823 = vadd.f32 %v2765, %v2822
  %v2824 = vpop.f32.mrb[0].mxu0
  %v2825 = vadd.f32 %v2770, %v2824
  %v2826 = vpop.f32.mrb[0].mxu0
  %v2827 = vadd.f32 %v2770, %v2826
  %2828 = vdwg.mxu0
  %v2829 = vmax.f32 %v2821, 0.0
  %v2830 = vmax.f32 %v2823, 0.0
  %v2831 = vmax.f32 %v2825, 0.0
  %v2832 = vmax.f32 %v2827, 0.0
  %v2833 = vpack.c.bf16 %v2831, %v2829
  %v2834 = vpack.c.bf16 %v2832, %v2830
  %2837 = vrot.lane.b32.xlu0 %v2833, 17
  %v2838 = vpop.permute.xlu0 %2837
  %2839 = vrot.lane.b32.xlu0 %v2834, 17
  %v2840 = vpop.permute.xlu0 %2839
  %v2841 = vsel %vm94, %v2838, %v2840
  %2845 = vst.msk [vmem:[%s957] sm:$0xff] %vm622, %v2838
  %2846 = vst [vmem:[%s957 + $0x8] sm:$0xff] %v2841
  %2847 = vst.msk [vmem:[%s957 + $0x10] sm:$0xff] %vm625, %v2840
  %v2848 = vld [vmem:[%s957] sm:$0xff]
  %v2849 = vld [vmem:[%s957 + $0x8] sm:$0xff]
  %v2850 = vsel %vm131, %v2848, 0
  %v2851 = vsel %vm132, %v2849, 0
  %2852 = vst [vmem:[%s971] sm:$0xff] %v2850
  %2853 = vst [vmem:[%s971 + $0x8] sm:$0xff] %v2851
  %v2854 = vld [vmem:[%s957] sm:$0xff]
  %v2855 = vld [vmem:[%s957 + $0x8] sm:$0xff]
  %v2856 = vld [vmem:[%s957 + $0x10] sm:$0xff]
  %2860 = vrot.lane.b32.xlu0 %v2854, 127
  %v2861 = vpop.permute.xlu0 %2860
  %2862 = vrot.lane.b32.xlu0 %v2855, 127
  %v2863 = vpop.permute.xlu0 %2862
  %2864 = vrot.lane.b32.xlu0 %v2856, 127
  %v2865 = vpop.permute.xlu0 %2864
  %v2866 = vsel %vm174, %v2861, %v2863
  %v2867 = vsel %vm174, %v2863, %v2865
  %2870 = vst [vmem:[%s971 + $0x10] sm:$0xff] %v2866
  %2871 = vst [vmem:[%s971 + $0x18] sm:$0xff] %v2867
  %v2872 = vld [vmem:[%s957] sm:$0xff]
  %v2873 = vld [vmem:[%s957 + $0x8] sm:$0xff]
  %v2874 = vld [vmem:[%s957 + $0x10] sm:$0xff]
  %v2875 = vsel %vm211, %v2872, 0
  %v2876 = vsel %vm212, %v2873, 0
  %v2877 = vsel %vm213, %v2874, 0
  %2881 = vrot.lane.b32.xlu0 %v2875, 126
  %v2882 = vpop.permute.xlu0 %2881
  %2883 = vrot.lane.b32.xlu0 %v2876, 126
  %v2884 = vpop.permute.xlu0 %2883
  %2885 = vrot.lane.b32.xlu0 %v2877, 126
  %v2886 = vpop.permute.xlu0 %2885
  %v2887 = vsel %vm229, %v2882, %v2884
  %v2888 = vsel %vm229, %v2884, %v2886
  %2891 = vst [vmem:[%s971 + $0x20] sm:$0xff] %v2887
  %2892 = vst [vmem:[%s971 + $0x28] sm:$0xff] %v2888
  %v2893 = vld [vmem:[%s957] sm:$0xff]
  %v2894 = vld [vmem:[%s957 + $0x8] sm:$0xff]
  %v2895 = vld [vmem:[%s957 + $0x10] sm:$0xff]
  %v2896 = vsel %vm252, %v2893, 0
  %v2897 = vsel %vm253, %v2894, 0
  %v2898 = vsel %vm254, %v2895, 0
  %2902 = vrot.lane.b32.xlu0 %v2896, 112
  %v2903 = vpop.permute.xlu0 %2902
  %2904 = vrot.lane.b32.xlu0 %v2897, 112
  %v2905 = vpop.permute.xlu0 %2904
  %2906 = vrot.lane.b32.xlu0 %v2898, 112
  %v2907 = vpop.permute.xlu0 %2906
  %v2908 = vsel %vm288, %v2903, %v2905
  %v2909 = vsel %vm288, %v2905, %v2907
  %2912 = vst [vmem:[%s971 + $0x30] sm:$0xff] %v2908
  %2913 = vst [vmem:[%s971 + $0x38] sm:$0xff] %v2909
  %v2914 = vld [vmem:[%s957] sm:$0xff]
  %v2915 = vld [vmem:[%s957 + $0x8] sm:$0xff]
  %v2916 = vld [vmem:[%s957 + $0x10] sm:$0xff]
  %2920 = vrot.lane.b32.xlu0 %v2914, 111
  %v2921 = vpop.permute.xlu0 %2920
  %2922 = vrot.lane.b32.xlu0 %v2915, 111
  %v2923 = vpop.permute.xlu0 %2922
  %2924 = vrot.lane.b32.xlu0 %v2916, 111
  %v2925 = vpop.permute.xlu0 %2924
  %v2926 = vsel %vm317, %v2921, %v2923
  %v2927 = vsel %vm317, %v2923, %v2925
  %2930 = vst [vmem:[%s971 + $0x40] sm:$0xff] %v2926
  %2931 = vst [vmem:[%s971 + $0x48] sm:$0xff] %v2927
  %v2932 = vld [vmem:[%s957] sm:$0xff]
  %v2933 = vld [vmem:[%s957 + $0x8] sm:$0xff]
  %v2934 = vld [vmem:[%s957 + $0x10] sm:$0xff]
  %v2935 = vsel %vm340, %v2932, 0
  %v2936 = vsel %vm341, %v2933, 0
  %v2937 = vsel %vm342, %v2934, 0
  %2941 = vrot.lane.b32.xlu0 %v2935, 110
  %v2942 = vpop.permute.xlu0 %2941
  %2943 = vrot.lane.b32.xlu0 %v2936, 110
  %v2944 = vpop.permute.xlu0 %2943
  %2945 = vrot.lane.b32.xlu0 %v2937, 110
  %v2946 = vpop.permute.xlu0 %2945
  %v2947 = vsel %vm379, %v2942, %v2944
  %v2948 = vsel %vm379, %v2944, %v2946
  %2951 = vst [vmem:[%s971 + $0x50] sm:$0xff] %v2947
  %2952 = vst [vmem:[%s971 + $0x58] sm:$0xff] %v2948
  %v2953 = vld [vmem:[%s957] sm:$0xff]
  %v2954 = vld [vmem:[%s957 + $0x8] sm:$0xff]
  %v2955 = vld [vmem:[%s957 + $0x10] sm:$0xff]
  %v2956 = vsel %vm408, %v2953, 0
  %v2957 = vsel %vm409, %v2954, 0
  %v2958 = vsel %vm410, %v2955, 0
  %2962 = vrot.lane.b32.xlu0 %v2956, 96
  %v2963 = vpop.permute.xlu0 %2962
  %2964 = vrot.lane.b32.xlu0 %v2957, 96
  %v2965 = vpop.permute.xlu0 %2964
  %2966 = vrot.lane.b32.xlu0 %v2958, 96
  %v2967 = vpop.permute.xlu0 %2966
  %v2968 = vsel %vm426, %v2963, %v2965
  %v2969 = vsel %vm426, %v2965, %v2967
  %2972 = vst [vmem:[%s971 + $0x60] sm:$0xff] %v2968
  %2973 = vst [vmem:[%s971 + $0x68] sm:$0xff] %v2969
  %v2974 = vld [vmem:[%s957] sm:$0xff]
  %v2975 = vld [vmem:[%s957 + $0x8] sm:$0xff]
  %v2976 = vld [vmem:[%s957 + $0x10] sm:$0xff]
  %2980 = vrot.lane.b32.xlu0 %v2974, 95
  %v2981 = vpop.permute.xlu0 %2980
  %2982 = vrot.lane.b32.xlu0 %v2975, 95
  %v2983 = vpop.permute.xlu0 %2982
  %2984 = vrot.lane.b32.xlu0 %v2976, 95
  %v2985 = vpop.permute.xlu0 %2984
  %v2986 = vsel %vm472, %v2981, %v2983
  %v2987 = vsel %vm472, %v2983, %v2985
  %2990 = vst [vmem:[%s971 + $0x70] sm:$0xff] %v2986
  %2991 = vst [vmem:[%s971 + $0x78] sm:$0xff] %v2987
  %v2992 = vld [vmem:[%s957] sm:$0xff]
  %v2993 = vld [vmem:[%s957 + $0x8] sm:$0xff]
  %v2994 = vld [vmem:[%s957 + $0x10] sm:$0xff]
  %v2995 = vsel %vm495, %v2992, 0
  %v2996 = vsel %vm496, %v2993, 0
  %v2997 = vsel %vm497, %v2994, 0
  %3001 = vrot.lane.b32.xlu0 %v2995, 94
  %v3002 = vpop.permute.xlu0 %3001
  %3003 = vrot.lane.b32.xlu0 %v2996, 94
  %v3004 = vpop.permute.xlu0 %3003
  %3005 = vrot.lane.b32.xlu0 %v2997, 94
  %v3006 = vpop.permute.xlu0 %3005
  %v3007 = vsel %vm513, %v3002, %v3004
  %v3008 = vsel %vm513, %v3004, %v3006
  %3011 = vst [vmem:[%s971 + $0x80] sm:$0xff] %v3007
  %3012 = vst [vmem:[%s971 + $0x88] sm:$0xff] %v3008
  %v3013 = vld [vmem:[%s8] sm:$0xff]
  %v3014 = vld [vmem:[%s8 + $0x8] sm:$0xff]
  %v3015 = vld [vmem:[%s8 + $0x10] sm:$0xff]
  %v3016 = vld [vmem:[%s8 + $0x18] sm:$0xff]
  %v3017 = vld [vmem:[%s971] sm:$0xff]
  %v3018 = vld [vmem:[%s971 + $0x8] sm:$0xff]
  %v3019 = vld [vmem:[%s971 + $0x10] sm:$0xff]
  %v3020 = vld [vmem:[%s971 + $0x18] sm:$0xff]
  %v3021 = vld [vmem:[%s971 + $0x20] sm:$0xff]
  %v3022 = vld [vmem:[%s971 + $0x28] sm:$0xff]
  %v3023 = vld [vmem:[%s971 + $0x30] sm:$0xff]
  %v3024 = vld [vmem:[%s971 + $0x38] sm:$0xff]
  %v3025 = vld [vmem:[%s971 + $0x40] sm:$0xff]
  %v3026 = vld [vmem:[%s971 + $0x48] sm:$0xff]
  %v3027 = vld [vmem:[%s971 + $0x50] sm:$0xff]
  %v3028 = vld [vmem:[%s971 + $0x58] sm:$0xff]
  %v3029 = vld [vmem:[%s971 + $0x60] sm:$0xff]
  %v3030 = vld [vmem:[%s971 + $0x68] sm:$0xff]
  %v3031 = vld [vmem:[%s971 + $0x70] sm:$0xff]
  %v3032 = vld [vmem:[%s971 + $0x78] sm:$0xff]
  %v3033 = vld [vmem:[%s971 + $0x80] sm:$0xff]
  %v3034 = vld [vmem:[%s971 + $0x88] sm:$0xff]
  %v3035 = vld [vmem:[%s9] sm:$0xff]
  %v3036 = vld [vmem:[%s9 + $0x8] sm:$0xff]
  %v3037 = vld [vmem:[%s9 + $0x10] sm:$0xff]
  %v3038 = vld [vmem:[%s9 + $0x18] sm:$0xff]
  %3040 = vset.pattern.permute.xlu0 0
  %3041 = vperm.xlu0 %3040, %v3035
  %v3042 = vpop.permute.xlu0 %3041
  %3045 = vset.pattern.permute.xlu0 0
  %3046 = vperm.xlu0 %3045, %v3036
  %v3047 = vpop.permute.xlu0 %3046
  %3050 = vset.pattern.permute.xlu0 0
  %3051 = vperm.xlu0 %3050, %v3037
  %v3052 = vpop.permute.xlu0 %3051
  %3055 = vset.pattern.permute.xlu0 0
  %3056 = vperm.xlu0 %3055, %v3038
  %v3057 = vpop.permute.xlu0 %3056
  %v3063 = vunpack.c.l.b16 %v3013
  %v3064 = vunpack.c.h.b16 %v3013
  %v3065 = vunpack.c.l.b16 %v3014
  %v3066 = vunpack.c.h.b16 %v3014
  %v3067 = vunpack.c.l.b16 %v3015
  %v3068 = vunpack.c.h.b16 %v3015
  %v3069 = vunpack.c.l.b16 %v3016
  %v3070 = vunpack.c.h.b16 %v3016
  %v3071 = vpack.c.b16 %v3065, %v3063
  %v3072 = vpack.c.b16 %v3066, %v3064
  %v3073 = vpack.c.b16 %v3069, %v3067
  %v3074 = vpack.c.b16 %v3070, %v3068
  %v3078 = vsel %vm856, %v3072, 0
  %v3081 = vsel %vm856, %v3074, 0
  %3083 = vmatprep.subr.bf16.mxu0 %v3018
  %3084 = vmatpush1.bf16.msra.mxu0 %v3017
  %3085 = vmatprep.subr.bf16.mxu0 %v3020
  %3086 = vmatpush1.bf16.msra.mxu0 %v3019
  %3087 = vmatprep.subr.bf16.mxu0 %v3022
  %3088 = vmatpush1.bf16.msra.mxu0 %v3021
  %3089 = vmatprep.subr.bf16.mxu0 %v3024
  %3090 = vmatpush1.bf16.msra.mxu0 %v3023
  %3091 = vmatprep.subr.bf16.mxu0 %v3026
  %3092 = vmatpush1.bf16.msra.mxu0 %v3025
  %3093 = vmatprep.subr.bf16.mxu0 %v3028
  %3094 = vmatpush1.bf16.msra.mxu0 %v3027
  %3095 = vmatprep.subr.bf16.mxu0 %v3030
  %3096 = vmatpush1.bf16.msra.mxu0 %v3029
  %3097 = vmatprep.subr.bf16.mxu0 %v3032
  %3098 = vmatpush1.bf16.msra.mxu0 %v3031
  %3099 = vmatprep.subr.bf16.mxu0 %v3034
  %3100 = vmatpush1.bf16.msra.mxu0 %v3033
  %3101 = vmatprep.subr.bf16.mxu0 0
  %3102 = vmatpush1.bf16.msra.mxu0 0
  %3103 = vmatprep.subr.bf16.mxu0 0
  %3104 = vmatpush1.bf16.msra.mxu0 0
  %3105 = vmatprep.subr.bf16.mxu0 0
  %3106 = vmatpush1.bf16.msra.mxu0 0
  %3107 = vmatprep.subr.bf16.mxu0 0
  %3108 = vmatpush1.bf16.msra.mxu0 0
  %3109 = vmatprep.subr.bf16.mxu0 0
  %3110 = vmatpush1.bf16.msra.mxu0 0
  %3111 = vmatprep.subr.bf16.mxu0 0
  %3112 = vmatpush1.bf16.msra.mxu0 0
  %3113 = vmatprep.subr.bf16.mxu0 0
  %3114 = vmatpush1.bf16.msra.mxu0 0
  %3115 = vmatprep.mubr.bf16.mxu0 %v3078
  %3116 = vmatmul.mubr.bf16.gmra.mrb[0].mxu0 %v3071
  %v3117 = vpop.f32.mrb[0].mxu0
  %v3118 = vadd.f32 %v3042, %v3117
  %v3119 = vpop.f32.mrb[0].mxu0
  %v3120 = vadd.f32 %v3042, %v3119
  %v3121 = vpop.f32.mrb[0].mxu0
  %v3122 = vadd.f32 %v3047, %v3121
  %v3123 = vpop.f32.mrb[0].mxu0
  %v3124 = vadd.f32 %v3047, %v3123
  %3125 = vmatprep.mubr.bf16.mxu0 %v3081
  %3126 = vmatmul.mubr.bf16.gmra.mrb[0].mxu0 %v3073
  %v3127 = vpop.f32.mrb[0].mxu0
  %v3128 = vadd.f32 %v3052, %v3127
  %v3129 = vpop.f32.mrb[0].mxu0
  %v3130 = vadd.f32 %v3052, %v3129
  %v3131 = vpop.f32.mrb[0].mxu0
  %v3132 = vadd.f32 %v3057, %v3131
  %v3133 = vpop.f32.mrb[0].mxu0
  %v3134 = vadd.f32 %v3057, %v3133
  %3135 = vdwg.mxu0
  %v3136 = vmax.f32 %v3118, 0.0
  %v3137 = vmax.f32 %v3120, 0.0
  %v3138 = vmax.f32 %v3122, 0.0
  %v3139 = vmax.f32 %v3124, 0.0
  %v3140 = vmax.f32 %v3128, 0.0
  %v3141 = vmax.f32 %v3130, 0.0
  %v3142 = vmax.f32 %v3132, 0.0
  %v3143 = vmax.f32 %v3134, 0.0
  %v3144 = vadd.f32 %v3136, %v3137
  %3145 = vadd.xlane.f32.xlu0 %v3144
  %v3146 = vpop.xlane.xlu0 %3145
  %v3147 = vadd.f32 %v3138, %v3139
  %3148 = vadd.xlane.f32.xlu0 %v3147
  %v3149 = vpop.xlane.xlu0 %3148
  %v3150 = vadd.f32 %v3140, %v3141
  %3151 = vadd.xlane.f32.xlu0 %v3150
  %v3152 = vpop.xlane.xlu0 %3151
  %v3153 = vadd.f32 %v3142, %v3143
  %3154 = vadd.xlane.f32.xlu0 %v3153
  %v3155 = vpop.xlane.xlu0 %3154
  %v3156 = vmul.f32 %v3146, 0.00390625
  %v3157 = vmul.f32 %v3149, 0.00390625
  %v3158 = vmul.f32 %v3152, 0.00390625
  %v3159 = vmul.f32 %v3155, 0.00390625
  %v3160 = vsel %vm1680, %v2418, %v3156
  %v3161 = vsel %vm1680, %v2419, %v3157
  %v3162 = vsel %vm1680, %v2420, %v3158
  %v3163 = vsel %vm1680, %v2421, %v3159
  %v3164 = vld [vmem:[%s10] sm:$0x1f]
  %v3165 = vld [vmem:[%s11] sm:$0x1f]
  %3167 = vset.pattern.permute.xlu0 0
  %3168 = vperm.xlu0 %3167, %v3165
  %v3169 = vpop.permute.xlu0 %3168
  %vm3171 = vcmask 523264
  %v3173 = vsel %vm3171, %v3164, 0
  %3175 = vmatprep.subr.mxu0 0.0
  %3176 = vmatpush1.msra.mxu0 %v1681
  %3177 = vmatprep.subr.mxu0 0.0
  %3178 = vmatpush1.msra.mxu0 %v1682
  %3179 = vmatprep.subr.mxu0 0.0
  %3180 = vmatpush1.msra.mxu0 %v1683
  %3181 = vmatprep.subr.mxu0 0.0
  %3182 = vmatpush1.msra.mxu0 %v1684
  %3183 = vmatprep.subr.mxu0 0.0
  %3184 = vmatpush1.msra.mxu0 %v3160
  %3185 = vmatprep.subr.mxu0 0.0
  %3186 = vmatpush1.msra.mxu0 %v3161
  %3187 = vmatprep.subr.mxu0 0.0
  %3188 = vmatpush1.msra.mxu0 %v3162
  %3189 = vmatprep.subr.mxu0 0.0
  %3190 = vmatpush1.msra.mxu0 %v3163
  %3191 = vmatprep.subr.mxu0 0.0
  %3192 = vmatpush1.msra.mxu0 0.0
  %3193 = vmatprep.subr.mxu0 0.0
  %3194 = vmatpush1.msra.mxu0 0.0
  %3195 = vmatprep.subr.mxu0 0.0
  %3196 = vmatpush1.msra.mxu0 0.0
  %3197 = vmatprep.subr.mxu0 0.0
  %3198 = vmatpush1.msra.mxu0 0.0
  %3199 = vmatprep.subr.mxu0 0.0
  %3200 = vmatpush1.msra.mxu0 0.0
  %3201 = vmatprep.subr.mxu0 0.0
  %3202 = vmatpush1.msra.mxu0 0.0
  %3203 = vmatprep.subr.mxu0 0.0
  %3204 = vmatpush1.msra.mxu0 0.0
  %3205 = vmatprep.subr.mxu0 0.0
  %3206 = vmatpush1.msra.mxu0 0.0
  %3207 = vmatprep.subr.mxu0 0.0
  %3208 = vmatpush1.msra.mxu0 0.0
  %3209 = vmatprep.subr.mxu0 0.0
  %3210 = vmatpush1.msra.mxu0 0.0
  %3211 = vmatprep.subr.mxu0 0.0
  %3212 = vmatpush1.msra.mxu0 0.0
  %3213 = vmatprep.subr.mxu0 0.0
  %3214 = vmatpush1.msra.mxu0 0.0
  %3215 = vmatprep.subr.mxu0 0.0
  %3216 = vmatpush1.msra.mxu0 0.0
  %3217 = vmatprep.subr.mxu0 0.0
  %3218 = vmatpush1.msra.mxu0 0.0
  %3219 = vmatprep.subr.mxu0 0.0
  %3220 = vmatpush1.msra.mxu0 0.0
  %3221 = vmatprep.subr.mxu0 0.0
  %3222 = vmatpush1.msra.mxu0 0.0
  %3223 = vmatprep.subr.mxu0 0.0
  %3224 = vmatpush1.msra.mxu0 0.0
  %3225 = vmatprep.subr.mxu0 0.0
  %3226 = vmatpush1.msra.mxu0 0.0
  %3227 = vmatprep.subr.mxu0 0.0
  %3228 = vmatpush1.msra.mxu0 0.0
  %3229 = vmatprep.subr.mxu0 0.0
  %3230 = vmatpush1.msra.mxu0 0.0
  %3231 = vmatprep.subr.mxu0 0.0
  %3232 = vmatpush1.msra.mxu0 0.0
  %3233 = vmatprep.subr.mxu0 0.0
  %3234 = vmatpush1.msra.mxu0 0.0
  %3235 = vmatprep.subr.mxu0 0.0
  %3236 = vmatpush1.msra.mxu0 0.0
  %3237 = vmatprep.subr.mxu0 0.0
  %3238 = vmatpush1.msra.mxu0 0.0
  %3239 = vmatprep.mubr.f32.mxu0 0.0
  %3240 = vmatmul.mubr.f32.gmra.mrb[0].mxu0 %v3173
  %v3241 = vpop.f32.mrb[0].mxu0
  %v3242 = vadd.f32 %v3169, %v3241
  %v3243 = vpop.f32.mrb[0].mxu0
  %3244 = vdwg.mxu0
  %vm3245 = vcmask 12288
  %3246 = vst.msk [vmem:[%s12] sm:$0x1f] %vm3245, %v3242
  // Predicated region
  $region50: #{dsdbnet_forward.1} parent=0 // pred_check
    _
  $region51: #{dsdbnet_forward.1} parent=0 // pred_check_branch
    %3248 = sbr.rel (0) target = $region53
  $region52: #{dsdbnet_forward.1} parent=0 // pred_region
    _
  $region53: #{dsdbnet_forward.1} parent=0 // pred_fallthru
    _
  // Predicated region
  $region54: #{dsdbnet_forward.1} parent=0 // pred_check
    _
  $region55: #{dsdbnet_forward.1} parent=0 // pred_check_branch
    %3250 = sbr.rel (0) target = $region57
  $region56: #{dsdbnet_forward.1} parent=0 // pred_region
    _
  $region57: #{dsdbnet_forward.1} parent=0 // pred_fallthru
    _

</llo_original>
